<compile_context>
chip_gen: v5e
topology: v5e:2x2
jax: 0.10.0
libtpu: 0.0.40
codegen_flags: <defaults>
</compile_context>

<pallas_src>
import jax
import jax.numpy as jnp
from jax.experimental import pallas as pl
from jax.experimental.pallas import tpu as pltpu

L = 50                     # optical aperture size (only used by the reference check)
PATCH = 6
STRIDE = 5
OUT_ROWS = PATCH * PATCH   # 36
FLAT_IN = OUT_ROWS * OUT_ROWS   # 1296: flattened 36x36 patch matrix per element
EMBED_DIM = 32             # args.embed_dim (must be <= 50)


def image2matrix(x, patch=PATCH, stride=STRIDE):
    """Glue: ZeroPad2d((1,2,1,2)) on channel 0 + overlapping 6x6 patch gather.

    Implemented as one static-index XLA gather (no 36-slice loop / concat)."""
    # TODO(synk): profile this gather; if it dominates wall time, fuse it into
    # the Pallas kernel (read raw image tiles in-kernel, emit x_cnn as a second
    # output) to cut ~1.4x of HBM traffic for this memory-bound pipeline.
    xp = jnp.pad(x[:, 0], ((0, 0), (1, 2), (1, 2)))                 # (B, H+3, W+3)
    r = jnp.arange(patch * patch)                                    # patch-grid index 6i+j
    c = jnp.arange(patch * patch)                                    # in-patch index 6u+v
    row_idx = stride * (r[:, None] // patch) + (c[None, :] // patch)  # 5i+u  (36,36)
    col_idx = stride * (r[:, None] % patch) + (c[None, :] % patch)    # 5j+v  (36,36)
    return xp[:, row_idx, col_idx]                                   # (B, 36, 36)


def ocnn_kernel(a_ref, w_ref, wmax_ref, bias_ref, out_ref):
    # a_ref   : (TB, 1296)   lane-dense flattened patch matrices (row-major 36x36)
    # w_ref   : (1296, 1152) block-diagonal |W|^T (36 diagonal copies of (36, D))
    # wmax_ref: (1,) f32 in SMEM — max|W|, hoisted out of the kernel
    # bias_ref: (1, 1152)    flattened bias (row-major 36xD)
    # out_ref : (TB, 1152)   lane-dense flattened output (row-major 36xD)
    a = a_ref[...]
    w_max = wmax_ref[0]

    # Per-batch max of the reference's zero-padded 50x50 input: the zero pad
    # means the max is implicitly clamped at 0 -> reproduce with max(., 0).
    # Single fused lane reduction over the flattened 36x36 values.
    a_max = jnp.maximum(jnp.max(a, axis=1, keepdims=True), 0.0)          # (TB, 1)

    # Ideal MVM realised by the 4f optical system, raw = |A @ |W|^T|, as ONE
    # MXU matmul per grid step (M = TB, K = 1296, N = 1152).  The block-
    # diagonal weight keeps both operands and the result 2-D and lane-dense:
    # no in-kernel reshape/relayout, no per-element tiny matmuls, W pushed to
    # the MXU once per step.  The (A/(a_max+eps)) and (|W|/(w_max+eps))
    # normalizations of the reference cancel exactly in raw / r_max.
    raw = jnp.abs(jnp.dot(a, w_ref[...],
                          preferred_element_type=jnp.float32))           # (TB, 1152)

    # Per-batch result max; torch divides with NO epsilon here (an all-zero
    # product therefore yields NaN, faithfully to the reference).
    r_max = jnp.max(raw, axis=1, keepdims=True)                          # (TB, 1)

    # Fused epilogue: one per-batch scalar scale, one broadcast mul + bias add.
    scale = (a_max * w_max) / r_max                                      # (TB, 1)
    out_ref[...] = raw * scale + bias_ref[...]                           # bias broadcasts


def ocnn_forward(x, weight, bias, *, batch_tile=512):
    """x: (B, C, H, W) float32, weight: (D, 36), bias: (1, 36, D)."""
    B = x.shape[0]
    D = weight.shape[0]
    flat_out = OUT_ROWS * D                                  # 1152 for D = 32

    x_cnn = image2matrix(x)                                  # (B, 36, 36)
    a_flat = x_cnn.reshape(B, FLAT_IN)                       # lane-dense rows

    w_abs = jnp.abs(weight).astype(jnp.float32)              # (D, 36), computed once
    # Block-diagonal embedding of |W|^T: (1296, 1152) with 36 copies of the
    # (36, D) block on the diagonal, so the flattened matmul
    #   out[b, i*D + k] = sum_j A[b, i*36 + j] * |W|[k, j]
    # is a single 2-D dot (built once in the wrapper, resident in VMEM).
    w_block = jnp.kron(jnp.eye(OUT_ROWS, dtype=jnp.float32), w_abs.T)   # (1296, 1152)
    w_max = jnp.max(w_abs).reshape(1)                        # SMEM scalar (hoisted)
    bias_flat = bias.astype(jnp.float32).reshape(1, flat_out)

    # Batch tile: multiple of 8 (sublane tiling of the lane-dense 2-D blocks),
    # capped so the grid has >= 2 "parallel" steps whenever B is big enough
    # (v7x has 2 TensorCores), and small enough that the double-buffered A/out
    # blocks plus the resident 6 MB weight fit VMEM on every chip generation.
    tb = min(batch_tile, max(B, 1))
    if B > 8:
        tb = min(tb, -(-B // 2))        # ensure at least two grid steps
    tb = -(-tb // 8) * 8                # round up to a sublane multiple
    nb = -(-B // tb)
    b_pad = nb * tb

    # Edge-pad (repeat the last real element) rather than zero-pad so padded
    # tail rows never produce r_max == 0 -> 0/0 NaN; they are sliced off below.
    if b_pad != B:
        a_flat = jnp.pad(a_flat, ((0, b_pad - B), (0, 0)), mode="edge")

    out_flat = pl.pallas_call(
        ocnn_kernel,
        out_shape=jax.ShapeDtypeStruct((b_pad, flat_out), jnp.float32),
        grid_spec=pltpu.PrefetchScalarGridSpec(
            num_scalar_prefetch=0,
            grid=(nb,),
            in_specs=[
                pl.BlockSpec((tb, FLAT_IN), lambda i: (i, 0)),           # A batch tile
                pl.BlockSpec((FLAT_IN, flat_out), lambda i: (0, 0)),     # resident W_block
                pl.BlockSpec(memory_space=pltpu.MemorySpace.SMEM),       # max|W| scalar
                pl.BlockSpec((1, flat_out), lambda i: (0, 0)),           # resident bias
            ],
            out_specs=pl.BlockSpec((tb, flat_out), lambda i: (i, 0)),    # lane-dense out
        ),
        compiler_params=pltpu.CompilerParams(
            dimension_semantics=("parallel",),
            vmem_limit_bytes=48 * 1024 * 1024,   # < v7x 64 MiB physical VMEM
        ),
    )(a_flat, w_block, w_max, bias_flat)

    out = out_flat[:B].reshape(B, OUT_ROWS, D)
    return out, x_cnn


def _ref_forward(x, weight, bias):
    """Pure-JAX reference of the idealized torch math (with the 50-pad + eps)."""
    D = weight.shape[0]
    x_cnn = image2matrix(x)
    a = jnp.pad(x_cnn, ((0, 0), (0, L - OUT_ROWS), (0, L - OUT_ROWS)))     # (B,50,50)
    w = jnp.abs(jnp.pad(weight, ((0, 0), (0, L - OUT_ROWS))))              # (D,50)
    w = jnp.pad(jnp.transpose(w), ((0, 0), (0, L - D)))                    # (50,50)
    a_max = jnp.max(a, axis=(1, 2), keepdims=True)
    w_max = jnp.max(w)
    a_n = a / (a_max + 1e-8)
    w_n = w / (w_max + 1e-8)
    raw = jnp.abs(jnp.einsum('bij,jk->bik', a_n, w_n,
                             precision=jax.lax.Precision.HIGHEST))
    r_max = jnp.max(raw, axis=(1, 2), keepdims=True)
    out = (raw / r_max) * (a_max * w_max)
    return out[:, :OUT_ROWS, :D] + bias


if __name__ == "__main__":
    key = jax.random.PRNGKey(0)
    k_img, k_w = jax.random.split(key)

    B, C, H, W = 2, 1, 28, 28            # image2matrix(patch=6, stride=5) needs H=W>=28
    x = jax.random.normal(k_img, (B, C, H, W), dtype=jnp.float32)

    # deterministic synthetic params (trunc_normal std=0.1, zero bias)
    weight = 0.1 * jax.random.truncated_normal(k_w, -2.0, 2.0, (EMBED_DIM, OUT_ROWS),
                                               dtype=jnp.float32)
    bias = jnp.zeros((1, OUT_ROWS, EMBED_DIM), dtype=jnp.float32)

    out, x_cnn = ocnn_forward(x, weight, bias)
    jax.block_until_ready((out, x_cnn))
    assert out.shape == (B, OUT_ROWS, EMBED_DIM)
    assert x_cnn.shape == (B, OUT_ROWS, OUT_ROWS)

    # Loose-tolerance sanity check against the pure-JAX reference math.
    ref = _ref_forward(x, weight, bias)
    jax.block_until_ready(ref)
    assert jnp.allclose(out, ref, rtol=1e-2, atol=1e-2), "kernel vs reference mismatch"

    print("KERNEL_OK")
</pallas_src>

<mosaic_0001>
module attributes {stable_mosaic.version = 11 : i64} {
  func.func @ocnn_kernel(%arg0: i32, %arg1: memref<8x1296xf32, #tpu.memory_space<vmem>>, %arg2: memref<1296x1152xf32, #tpu.memory_space<vmem>>, %arg3: memref<1xf32, #tpu.memory_space<smem>>, %arg4: memref<1x1152xf32, #tpu.memory_space<vmem>>, %arg5: memref<8x1152xf32, #tpu.memory_space<vmem>>) attributes {dimension_semantics = [#tpu.dimension_semantics<parallel>], iteration_bounds = array<i64: 1>, scalar_prefetch = 0 : i64, scratch_operands = 0 : i64, tpu.core_type = #tpu.core_type<tc>, window_params = [{transform_indices = @transform_0, window_bounds = array<i64: 8, 1296>}, {pipeline_mode = #tpu.pipeline_mode<synchronous>, transform_indices = @transform_1, window_bounds = array<i64: 1296, 1152>}, {transform_indices = @transform_2, window_bounds = array<i64: 1>}, {pipeline_mode = #tpu.pipeline_mode<synchronous>, transform_indices = @transform_3, window_bounds = array<i64: 1, 1152>}, {transform_indices = @transform_4, window_bounds = array<i64: 8, 1152>}]} {
    %c0 = arith.constant 0 : index
    %c0_0 = arith.constant 0 : index
    %0 = vector.load %arg1[%c0, %c0_0] : memref<8x1296xf32, #tpu.memory_space<vmem>>, vector<8x1296xf32>
    %c0_1 = arith.constant 0 : index
    %1 = memref.load %arg3[%c0_1] : memref<1xf32, #tpu.memory_space<smem>>
    %cst = arith.constant dense<0xFF800000> : vector<8xf32>
    %2 = vector.multi_reduction <maximumf>, %0, %cst [1] : vector<8x1296xf32> to vector<8xf32>
    %3 = vector.shape_cast %2 : vector<8xf32> to vector<8x1xf32>
    %cst_2 = arith.constant 0.000000e+00 : f32
    %4 = vector.broadcast %cst_2 : f32 to vector<8x1xf32>
    %5 = arith.maximumf %3, %4 : vector<8x1xf32>
    %c0_3 = arith.constant 0 : index
    %c0_4 = arith.constant 0 : index
    %6 = vector.load %arg2[%c0_3, %c0_4] : memref<1296x1152xf32, #tpu.memory_space<vmem>>, vector<1296x1152xf32>
    %cst_5 = arith.constant dense<0.000000e+00> : vector<8x1152xf32>
    %7 = tpu.matmul %0, %6, %cst_5 {dimension_numbers = #tpu.dot_dimension_numbers<[1], [0], [0], [1], [0, 0, 1, 1], [], []>} : vector<8x1296xf32>, vector<1296x1152xf32>, vector<8x1152xf32> -> vector<8x1152xf32>
    %8 = math.absf %7 : vector<8x1152xf32>
    %cst_6 = arith.constant dense<0xFF800000> : vector<8xf32>
    %9 = vector.multi_reduction <maximumf>, %8, %cst_6 [1] : vector<8x1152xf32> to vector<8xf32>
    %10 = vector.shape_cast %9 : vector<8xf32> to vector<8x1xf32>
    %11 = vector.broadcast %1 : f32 to vector<8x1xf32>
    %12 = arith.mulf %5, %11 : vector<8x1xf32>
    %13 = arith.divf %12, %10 : vector<8x1xf32>
    %14 = vector.broadcast %13 : vector<8x1xf32> to vector<8x1152xf32>
    %15 = arith.mulf %8, %14 : vector<8x1152xf32>
    %c0_7 = arith.constant 0 : index
    %c0_8 = arith.constant 0 : index
    %16 = vector.load %arg4[%c0_7, %c0_8] : memref<1x1152xf32, #tpu.memory_space<vmem>>, vector<1x1152xf32>
    %17 = vector.broadcast %16 : vector<1x1152xf32> to vector<8x1152xf32>
    %18 = arith.addf %15, %17 : vector<8x1152xf32>
    %c0_9 = arith.constant 0 : index
    %c0_10 = arith.constant 0 : index
    %19 = vector.load %arg5[%c0_9, %c0_10] : memref<8x1152xf32, #tpu.memory_space<vmem>>, vector<8x1152xf32>
    tpu.vector_store %arg5[%c0_9, %c0_10], %18 {strides = array<i32>} : memref<8x1152xf32, #tpu.memory_space<vmem>>, vector<8x1152xf32>,
    return
  }
  func.func @transform_0(%arg0: i32) -> (i32, i32) {
    %c0_i32 = arith.constant 0 : i32
    %c0_i32_0 = arith.constant 0 : i32
    return %arg0, %c0_i32 : i32, i32
  }
  func.func @transform_1(%arg0: i32) -> (i32, i32) {
    %c0_i32 = arith.constant 0 : i32
    %c0_i32_0 = arith.constant 0 : i32
    %c0_i32_1 = arith.constant 0 : i32
    return %c0_i32, %c0_i32_0 : i32, i32
  }
  func.func @transform_2(%arg0: i32) -> i32 {
    %c0_i32 = arith.constant 0 : i32
    %c0_i32_0 = arith.constant 0 : i32
    return %c0_i32 : i32
  }
  func.func @transform_3(%arg0: i32) -> (i32, i32) {
    %c0_i32 = arith.constant 0 : i32
    %c0_i32_0 = arith.constant 0 : i32
    %c0_i32_1 = arith.constant 0 : i32
    return %c0_i32, %c0_i32_0 : i32, i32
  }
  func.func @transform_4(%arg0: i32) -> (i32, i32) {
    %c0_i32 = arith.constant 0 : i32
    %c0_i32_0 = arith.constant 0 : i32
    return %arg0, %c0_i32 : i32, i32
  }
}

</mosaic_0001>

<llo_original>
// kernel: tpu_custom_call.1
$region0: #{tpu_custom_call.1}
  #allocation0 [shape = 'u32[]', space=smem, size = 0x4, offset = 0x4, fixed_abs, tag = 'smem constant byte address 0x4 - core index']
  #allocation1 [shape = 'u32[72,128]{1,0:T(1,128)}', space=vmem, size = 0x9000, scoped, tag = 'internal scratch']
  #allocation2 [shape = 'f32[1]{0:T(128)S(6)}', space=smem, size = 0x200, scoped, tag = 'scoped memory for tpu_custom_call.1']
  %s0 = inlined_call_operand.hbm [shape: f32[8,1296], index: 0, kind: input, shape index: {}]
  %s1 = inlined_call_operand.hbm [shape: f32[1296,1152], index: 1, kind: input, shape index: {}]
  %s2 = inlined_call_operand.<no memory space> [shape: f32[1], index: 2, kind: input, shape index: {}]
  %s3 = inlined_call_operand.hbm [shape: f32[1,1152], index: 3, kind: input, shape index: {}]
  %s4 = inlined_call_operand.hbm [shape: f32[8,1152], index: 4, kind: output, shape index: {}]
  %s5 = sld [smem:[#allocation0]]
  $region38: #{tpu_custom_call.1} parent=0
    _
  %s7 = ssub.s32 1, %s5
  %s8 = scalar_select 0, %s7, %s5
  %9 = sst [smem:[#allocation2]] %s2
  $region1: #{tpu_custom_call.1} parent=0
    #allocation3 [shape = 'u8[45056]{0}', space=vmem, size = 0xb000, scoped, tag = 'input window, operand 0, single buffered']
    #allocation4 [shape = 's32[1]{0}', space=sflag, size = 0x4, scoped, tag = 'scoped memory for tpu_custom_call.1']
    #allocation5 [shape = 's32[1]{0}', space=sflag, size = 0x4, scoped, tag = 'scoped memory for tpu_custom_call.1']
    #allocation6 [shape = 'u8[5971968]{0}', space=vmem, size = 0x5b2000, scoped, tag = 'input window, operand 1, single buffered']
    #allocation7 [shape = 's32[1]{0}', space=sflag, size = 0x4, scoped, tag = 'scoped memory for tpu_custom_call.1']
    #allocation8 [shape = 'u8[4608]{0}', space=vmem, size = 0x1400, scoped, tag = 'input window, operand 3, single buffered']
    #allocation9 [shape = 'u8[36864]{0}', space=vmem, size = 0x9000, scoped, tag = 'output window, operand 0, single buffered']
    %10 = vsyncpa [#allocation4], 0
    %11 = vsyncpa [#allocation7], 0
    %12 = vsyncpa [#allocation5], 0
    // Predicated region
    $region2: #{tpu_custom_call.1} parent=1 // pred_check
      _
    $region3: #{tpu_custom_call.1} parent=1 // pred_check_branch
      %14 = sbr.rel (0) target = $region5
    $region4: #{tpu_custom_call.1} parent=1 // pred_region
      %16 = vsyncadd [#allocation4], 0
      %s18 = sshll.u32 %s0, 4
      %s19 = int_to_ptr.hbm [resolvable:$true] %s18
      %s20 = sshll.u32 [#allocation3], 4
      %s21 = int_to_ptr.vmem [resolvable:$true] %s20
      %23 = dma.hbm_to_vmem [thread:$0]  %s19, 1408, %s21, [#allocation4]
    $region5: #{tpu_custom_call.1} parent=1 // pred_fallthru
      _
    // Predicated region
    $region6: #{tpu_custom_call.1} parent=1 // pred_check
      _
    $region7: #{tpu_custom_call.1} parent=1 // pred_check_branch
      %25 = sbr.rel (0) target = $region9
    $region8: #{tpu_custom_call.1} parent=1 // pred_region
      %27 = vsyncadd [#allocation7], 0
      %s28 = sshll.u32 %s1, 4
      %s29 = int_to_ptr.hbm [resolvable:$true] %s28
      %s30 = sshll.u32 [#allocation6], 4
      %s31 = int_to_ptr.vmem [resolvable:$true] %s30
      %36 = dma.hbm_to_vmem [thread:$0]  %s29, 186624, %s31, [#allocation7], 1152, 1152, 72
    $region9: #{tpu_custom_call.1} parent=1 // pred_fallthru
      _
    // Predicated region
    $region10: #{tpu_custom_call.1} parent=1 // pred_check
      _
    $region11: #{tpu_custom_call.1} parent=1 // pred_check_branch
      %38 = sbr.rel (0) target = $region13
    $region12: #{tpu_custom_call.1} parent=1 // pred_region
      _
    $region13: #{tpu_custom_call.1} parent=1 // pred_fallthru
      _
    // Predicated region
    $region14: #{tpu_custom_call.1} parent=1 // pred_check
      _
    $region15: #{tpu_custom_call.1} parent=1 // pred_check_branch
      %40 = sbr.rel (0) target = $region17
    $region16: #{tpu_custom_call.1} parent=1 // pred_region
      %42 = vsyncadd [#allocation7], 0
      %s44 = sshll.u32 %s3, 4
      %s45 = int_to_ptr.hbm [resolvable:$true] %s44
      %s46 = sshll.u32 [#allocation8], 4
      %s47 = int_to_ptr.vmem [resolvable:$true] %s46
      %49 = dma.hbm_to_vmem [thread:$0]  %s45, 144, %s47, [#allocation7]
    $region17: #{tpu_custom_call.1} parent=1 // pred_fallthru
      _
    // Predicated region
    $region18: #{tpu_custom_call.1} parent=1 // pred_check
      _
    $region19: #{tpu_custom_call.1} parent=1 // pred_check_branch
      %51 = sbr.rel (0) target = $region21
    $region20: #{tpu_custom_call.1} parent=1 // pred_region
      %53 = dma.done [#allocation4], 1408
    $region21: #{tpu_custom_call.1} parent=1 // pred_fallthru
      _
    // Predicated region
    $region22: #{tpu_custom_call.1} parent=1 // pred_check
      _
    $region23: #{tpu_custom_call.1} parent=1 // pred_check_branch
      %55 = sbr.rel (0) target = $region25
    $region24: #{tpu_custom_call.1} parent=1 // pred_region
      %57 = dma.done [#allocation7], 186624
    $region25: #{tpu_custom_call.1} parent=1 // pred_fallthru
      _
    // Predicated region
    $region26: #{tpu_custom_call.1} parent=1 // pred_check
      _
    $region27: #{tpu_custom_call.1} parent=1 // pred_check_branch
      %59 = sbr.rel (0) target = $region29
    $region28: #{tpu_custom_call.1} parent=1 // pred_region
      %61 = dma.done [#allocation7], 144
    $region29: #{tpu_custom_call.1} parent=1 // pred_fallthru
      _
    %v62 = vld [vmem:[#allocation3] sm:$0xff]
    %v63 = vld [vmem:[#allocation3 + $0x8] sm:$0xff]
    %v64 = vld [vmem:[#allocation3 + $0x10] sm:$0xff]
    %v65 = vld [vmem:[#allocation3 + $0x18] sm:$0xff]
    %v66 = vld [vmem:[#allocation3 + $0x20] sm:$0xff]
    %v67 = vld [vmem:[#allocation3 + $0x28] sm:$0xff]
    %v68 = vld [vmem:[#allocation3 + $0x30] sm:$0xff]
    %v69 = vld [vmem:[#allocation3 + $0x38] sm:$0xff]
    %v70 = vld [vmem:[#allocation3 + $0x40] sm:$0xff]
    %v71 = vld [vmem:[#allocation3 + $0x48] sm:$0xff]
    %v72 = vld [vmem:[#allocation3 + $0x50] sm:$0xff]
    %s73 = sld [smem:[#allocation2]]
    %v74 = vmax.f32 %v62, %v66
    %v75 = vmax.f32 %v63, %v67
    %v76 = vmax.f32 %v64, %v68
    %v77 = vmax.f32 %v65, %v69
    %v78 = vmax.f32 %v74, %v70
    %v79 = vmax.f32 %v75, %v71
    %vm80 = vcmask 130048
    %v81 = vsel %vm80, %v72, -inf
    %v82 = vmax.f32 %v76, %v81
    %v83 = vmax.f32 %v78, %v79
    %v84 = vmax.f32 %v82, %v77
    %v85 = vmax.f32 %v83, %v84
    %86 = vmax.xlane.f32.xlu0 %v85
    %v87 = vpop.xlane.xlu0 %86
    %v88 = vmax.f32 %v87, 0.0
    %v89 = vld [vmem:[#allocation6] sm:$0xff]
    %v90 = vld [vmem:[#allocation6 + $0x8] sm:$0xff]
    %v91 = vld [vmem:[#allocation6 + $0x10] sm:$0xff]
    %v92 = vld [vmem:[#allocation6 + $0x18] sm:$0xff]
    %v93 = vld [vmem:[#allocation6 + $0x20] sm:$0xff]
    %v94 = vld [vmem:[#allocation6 + $0x28] sm:$0xff]
    %v95 = vld [vmem:[#allocation6 + $0x30] sm:$0xff]
    %v96 = vld [vmem:[#allocation6 + $0x38] sm:$0xff]
    %v97 = vld [vmem:[#allocation6 + $0x40] sm:$0xff]
    %v98 = vld [vmem:[#allocation6 + $0x48] sm:$0xff]
    %v99 = vld [vmem:[#allocation6 + $0x50] sm:$0xff]
    %v100 = vld [vmem:[#allocation6 + $0x58] sm:$0xff]
    %v101 = vld [vmem:[#allocation6 + $0x60] sm:$0xff]
    %v102 = vld [vmem:[#allocation6 + $0x68] sm:$0xff]
    %v103 = vld [vmem:[#allocation6 + $0x70] sm:$0xff]
    %v104 = vld [vmem:[#allocation6 + $0x78] sm:$0xff]
    %v105 = vld [vmem:[#allocation6 + $0x80] sm:$0xff]
    %v106 = vld [vmem:[#allocation6 + $0x88] sm:$0xff]
    %v107 = vld [vmem:[#allocation6 + $0x90] sm:$0xff]
    %v108 = vld [vmem:[#allocation6 + $0x98] sm:$0xff]
    %v109 = vld [vmem:[#allocation6 + $0xa0] sm:$0xff]
    %v110 = vld [vmem:[#allocation6 + $0xa8] sm:$0xff]
    %v111 = vld [vmem:[#allocation6 + $0xb0] sm:$0xff]
    %v112 = vld [vmem:[#allocation6 + $0xb8] sm:$0xff]
    %v113 = vld [vmem:[#allocation6 + $0xc0] sm:$0xff]
    %v114 = vld [vmem:[#allocation6 + $0xc8] sm:$0xff]
    %v115 = vld [vmem:[#allocation6 + $0xd0] sm:$0xff]
    %v116 = vld [vmem:[#allocation6 + $0xd8] sm:$0xff]
    %v117 = vld [vmem:[#allocation6 + $0xe0] sm:$0xff]
    %v118 = vld [vmem:[#allocation6 + $0xe8] sm:$0xff]
    %v119 = vld [vmem:[#allocation6 + $0xf0] sm:$0xff]
    %v120 = vld [vmem:[#allocation6 + $0xf8] sm:$0xff]
    %v121 = vld [vmem:[#allocation6 + $0x100] sm:$0xff]
    %v122 = vld [vmem:[#allocation6 + $0x108] sm:$0xff]
    %v123 = vld [vmem:[#allocation6 + $0x110] sm:$0xff]
    %v124 = vld [vmem:[#allocation6 + $0x118] sm:$0xff]
    %v125 = vld [vmem:[#allocation6 + $0x120] sm:$0xff]
    %v126 = vld [vmem:[#allocation6 + $0x128] sm:$0xff]
    %v127 = vld [vmem:[#allocation6 + $0x130] sm:$0xff]
    %v128 = vld [vmem:[#allocation6 + $0x138] sm:$0xff]
    %v129 = vld [vmem:[#allocation6 + $0x140] sm:$0xff]
    %v130 = vld [vmem:[#allocation6 + $0x148] sm:$0xff]
    %v131 = vld [vmem:[#allocation6 + $0x150] sm:$0xff]
    %v132 = vld [vmem:[#allocation6 + $0x158] sm:$0xff]
    %v133 = vld [vmem:[#allocation6 + $0x160] sm:$0xff]
    %v134 = vld [vmem:[#allocation6 + $0x168] sm:$0xff]
    %v135 = vld [vmem:[#allocation6 + $0x170] sm:$0xff]
    %v136 = vld [vmem:[#allocation6 + $0x178] sm:$0xff]
    %v137 = vld [vmem:[#allocation6 + $0x180] sm:$0xff]
    %v138 = vld [vmem:[#allocation6 + $0x188] sm:$0xff]
    %v139 = vld [vmem:[#allocation6 + $0x190] sm:$0xff]
    %v140 = vld [vmem:[#allocation6 + $0x198] sm:$0xff]
    %v141 = vld [vmem:[#allocation6 + $0x1a0] sm:$0xff]
    %v142 = vld [vmem:[#allocation6 + $0x1a8] sm:$0xff]
    %v143 = vld [vmem:[#allocation6 + $0x1b0] sm:$0xff]
    %v144 = vld [vmem:[#allocation6 + $0x1b8] sm:$0xff]
    %v145 = vld [vmem:[#allocation6 + $0x1c0] sm:$0xff]
    %v146 = vld [vmem:[#allocation6 + $0x1c8] sm:$0xff]
    %v147 = vld [vmem:[#allocation6 + $0x1d0] sm:$0xff]
    %v148 = vld [vmem:[#allocation6 + $0x1d8] sm:$0xff]
    %v149 = vld [vmem:[#allocation6 + $0x1e0] sm:$0xff]
    %v150 = vld [vmem:[#allocation6 + $0x1e8] sm:$0xff]
    %v151 = vld [vmem:[#allocation6 + $0x1f0] sm:$0xff]
    %v152 = vld [vmem:[#allocation6 + $0x1f8] sm:$0xff]
    %v153 = vld [vmem:[#allocation6 + $0x200] sm:$0xff]
    %v154 = vld [vmem:[#allocation6 + $0x208] sm:$0xff]
    %v155 = vld [vmem:[#allocation6 + $0x210] sm:$0xff]
    %v156 = vld [vmem:[#allocation6 + $0x218] sm:$0xff]
    %v157 = vld [vmem:[#allocation6 + $0x220] sm:$0xff]
    %v158 = vld [vmem:[#allocation6 + $0x228] sm:$0xff]
    %v159 = vld [vmem:[#allocation6 + $0x230] sm:$0xff]
    %v160 = vld [vmem:[#allocation6 + $0x238] sm:$0xff]
    %v161 = vld [vmem:[#allocation6 + $0x240] sm:$0xff]
    %v162 = vld [vmem:[#allocation6 + $0x248] sm:$0xff]
    %v163 = vld [vmem:[#allocation6 + $0x250] sm:$0xff]
    %v164 = vld [vmem:[#allocation6 + $0x258] sm:$0xff]
    %v165 = vld [vmem:[#allocation6 + $0x260] sm:$0xff]
    %v166 = vld [vmem:[#allocation6 + $0x268] sm:$0xff]
    %v167 = vld [vmem:[#allocation6 + $0x270] sm:$0xff]
    %v168 = vld [vmem:[#allocation6 + $0x278] sm:$0xff]
    %v169 = vld [vmem:[#allocation6 + $0x280] sm:$0xff]
    %v170 = vld [vmem:[#allocation6 + $0x288] sm:$0xff]
    %v171 = vld [vmem:[#allocation6 + $0x290] sm:$0xff]
    %v172 = vld [vmem:[#allocation6 + $0x298] sm:$0xff]
    %v173 = vld [vmem:[#allocation6 + $0x2a0] sm:$0xff]
    %v174 = vld [vmem:[#allocation6 + $0x2a8] sm:$0xff]
    %v175 = vld [vmem:[#allocation6 + $0x2b0] sm:$0xff]
    %v176 = vld [vmem:[#allocation6 + $0x2b8] sm:$0xff]
    %v177 = vld [vmem:[#allocation6 + $0x2c0] sm:$0xff]
    %v178 = vld [vmem:[#allocation6 + $0x2c8] sm:$0xff]
    %v179 = vld [vmem:[#allocation6 + $0x2d0] sm:$0xff]
    %v180 = vld [vmem:[#allocation6 + $0x2d8] sm:$0xff]
    %v181 = vld [vmem:[#allocation6 + $0x2e0] sm:$0xff]
    %v182 = vld [vmem:[#allocation6 + $0x2e8] sm:$0xff]
    %v183 = vld [vmem:[#allocation6 + $0x2f0] sm:$0xff]
    %v184 = vld [vmem:[#allocation6 + $0x2f8] sm:$0xff]
    %v185 = vld [vmem:[#allocation6 + $0x300] sm:$0xff]
    %v186 = vld [vmem:[#allocation6 + $0x308] sm:$0xff]
    %v187 = vld [vmem:[#allocation6 + $0x310] sm:$0xff]
    %v188 = vld [vmem:[#allocation6 + $0x318] sm:$0xff]
    %v189 = vld [vmem:[#allocation6 + $0x320] sm:$0xff]
    %v190 = vld [vmem:[#allocation6 + $0x328] sm:$0xff]
    %v191 = vld [vmem:[#allocation6 + $0x330] sm:$0xff]
    %v192 = vld [vmem:[#allocation6 + $0x338] sm:$0xff]
    %v193 = vld [vmem:[#allocation6 + $0x340] sm:$0xff]
    %v194 = vld [vmem:[#allocation6 + $0x348] sm:$0xff]
    %v195 = vld [vmem:[#allocation6 + $0x350] sm:$0xff]
    %v196 = vld [vmem:[#allocation6 + $0x358] sm:$0xff]
    %v197 = vld [vmem:[#allocation6 + $0x360] sm:$0xff]
    %v198 = vld [vmem:[#allocation6 + $0x368] sm:$0xff]
    %v199 = vld [vmem:[#allocation6 + $0x370] sm:$0xff]
    %v200 = vld [vmem:[#allocation6 + $0x378] sm:$0xff]
    %v201 = vld [vmem:[#allocation6 + $0x380] sm:$0xff]
    %v202 = vld [vmem:[#allocation6 + $0x388] sm:$0xff]
    %v203 = vld [vmem:[#allocation6 + $0x390] sm:$0xff]
    %v204 = vld [vmem:[#allocation6 + $0x398] sm:$0xff]
    %v205 = vld [vmem:[#allocation6 + $0x3a0] sm:$0xff]
    %v206 = vld [vmem:[#allocation6 + $0x3a8] sm:$0xff]
    %v207 = vld [vmem:[#allocation6 + $0x3b0] sm:$0xff]
    %v208 = vld [vmem:[#allocation6 + $0x3b8] sm:$0xff]
    %v209 = vld [vmem:[#allocation6 + $0x3c0] sm:$0xff]
    %v210 = vld [vmem:[#allocation6 + $0x3c8] sm:$0xff]
    %v211 = vld [vmem:[#allocation6 + $0x3d0] sm:$0xff]
    %v212 = vld [vmem:[#allocation6 + $0x3d8] sm:$0xff]
    %v213 = vld [vmem:[#allocation6 + $0x3e0] sm:$0xff]
    %v214 = vld [vmem:[#allocation6 + $0x3e8] sm:$0xff]
    %v215 = vld [vmem:[#allocation6 + $0x3f0] sm:$0xff]
    %v216 = vld [vmem:[#allocation6 + $0x3f8] sm:$0xff]
    %v217 = vld [vmem:[#allocation6 + $0x400] sm:$0xff]
    %v218 = vld [vmem:[#allocation6 + $0x408] sm:$0xff]
    %v219 = vld [vmem:[#allocation6 + $0x410] sm:$0xff]
    %v220 = vld [vmem:[#allocation6 + $0x418] sm:$0xff]
    %v221 = vld [vmem:[#allocation6 + $0x420] sm:$0xff]
    %v222 = vld [vmem:[#allocation6 + $0x428] sm:$0xff]
    %v223 = vld [vmem:[#allocation6 + $0x430] sm:$0xff]
    %v224 = vld [vmem:[#allocation6 + $0x438] sm:$0xff]
    %v225 = vld [vmem:[#allocation6 + $0x440] sm:$0xff]
    %v226 = vld [vmem:[#allocation6 + $0x448] sm:$0xff]
    %v227 = vld [vmem:[#allocation6 + $0x450] sm:$0xff]
    %v228 = vld [vmem:[#allocation6 + $0x458] sm:$0xff]
    %v229 = vld [vmem:[#allocation6 + $0x460] sm:$0xff]
    %v230 = vld [vmem:[#allocation6 + $0x468] sm:$0xff]
    %v231 = vld [vmem:[#allocation6 + $0x470] sm:$0xff]
    %v232 = vld [vmem:[#allocation6 + $0x478] sm:$0xff]
    %v233 = vld [vmem:[#allocation6 + $0x480] sm:$0xff]
    %v234 = vld [vmem:[#allocation6 + $0x488] sm:$0xff]
    %v235 = vld [vmem:[#allocation6 + $0x490] sm:$0xff]
    %v236 = vld [vmem:[#allocation6 + $0x498] sm:$0xff]
    %v237 = vld [vmem:[#allocation6 + $0x4a0] sm:$0xff]
    %v238 = vld [vmem:[#allocation6 + $0x4a8] sm:$0xff]
    %v239 = vld [vmem:[#allocation6 + $0x4b0] sm:$0xff]
    %v240 = vld [vmem:[#allocation6 + $0x4b8] sm:$0xff]
    %v241 = vld [vmem:[#allocation6 + $0x4c0] sm:$0xff]
    %v242 = vld [vmem:[#allocation6 + $0x4c8] sm:$0xff]
    %v243 = vld [vmem:[#allocation6 + $0x4d0] sm:$0xff]
    %v244 = vld [vmem:[#allocation6 + $0x4d8] sm:$0xff]
    %v245 = vld [vmem:[#allocation6 + $0x4e0] sm:$0xff]
    %v246 = vld [vmem:[#allocation6 + $0x4e8] sm:$0xff]
    %v247 = vld [vmem:[#allocation6 + $0x4f0] sm:$0xff]
    %v248 = vld [vmem:[#allocation6 + $0x4f8] sm:$0xff]
    %v249 = vld [vmem:[#allocation6 + $0x500] sm:$0xff]
    %v250 = vld [vmem:[#allocation6 + $0x508] sm:$0xff]
    %v251 = vld [vmem:[#allocation6 + $0x510] sm:$0xff]
    %v252 = vld [vmem:[#allocation6 + $0x518] sm:$0xff]
    %v253 = vld [vmem:[#allocation6 + $0x520] sm:$0xff]
    %v254 = vld [vmem:[#allocation6 + $0x528] sm:$0xff]
    %v255 = vld [vmem:[#allocation6 + $0x530] sm:$0xff]
    %v256 = vld [vmem:[#allocation6 + $0x538] sm:$0xff]
    %v257 = vld [vmem:[#allocation6 + $0x540] sm:$0xff]
    %v258 = vld [vmem:[#allocation6 + $0x548] sm:$0xff]
    %v259 = vld [vmem:[#allocation6 + $0x550] sm:$0xff]
    %v260 = vld [vmem:[#allocation6 + $0x558] sm:$0xff]
    %v261 = vld [vmem:[#allocation6 + $0x560] sm:$0xff]
    %v262 = vld [vmem:[#allocation6 + $0x568] sm:$0xff]
    %v263 = vld [vmem:[#allocation6 + $0x570] sm:$0xff]
    %v264 = vld [vmem:[#allocation6 + $0x578] sm:$0xff]
    %v265 = vld [vmem:[#allocation6 + $0x580] sm:$0xff]
    %v266 = vld [vmem:[#allocation6 + $0x588] sm:$0xff]
    %v267 = vld [vmem:[#allocation6 + $0x590] sm:$0xff]
    %v268 = vld [vmem:[#allocation6 + $0x598] sm:$0xff]
    %v269 = vld [vmem:[#allocation6 + $0x5a0] sm:$0xff]
    %v270 = vld [vmem:[#allocation6 + $0x5a8] sm:$0xff]
    %v271 = vld [vmem:[#allocation6 + $0x5b0] sm:$0xff]
    %v272 = vld [vmem:[#allocation6 + $0x5b8] sm:$0xff]
    %v273 = vld [vmem:[#allocation6 + $0x5c0] sm:$0xff]
    %v274 = vld [vmem:[#allocation6 + $0x5c8] sm:$0xff]
    %v275 = vld [vmem:[#allocation6 + $0x5d0] sm:$0xff]
    %v276 = vld [vmem:[#allocation6 + $0x5d8] sm:$0xff]
    %v277 = vld [vmem:[#allocation6 + $0x5e0] sm:$0xff]
    %v278 = vld [vmem:[#allocation6 + $0x5e8] sm:$0xff]
    %v279 = vld [vmem:[#allocation6 + $0x5f0] sm:$0xff]
    %v280 = vld [vmem:[#allocation6 + $0x5f8] sm:$0xff]
    %v281 = vld [vmem:[#allocation6 + $0x600] sm:$0xff]
    %v282 = vld [vmem:[#allocation6 + $0x608] sm:$0xff]
    %v283 = vld [vmem:[#allocation6 + $0x610] sm:$0xff]
    %v284 = vld [vmem:[#allocation6 + $0x618] sm:$0xff]
    %v285 = vld [vmem:[#allocation6 + $0x620] sm:$0xff]
    %v286 = vld [vmem:[#allocation6 + $0x628] sm:$0xff]
    %v287 = vld [vmem:[#allocation6 + $0x630] sm:$0xff]
    %v288 = vld [vmem:[#allocation6 + $0x638] sm:$0xff]
    %v289 = vld [vmem:[#allocation6 + $0x640] sm:$0xff]
    %v290 = vld [vmem:[#allocation6 + $0x648] sm:$0xff]
    %v291 = vld [vmem:[#allocation6 + $0x650] sm:$0xff]
    %v292 = vld [vmem:[#allocation6 + $0x658] sm:$0xff]
    %v293 = vld [vmem:[#allocation6 + $0x660] sm:$0xff]
    %v294 = vld [vmem:[#allocation6 + $0x668] sm:$0xff]
    %v295 = vld [vmem:[#allocation6 + $0x670] sm:$0xff]
    %v296 = vld [vmem:[#allocation6 + $0x678] sm:$0xff]
    %v297 = vld [vmem:[#allocation6 + $0x680] sm:$0xff]
    %v298 = vld [vmem:[#allocation6 + $0x688] sm:$0xff]
    %v299 = vld [vmem:[#allocation6 + $0x690] sm:$0xff]
    %v300 = vld [vmem:[#allocation6 + $0x698] sm:$0xff]
    %v301 = vld [vmem:[#allocation6 + $0x6a0] sm:$0xff]
    %v302 = vld [vmem:[#allocation6 + $0x6a8] sm:$0xff]
    %v303 = vld [vmem:[#allocation6 + $0x6b0] sm:$0xff]
    %v304 = vld [vmem:[#allocation6 + $0x6b8] sm:$0xff]
    %v305 = vld [vmem:[#allocation6 + $0x6c0] sm:$0xff]
    %v306 = vld [vmem:[#allocation6 + $0x6c8] sm:$0xff]
    %v307 = vld [vmem:[#allocation6 + $0x6d0] sm:$0xff]
    %v308 = vld [vmem:[#allocation6 + $0x6d8] sm:$0xff]
    %v309 = vld [vmem:[#allocation6 + $0x6e0] sm:$0xff]
    %v310 = vld [vmem:[#allocation6 + $0x6e8] sm:$0xff]
    %v311 = vld [vmem:[#allocation6 + $0x6f0] sm:$0xff]
    %v312 = vld [vmem:[#allocation6 + $0x6f8] sm:$0xff]
    %v313 = vld [vmem:[#allocation6 + $0x700] sm:$0xff]
    %v314 = vld [vmem:[#allocation6 + $0x708] sm:$0xff]
    %v315 = vld [vmem:[#allocation6 + $0x710] sm:$0xff]
    %v316 = vld [vmem:[#allocation6 + $0x718] sm:$0xff]
    %v317 = vld [vmem:[#allocation6 + $0x720] sm:$0xff]
    %v318 = vld [vmem:[#allocation6 + $0x728] sm:$0xff]
    %v319 = vld [vmem:[#allocation6 + $0x730] sm:$0xff]
    %v320 = vld [vmem:[#allocation6 + $0x738] sm:$0xff]
    %v321 = vld [vmem:[#allocation6 + $0x740] sm:$0xff]
    %v322 = vld [vmem:[#allocation6 + $0x748] sm:$0xff]
    %v323 = vld [vmem:[#allocation6 + $0x750] sm:$0xff]
    %v324 = vld [vmem:[#allocation6 + $0x758] sm:$0xff]
    %v325 = vld [vmem:[#allocation6 + $0x760] sm:$0xff]
    %v326 = vld [vmem:[#allocation6 + $0x768] sm:$0xff]
    %v327 = vld [vmem:[#allocation6 + $0x770] sm:$0xff]
    %v328 = vld [vmem:[#allocation6 + $0x778] sm:$0xff]
    %v329 = vld [vmem:[#allocation6 + $0x780] sm:$0xff]
    %v330 = vld [vmem:[#allocation6 + $0x788] sm:$0xff]
    %v331 = vld [vmem:[#allocation6 + $0x790] sm:$0xff]
    %v332 = vld [vmem:[#allocation6 + $0x798] sm:$0xff]
    %v333 = vld [vmem:[#allocation6 + $0x7a0] sm:$0xff]
    %v334 = vld [vmem:[#allocation6 + $0x7a8] sm:$0xff]
    %v335 = vld [vmem:[#allocation6 + $0x7b0] sm:$0xff]
    %v336 = vld [vmem:[#allocation6 + $0x7b8] sm:$0xff]
    %v337 = vld [vmem:[#allocation6 + $0x7c0] sm:$0xff]
    %v338 = vld [vmem:[#allocation6 + $0x7c8] sm:$0xff]
    %v339 = vld [vmem:[#allocation6 + $0x7d0] sm:$0xff]
    %v340 = vld [vmem:[#allocation6 + $0x7d8] sm:$0xff]
    %v341 = vld [vmem:[#allocation6 + $0x7e0] sm:$0xff]
    %v342 = vld [vmem:[#allocation6 + $0x7e8] sm:$0xff]
    %v343 = vld [vmem:[#allocation6 + $0x7f0] sm:$0xff]
    %v344 = vld [vmem:[#allocation6 + $0x7f8] sm:$0xff]
    %v345 = vld [vmem:[#allocation6 + $0x800] sm:$0xff]
    %v346 = vld [vmem:[#allocation6 + $0x808] sm:$0xff]
    %v347 = vld [vmem:[#allocation6 + $0x810] sm:$0xff]
    %v348 = vld [vmem:[#allocation6 + $0x818] sm:$0xff]
    %v349 = vld [vmem:[#allocation6 + $0x820] sm:$0xff]
    %v350 = vld [vmem:[#allocation6 + $0x828] sm:$0xff]
    %v351 = vld [vmem:[#allocation6 + $0x830] sm:$0xff]
    %v352 = vld [vmem:[#allocation6 + $0x838] sm:$0xff]
    %v353 = vld [vmem:[#allocation6 + $0x840] sm:$0xff]
    %v354 = vld [vmem:[#allocation6 + $0x848] sm:$0xff]
    %v355 = vld [vmem:[#allocation6 + $0x850] sm:$0xff]
    %v356 = vld [vmem:[#allocation6 + $0x858] sm:$0xff]
    %v357 = vld [vmem:[#allocation6 + $0x860] sm:$0xff]
    %v358 = vld [vmem:[#allocation6 + $0x868] sm:$0xff]
    %v359 = vld [vmem:[#allocation6 + $0x870] sm:$0xff]
    %v360 = vld [vmem:[#allocation6 + $0x878] sm:$0xff]
    %v361 = vld [vmem:[#allocation6 + $0x880] sm:$0xff]
    %v362 = vld [vmem:[#allocation6 + $0x888] sm:$0xff]
    %v363 = vld [vmem:[#allocation6 + $0x890] sm:$0xff]
    %v364 = vld [vmem:[#allocation6 + $0x898] sm:$0xff]
    %v365 = vld [vmem:[#allocation6 + $0x8a0] sm:$0xff]
    %v366 = vld [vmem:[#allocation6 + $0x8a8] sm:$0xff]
    %v367 = vld [vmem:[#allocation6 + $0x8b0] sm:$0xff]
    %v368 = vld [vmem:[#allocation6 + $0x8b8] sm:$0xff]
    %v369 = vld [vmem:[#allocation6 + $0x8c0] sm:$0xff]
    %v370 = vld [vmem:[#allocation6 + $0x8c8] sm:$0xff]
    %v371 = vld [vmem:[#allocation6 + $0x8d0] sm:$0xff]
    %v372 = vld [vmem:[#allocation6 + $0x8d8] sm:$0xff]
    %v373 = vld [vmem:[#allocation6 + $0x8e0] sm:$0xff]
    %v374 = vld [vmem:[#allocation6 + $0x8e8] sm:$0xff]
    %v375 = vld [vmem:[#allocation6 + $0x8f0] sm:$0xff]
    %v376 = vld [vmem:[#allocation6 + $0x8f8] sm:$0xff]
    %v377 = vld [vmem:[#allocation6 + $0x900] sm:$0xff]
    %v378 = vld [vmem:[#allocation6 + $0x908] sm:$0xff]
    %v379 = vld [vmem:[#allocation6 + $0x910] sm:$0xff]
    %v380 = vld [vmem:[#allocation6 + $0x918] sm:$0xff]
    %v381 = vld [vmem:[#allocation6 + $0x920] sm:$0xff]
    %v382 = vld [vmem:[#allocation6 + $0x928] sm:$0xff]
    %v383 = vld [vmem:[#allocation6 + $0x930] sm:$0xff]
    %v384 = vld [vmem:[#allocation6 + $0x938] sm:$0xff]
    %v385 = vld [vmem:[#allocation6 + $0x940] sm:$0xff]
    %v386 = vld [vmem:[#allocation6 + $0x948] sm:$0xff]
    %v387 = vld [vmem:[#allocation6 + $0x950] sm:$0xff]
    %v388 = vld [vmem:[#allocation6 + $0x958] sm:$0xff]
    %v389 = vld [vmem:[#allocation6 + $0x960] sm:$0xff]
    %v390 = vld [vmem:[#allocation6 + $0x968] sm:$0xff]
    %v391 = vld [vmem:[#allocation6 + $0x970] sm:$0xff]
    %v392 = vld [vmem:[#allocation6 + $0x978] sm:$0xff]
    %v393 = vld [vmem:[#allocation6 + $0x980] sm:$0xff]
    %v394 = vld [vmem:[#allocation6 + $0x988] sm:$0xff]
    %v395 = vld [vmem:[#allocation6 + $0x990] sm:$0xff]
    %v396 = vld [vmem:[#allocation6 + $0x998] sm:$0xff]
    %v397 = vld [vmem:[#allocation6 + $0x9a0] sm:$0xff]
    %v398 = vld [vmem:[#allocation6 + $0x9a8] sm:$0xff]
    %v399 = vld [vmem:[#allocation6 + $0x9b0] sm:$0xff]
    %v400 = vld [vmem:[#allocation6 + $0x9b8] sm:$0xff]
    %v401 = vld [vmem:[#allocation6 + $0x9c0] sm:$0xff]
    %v402 = vld [vmem:[#allocation6 + $0x9c8] sm:$0xff]
    %v403 = vld [vmem:[#allocation6 + $0x9d0] sm:$0xff]
    %v404 = vld [vmem:[#allocation6 + $0x9d8] sm:$0xff]
    %v405 = vld [vmem:[#allocation6 + $0x9e0] sm:$0xff]
    %v406 = vld [vmem:[#allocation6 + $0x9e8] sm:$0xff]
    %v407 = vld [vmem:[#allocation6 + $0x9f0] sm:$0xff]
    %v408 = vld [vmem:[#allocation6 + $0x9f8] sm:$0xff]
    %v409 = vld [vmem:[#allocation6 + $0xa00] sm:$0xff]
    %v410 = vld [vmem:[#allocation6 + $0xa08] sm:$0xff]
    %v411 = vld [vmem:[#allocation6 + $0xa10] sm:$0xff]
    %v412 = vld [vmem:[#allocation6 + $0xa18] sm:$0xff]
    %v413 = vld [vmem:[#allocation6 + $0xa20] sm:$0xff]
    %v414 = vld [vmem:[#allocation6 + $0xa28] sm:$0xff]
    %v415 = vld [vmem:[#allocation6 + $0xa30] sm:$0xff]
    %v416 = vld [vmem:[#allocation6 + $0xa38] sm:$0xff]
    %v417 = vld [vmem:[#allocation6 + $0xa40] sm:$0xff]
    %v418 = vld [vmem:[#allocation6 + $0xa48] sm:$0xff]
    %v419 = vld [vmem:[#allocation6 + $0xa50] sm:$0xff]
    %v420 = vld [vmem:[#allocation6 + $0xa58] sm:$0xff]
    %v421 = vld [vmem:[#allocation6 + $0xa60] sm:$0xff]
    %v422 = vld [vmem:[#allocation6 + $0xa68] sm:$0xff]
    %v423 = vld [vmem:[#allocation6 + $0xa70] sm:$0xff]
    %v424 = vld [vmem:[#allocation6 + $0xa78] sm:$0xff]
    %v425 = vld [vmem:[#allocation6 + $0xa80] sm:$0xff]
    %v426 = vld [vmem:[#allocation6 + $0xa88] sm:$0xff]
    %v427 = vld [vmem:[#allocation6 + $0xa90] sm:$0xff]
    %v428 = vld [vmem:[#allocation6 + $0xa98] sm:$0xff]
    %v429 = vld [vmem:[#allocation6 + $0xaa0] sm:$0xff]
    %v430 = vld [vmem:[#allocation6 + $0xaa8] sm:$0xff]
    %v431 = vld [vmem:[#allocation6 + $0xab0] sm:$0xff]
    %v432 = vld [vmem:[#allocation6 + $0xab8] sm:$0xff]
    %v433 = vld [vmem:[#allocation6 + $0xac0] sm:$0xff]
    %v434 = vld [vmem:[#allocation6 + $0xac8] sm:$0xff]
    %v435 = vld [vmem:[#allocation6 + $0xad0] sm:$0xff]
    %v436 = vld [vmem:[#allocation6 + $0xad8] sm:$0xff]
    %v437 = vld [vmem:[#allocation6 + $0xae0] sm:$0xff]
    %v438 = vld [vmem:[#allocation6 + $0xae8] sm:$0xff]
    %v439 = vld [vmem:[#allocation6 + $0xaf0] sm:$0xff]
    %v440 = vld [vmem:[#allocation6 + $0xaf8] sm:$0xff]
    %v441 = vld [vmem:[#allocation6 + $0xb00] sm:$0xff]
    %v442 = vld [vmem:[#allocation6 + $0xb08] sm:$0xff]
    %v443 = vld [vmem:[#allocation6 + $0xb10] sm:$0xff]
    %v444 = vld [vmem:[#allocation6 + $0xb18] sm:$0xff]
    %v445 = vld [vmem:[#allocation6 + $0xb20] sm:$0xff]
    %v446 = vld [vmem:[#allocation6 + $0xb28] sm:$0xff]
    %v447 = vld [vmem:[#allocation6 + $0xb30] sm:$0xff]
    %v448 = vld [vmem:[#allocation6 + $0xb38] sm:$0xff]
    %v449 = vld [vmem:[#allocation6 + $0xb40] sm:$0xff]
    %v450 = vld [vmem:[#allocation6 + $0xb48] sm:$0xff]
    %v451 = vld [vmem:[#allocation6 + $0xb50] sm:$0xff]
    %v452 = vld [vmem:[#allocation6 + $0xb58] sm:$0xff]
    %v453 = vld [vmem:[#allocation6 + $0xb60] sm:$0xff]
    %v454 = vld [vmem:[#allocation6 + $0xb68] sm:$0xff]
    %v455 = vld [vmem:[#allocation6 + $0xb70] sm:$0xff]
    %v456 = vld [vmem:[#allocation6 + $0xb78] sm:$0xff]
    %v457 = vld [vmem:[#allocation6 + $0xb80] sm:$0xff]
    %v458 = vld [vmem:[#allocation6 + $0xb88] sm:$0xff]
    %v459 = vld [vmem:[#allocation6 + $0xb90] sm:$0xff]
    %v460 = vld [vmem:[#allocation6 + $0xb98] sm:$0xff]
    %v461 = vld [vmem:[#allocation6 + $0xba0] sm:$0xff]
    %v462 = vld [vmem:[#allocation6 + $0xba8] sm:$0xff]
    %v463 = vld [vmem:[#allocation6 + $0xbb0] sm:$0xff]
    %v464 = vld [vmem:[#allocation6 + $0xbb8] sm:$0xff]
    %v465 = vld [vmem:[#allocation6 + $0xbc0] sm:$0xff]
    %v466 = vld [vmem:[#allocation6 + $0xbc8] sm:$0xff]
    %v467 = vld [vmem:[#allocation6 + $0xbd0] sm:$0xff]
    %v468 = vld [vmem:[#allocation6 + $0xbd8] sm:$0xff]
    %v469 = vld [vmem:[#allocation6 + $0xbe0] sm:$0xff]
    %v470 = vld [vmem:[#allocation6 + $0xbe8] sm:$0xff]
    %v471 = vld [vmem:[#allocation6 + $0xbf0] sm:$0xff]
    %v472 = vld [vmem:[#allocation6 + $0xbf8] sm:$0xff]
    %v473 = vld [vmem:[#allocation6 + $0xc00] sm:$0xff]
    %v474 = vld [vmem:[#allocation6 + $0xc08] sm:$0xff]
    %v475 = vld [vmem:[#allocation6 + $0xc10] sm:$0xff]
    %v476 = vld [vmem:[#allocation6 + $0xc18] sm:$0xff]
    %v477 = vld [vmem:[#allocation6 + $0xc20] sm:$0xff]
    %v478 = vld [vmem:[#allocation6 + $0xc28] sm:$0xff]
    %v479 = vld [vmem:[#allocation6 + $0xc30] sm:$0xff]
    %v480 = vld [vmem:[#allocation6 + $0xc38] sm:$0xff]
    %v481 = vld [vmem:[#allocation6 + $0xc40] sm:$0xff]
    %v482 = vld [vmem:[#allocation6 + $0xc48] sm:$0xff]
    %v483 = vld [vmem:[#allocation6 + $0xc50] sm:$0xff]
    %v484 = vld [vmem:[#allocation6 + $0xc58] sm:$0xff]
    %v485 = vld [vmem:[#allocation6 + $0xc60] sm:$0xff]
    %v486 = vld [vmem:[#allocation6 + $0xc68] sm:$0xff]
    %v487 = vld [vmem:[#allocation6 + $0xc70] sm:$0xff]
    %v488 = vld [vmem:[#allocation6 + $0xc78] sm:$0xff]
    %v489 = vld [vmem:[#allocation6 + $0xc80] sm:$0xff]
    %v490 = vld [vmem:[#allocation6 + $0xc88] sm:$0xff]
    %v491 = vld [vmem:[#allocation6 + $0xc90] sm:$0xff]
    %v492 = vld [vmem:[#allocation6 + $0xc98] sm:$0xff]
    %v493 = vld [vmem:[#allocation6 + $0xca0] sm:$0xff]
    %v494 = vld [vmem:[#allocation6 + $0xca8] sm:$0xff]
    %v495 = vld [vmem:[#allocation6 + $0xcb0] sm:$0xff]
    %v496 = vld [vmem:[#allocation6 + $0xcb8] sm:$0xff]
    %v497 = vld [vmem:[#allocation6 + $0xcc0] sm:$0xff]
    %v498 = vld [vmem:[#allocation6 + $0xcc8] sm:$0xff]
    %v499 = vld [vmem:[#allocation6 + $0xcd0] sm:$0xff]
    %v500 = vld [vmem:[#allocation6 + $0xcd8] sm:$0xff]
    %v501 = vld [vmem:[#allocation6 + $0xce0] sm:$0xff]
    %v502 = vld [vmem:[#allocation6 + $0xce8] sm:$0xff]
    %v503 = vld [vmem:[#allocation6 + $0xcf0] sm:$0xff]
    %v504 = vld [vmem:[#allocation6 + $0xcf8] sm:$0xff]
    %v505 = vld [vmem:[#allocation6 + $0xd00] sm:$0xff]
    %v506 = vld [vmem:[#allocation6 + $0xd08] sm:$0xff]
    %v507 = vld [vmem:[#allocation6 + $0xd10] sm:$0xff]
    %v508 = vld [vmem:[#allocation6 + $0xd18] sm:$0xff]
    %v509 = vld [vmem:[#allocation6 + $0xd20] sm:$0xff]
    %v510 = vld [vmem:[#allocation6 + $0xd28] sm:$0xff]
    %v511 = vld [vmem:[#allocation6 + $0xd30] sm:$0xff]
    %v512 = vld [vmem:[#allocation6 + $0xd38] sm:$0xff]
    %v513 = vld [vmem:[#allocation6 + $0xd40] sm:$0xff]
    %v514 = vld [vmem:[#allocation6 + $0xd48] sm:$0xff]
    %v515 = vld [vmem:[#allocation6 + $0xd50] sm:$0xff]
    %v516 = vld [vmem:[#allocation6 + $0xd58] sm:$0xff]
    %v517 = vld [vmem:[#allocation6 + $0xd60] sm:$0xff]
    %v518 = vld [vmem:[#allocation6 + $0xd68] sm:$0xff]
    %v519 = vld [vmem:[#allocation6 + $0xd70] sm:$0xff]
    %v520 = vld [vmem:[#allocation6 + $0xd78] sm:$0xff]
    %v521 = vld [vmem:[#allocation6 + $0xd80] sm:$0xff]
    %v522 = vld [vmem:[#allocation6 + $0xd88] sm:$0xff]
    %v523 = vld [vmem:[#allocation6 + $0xd90] sm:$0xff]
    %v524 = vld [vmem:[#allocation6 + $0xd98] sm:$0xff]
    %v525 = vld [vmem:[#allocation6 + $0xda0] sm:$0xff]
    %v526 = vld [vmem:[#allocation6 + $0xda8] sm:$0xff]
    %v527 = vld [vmem:[#allocation6 + $0xdb0] sm:$0xff]
    %v528 = vld [vmem:[#allocation6 + $0xdb8] sm:$0xff]
    %v529 = vld [vmem:[#allocation6 + $0xdc0] sm:$0xff]
    %v530 = vld [vmem:[#allocation6 + $0xdc8] sm:$0xff]
    %v531 = vld [vmem:[#allocation6 + $0xdd0] sm:$0xff]
    %v532 = vld [vmem:[#allocation6 + $0xdd8] sm:$0xff]
    %v533 = vld [vmem:[#allocation6 + $0xde0] sm:$0xff]
    %v534 = vld [vmem:[#allocation6 + $0xde8] sm:$0xff]
    %v535 = vld [vmem:[#allocation6 + $0xdf0] sm:$0xff]
    %v536 = vld [vmem:[#allocation6 + $0xdf8] sm:$0xff]
    %v537 = vld [vmem:[#allocation6 + $0xe00] sm:$0xff]
    %v538 = vld [vmem:[#allocation6 + $0xe08] sm:$0xff]
    %v539 = vld [vmem:[#allocation6 + $0xe10] sm:$0xff]
    %v540 = vld [vmem:[#allocation6 + $0xe18] sm:$0xff]
    %v541 = vld [vmem:[#allocation6 + $0xe20] sm:$0xff]
    %v542 = vld [vmem:[#allocation6 + $0xe28] sm:$0xff]
    %v543 = vld [vmem:[#allocation6 + $0xe30] sm:$0xff]
    %v544 = vld [vmem:[#allocation6 + $0xe38] sm:$0xff]
    %v545 = vld [vmem:[#allocation6 + $0xe40] sm:$0xff]
    %v546 = vld [vmem:[#allocation6 + $0xe48] sm:$0xff]
    %v547 = vld [vmem:[#allocation6 + $0xe50] sm:$0xff]
    %v548 = vld [vmem:[#allocation6 + $0xe58] sm:$0xff]
    %v549 = vld [vmem:[#allocation6 + $0xe60] sm:$0xff]
    %v550 = vld [vmem:[#allocation6 + $0xe68] sm:$0xff]
    %v551 = vld [vmem:[#allocation6 + $0xe70] sm:$0xff]
    %v552 = vld [vmem:[#allocation6 + $0xe78] sm:$0xff]
    %v553 = vld [vmem:[#allocation6 + $0xe80] sm:$0xff]
    %v554 = vld [vmem:[#allocation6 + $0xe88] sm:$0xff]
    %v555 = vld [vmem:[#allocation6 + $0xe90] sm:$0xff]
    %v556 = vld [vmem:[#allocation6 + $0xe98] sm:$0xff]
    %v557 = vld [vmem:[#allocation6 + $0xea0] sm:$0xff]
    %v558 = vld [vmem:[#allocation6 + $0xea8] sm:$0xff]
    %v559 = vld [vmem:[#allocation6 + $0xeb0] sm:$0xff]
    %v560 = vld [vmem:[#allocation6 + $0xeb8] sm:$0xff]
    %v561 = vld [vmem:[#allocation6 + $0xec0] sm:$0xff]
    %v562 = vld [vmem:[#allocation6 + $0xec8] sm:$0xff]
    %v563 = vld [vmem:[#allocation6 + $0xed0] sm:$0xff]
    %v564 = vld [vmem:[#allocation6 + $0xed8] sm:$0xff]
    %v565 = vld [vmem:[#allocation6 + $0xee0] sm:$0xff]
    %v566 = vld [vmem:[#allocation6 + $0xee8] sm:$0xff]
    %v567 = vld [vmem:[#allocation6 + $0xef0] sm:$0xff]
    %v568 = vld [vmem:[#allocation6 + $0xef8] sm:$0xff]
    %v569 = vld [vmem:[#allocation6 + $0xf00] sm:$0xff]
    %v570 = vld [vmem:[#allocation6 + $0xf08] sm:$0xff]
    %v571 = vld [vmem:[#allocation6 + $0xf10] sm:$0xff]
    %v572 = vld [vmem:[#allocation6 + $0xf18] sm:$0xff]
    %v573 = vld [vmem:[#allocation6 + $0xf20] sm:$0xff]
    %v574 = vld [vmem:[#allocation6 + $0xf28] sm:$0xff]
    %v575 = vld [vmem:[#allocation6 + $0xf30] sm:$0xff]
    %v576 = vld [vmem:[#allocation6 + $0xf38] sm:$0xff]
    %v577 = vld [vmem:[#allocation6 + $0xf40] sm:$0xff]
    %v578 = vld [vmem:[#allocation6 + $0xf48] sm:$0xff]
    %v579 = vld [vmem:[#allocation6 + $0xf50] sm:$0xff]
    %v580 = vld [vmem:[#allocation6 + $0xf58] sm:$0xff]
    %v581 = vld [vmem:[#allocation6 + $0xf60] sm:$0xff]
    %v582 = vld [vmem:[#allocation6 + $0xf68] sm:$0xff]
    %v583 = vld [vmem:[#allocation6 + $0xf70] sm:$0xff]
    %v584 = vld [vmem:[#allocation6 + $0xf78] sm:$0xff]
    %v585 = vld [vmem:[#allocation6 + $0xf80] sm:$0xff]
    %v586 = vld [vmem:[#allocation6 + $0xf88] sm:$0xff]
    %v587 = vld [vmem:[#allocation6 + $0xf90] sm:$0xff]
    %v588 = vld [vmem:[#allocation6 + $0xf98] sm:$0xff]
    %v589 = vld [vmem:[#allocation6 + $0xfa0] sm:$0xff]
    %v590 = vld [vmem:[#allocation6 + $0xfa8] sm:$0xff]
    %v591 = vld [vmem:[#allocation6 + $0xfb0] sm:$0xff]
    %v592 = vld [vmem:[#allocation6 + $0xfb8] sm:$0xff]
    %v593 = vld [vmem:[#allocation6 + $0xfc0] sm:$0xff]
    %v594 = vld [vmem:[#allocation6 + $0xfc8] sm:$0xff]
    %v595 = vld [vmem:[#allocation6 + $0xfd0] sm:$0xff]
    %v596 = vld [vmem:[#allocation6 + $0xfd8] sm:$0xff]
    %v597 = vld [vmem:[#allocation6 + $0xfe0] sm:$0xff]
    %v598 = vld [vmem:[#allocation6 + $0xfe8] sm:$0xff]
    %v599 = vld [vmem:[#allocation6 + $0xff0] sm:$0xff]
    %v600 = vld [vmem:[#allocation6 + $0xff8] sm:$0xff]
    %v601 = vld [vmem:[#allocation6 + $0x1000] sm:$0xff]
    %v602 = vld [vmem:[#allocation6 + $0x1008] sm:$0xff]
    %v603 = vld [vmem:[#allocation6 + $0x1010] sm:$0xff]
    %v604 = vld [vmem:[#allocation6 + $0x1018] sm:$0xff]
    %v605 = vld [vmem:[#allocation6 + $0x1020] sm:$0xff]
    %v606 = vld [vmem:[#allocation6 + $0x1028] sm:$0xff]
    %v607 = vld [vmem:[#allocation6 + $0x1030] sm:$0xff]
    %v608 = vld [vmem:[#allocation6 + $0x1038] sm:$0xff]
    %v609 = vld [vmem:[#allocation6 + $0x1040] sm:$0xff]
    %v610 = vld [vmem:[#allocation6 + $0x1048] sm:$0xff]
    %v611 = vld [vmem:[#allocation6 + $0x1050] sm:$0xff]
    %v612 = vld [vmem:[#allocation6 + $0x1058] sm:$0xff]
    %v613 = vld [vmem:[#allocation6 + $0x1060] sm:$0xff]
    %v614 = vld [vmem:[#allocation6 + $0x1068] sm:$0xff]
    %v615 = vld [vmem:[#allocation6 + $0x1070] sm:$0xff]
    %v616 = vld [vmem:[#allocation6 + $0x1078] sm:$0xff]
    %v617 = vld [vmem:[#allocation6 + $0x1080] sm:$0xff]
    %v618 = vld [vmem:[#allocation6 + $0x1088] sm:$0xff]
    %v619 = vld [vmem:[#allocation6 + $0x1090] sm:$0xff]
    %v620 = vld [vmem:[#allocation6 + $0x1098] sm:$0xff]
    %v621 = vld [vmem:[#allocation6 + $0x10a0] sm:$0xff]
    %v622 = vld [vmem:[#allocation6 + $0x10a8] sm:$0xff]
    %v623 = vld [vmem:[#allocation6 + $0x10b0] sm:$0xff]
    %v624 = vld [vmem:[#allocation6 + $0x10b8] sm:$0xff]
    %v625 = vld [vmem:[#allocation6 + $0x10c0] sm:$0xff]
    %v626 = vld [vmem:[#allocation6 + $0x10c8] sm:$0xff]
    %v627 = vld [vmem:[#allocation6 + $0x10d0] sm:$0xff]
    %v628 = vld [vmem:[#allocation6 + $0x10d8] sm:$0xff]
    %v629 = vld [vmem:[#allocation6 + $0x10e0] sm:$0xff]
    %v630 = vld [vmem:[#allocation6 + $0x10e8] sm:$0xff]
    %v631 = vld [vmem:[#allocation6 + $0x10f0] sm:$0xff]
    %v632 = vld [vmem:[#allocation6 + $0x10f8] sm:$0xff]
    %v633 = vld [vmem:[#allocation6 + $0x1100] sm:$0xff]
    %v634 = vld [vmem:[#allocation6 + $0x1108] sm:$0xff]
    %v635 = vld [vmem:[#allocation6 + $0x1110] sm:$0xff]
    %v636 = vld [vmem:[#allocation6 + $0x1118] sm:$0xff]
    %v637 = vld [vmem:[#allocation6 + $0x1120] sm:$0xff]
    %v638 = vld [vmem:[#allocation6 + $0x1128] sm:$0xff]
    %v639 = vld [vmem:[#allocation6 + $0x1130] sm:$0xff]
    %v640 = vld [vmem:[#allocation6 + $0x1138] sm:$0xff]
    %v641 = vld [vmem:[#allocation6 + $0x1140] sm:$0xff]
    %v642 = vld [vmem:[#allocation6 + $0x1148] sm:$0xff]
    %v643 = vld [vmem:[#allocation6 + $0x1150] sm:$0xff]
    %v644 = vld [vmem:[#allocation6 + $0x1158] sm:$0xff]
    %v645 = vld [vmem:[#allocation6 + $0x1160] sm:$0xff]
    %v646 = vld [vmem:[#allocation6 + $0x1168] sm:$0xff]
    %v647 = vld [vmem:[#allocation6 + $0x1170] sm:$0xff]
    %v648 = vld [vmem:[#allocation6 + $0x1178] sm:$0xff]
    %v649 = vld [vmem:[#allocation6 + $0x1180] sm:$0xff]
    %v650 = vld [vmem:[#allocation6 + $0x1188] sm:$0xff]
    %v651 = vld [vmem:[#allocation6 + $0x1190] sm:$0xff]
    %v652 = vld [vmem:[#allocation6 + $0x1198] sm:$0xff]
    %v653 = vld [vmem:[#allocation6 + $0x11a0] sm:$0xff]
    %v654 = vld [vmem:[#allocation6 + $0x11a8] sm:$0xff]
    %v655 = vld [vmem:[#allocation6 + $0x11b0] sm:$0xff]
    %v656 = vld [vmem:[#allocation6 + $0x11b8] sm:$0xff]
    %v657 = vld [vmem:[#allocation6 + $0x11c0] sm:$0xff]
    %v658 = vld [vmem:[#allocation6 + $0x11c8] sm:$0xff]
    %v659 = vld [vmem:[#allocation6 + $0x11d0] sm:$0xff]
    %v660 = vld [vmem:[#allocation6 + $0x11d8] sm:$0xff]
    %v661 = vld [vmem:[#allocation6 + $0x11e0] sm:$0xff]
    %v662 = vld [vmem:[#allocation6 + $0x11e8] sm:$0xff]
    %v663 = vld [vmem:[#allocation6 + $0x11f0] sm:$0xff]
    %v664 = vld [vmem:[#allocation6 + $0x11f8] sm:$0xff]
    %v665 = vld [vmem:[#allocation6 + $0x1200] sm:$0xff]
    %v666 = vld [vmem:[#allocation6 + $0x1208] sm:$0xff]
    %v667 = vld [vmem:[#allocation6 + $0x1210] sm:$0xff]
    %v668 = vld [vmem:[#allocation6 + $0x1218] sm:$0xff]
    %v669 = vld [vmem:[#allocation6 + $0x1220] sm:$0xff]
    %v670 = vld [vmem:[#allocation6 + $0x1228] sm:$0xff]
    %v671 = vld [vmem:[#allocation6 + $0x1230] sm:$0xff]
    %v672 = vld [vmem:[#allocation6 + $0x1238] sm:$0xff]
    %v673 = vld [vmem:[#allocation6 + $0x1240] sm:$0xff]
    %v674 = vld [vmem:[#allocation6 + $0x1248] sm:$0xff]
    %v675 = vld [vmem:[#allocation6 + $0x1250] sm:$0xff]
    %v676 = vld [vmem:[#allocation6 + $0x1258] sm:$0xff]
    %v677 = vld [vmem:[#allocation6 + $0x1260] sm:$0xff]
    %v678 = vld [vmem:[#allocation6 + $0x1268] sm:$0xff]
    %v679 = vld [vmem:[#allocation6 + $0x1270] sm:$0xff]
    %v680 = vld [vmem:[#allocation6 + $0x1278] sm:$0xff]
    %v681 = vld [vmem:[#allocation6 + $0x1280] sm:$0xff]
    %v682 = vld [vmem:[#allocation6 + $0x1288] sm:$0xff]
    %v683 = vld [vmem:[#allocation6 + $0x1290] sm:$0xff]
    %v684 = vld [vmem:[#allocation6 + $0x1298] sm:$0xff]
    %v685 = vld [vmem:[#allocation6 + $0x12a0] sm:$0xff]
    %v686 = vld [vmem:[#allocation6 + $0x12a8] sm:$0xff]
    %v687 = vld [vmem:[#allocation6 + $0x12b0] sm:$0xff]
    %v688 = vld [vmem:[#allocation6 + $0x12b8] sm:$0xff]
    %v689 = vld [vmem:[#allocation6 + $0x12c0] sm:$0xff]
    %v690 = vld [vmem:[#allocation6 + $0x12c8] sm:$0xff]
    %v691 = vld [vmem:[#allocation6 + $0x12d0] sm:$0xff]
    %v692 = vld [vmem:[#allocation6 + $0x12d8] sm:$0xff]
    %v693 = vld [vmem:[#allocation6 + $0x12e0] sm:$0xff]
    %v694 = vld [vmem:[#allocation6 + $0x12e8] sm:$0xff]
    %v695 = vld [vmem:[#allocation6 + $0x12f0] sm:$0xff]
    %v696 = vld [vmem:[#allocation6 + $0x12f8] sm:$0xff]
    %v697 = vld [vmem:[#allocation6 + $0x1300] sm:$0xff]
    %v698 = vld [vmem:[#allocation6 + $0x1308] sm:$0xff]
    %v699 = vld [vmem:[#allocation6 + $0x1310] sm:$0xff]
    %v700 = vld [vmem:[#allocation6 + $0x1318] sm:$0xff]
    %v701 = vld [vmem:[#allocation6 + $0x1320] sm:$0xff]
    %v702 = vld [vmem:[#allocation6 + $0x1328] sm:$0xff]
    %v703 = vld [vmem:[#allocation6 + $0x1330] sm:$0xff]
    %v704 = vld [vmem:[#allocation6 + $0x1338] sm:$0xff]
    %v705 = vld [vmem:[#allocation6 + $0x1340] sm:$0xff]
    %v706 = vld [vmem:[#allocation6 + $0x1348] sm:$0xff]
    %v707 = vld [vmem:[#allocation6 + $0x1350] sm:$0xff]
    %v708 = vld [vmem:[#allocation6 + $0x1358] sm:$0xff]
    %v709 = vld [vmem:[#allocation6 + $0x1360] sm:$0xff]
    %v710 = vld [vmem:[#allocation6 + $0x1368] sm:$0xff]
    %v711 = vld [vmem:[#allocation6 + $0x1370] sm:$0xff]
    %v712 = vld [vmem:[#allocation6 + $0x1378] sm:$0xff]
    %v713 = vld [vmem:[#allocation6 + $0x1380] sm:$0xff]
    %v714 = vld [vmem:[#allocation6 + $0x1388] sm:$0xff]
    %v715 = vld [vmem:[#allocation6 + $0x1390] sm:$0xff]
    %v716 = vld [vmem:[#allocation6 + $0x1398] sm:$0xff]
    %v717 = vld [vmem:[#allocation6 + $0x13a0] sm:$0xff]
    %v718 = vld [vmem:[#allocation6 + $0x13a8] sm:$0xff]
    %v719 = vld [vmem:[#allocation6 + $0x13b0] sm:$0xff]
    %v720 = vld [vmem:[#allocation6 + $0x13b8] sm:$0xff]
    %v721 = vld [vmem:[#allocation6 + $0x13c0] sm:$0xff]
    %v722 = vld [vmem:[#allocation6 + $0x13c8] sm:$0xff]
    %v723 = vld [vmem:[#allocation6 + $0x13d0] sm:$0xff]
    %v724 = vld [vmem:[#allocation6 + $0x13d8] sm:$0xff]
    %v725 = vld [vmem:[#allocation6 + $0x13e0] sm:$0xff]
    %v726 = vld [vmem:[#allocation6 + $0x13e8] sm:$0xff]
    %v727 = vld [vmem:[#allocation6 + $0x13f0] sm:$0xff]
    %v728 = vld [vmem:[#allocation6 + $0x13f8] sm:$0xff]
    %v729 = vld [vmem:[#allocation6 + $0x1400] sm:$0xff]
    %v730 = vld [vmem:[#allocation6 + $0x1408] sm:$0xff]
    %v731 = vld [vmem:[#allocation6 + $0x1410] sm:$0xff]
    %v732 = vld [vmem:[#allocation6 + $0x1418] sm:$0xff]
    %v733 = vld [vmem:[#allocation6 + $0x1420] sm:$0xff]
    %v734 = vld [vmem:[#allocation6 + $0x1428] sm:$0xff]
    %v735 = vld [vmem:[#allocation6 + $0x1430] sm:$0xff]
    %v736 = vld [vmem:[#allocation6 + $0x1438] sm:$0xff]
    %v737 = vld [vmem:[#allocation6 + $0x1440] sm:$0xff]
    %v738 = vld [vmem:[#allocation6 + $0x1448] sm:$0xff]
    %v739 = vld [vmem:[#allocation6 + $0x1450] sm:$0xff]
    %v740 = vld [vmem:[#allocation6 + $0x1458] sm:$0xff]
    %v741 = vld [vmem:[#allocation6 + $0x1460] sm:$0xff]
    %v742 = vld [vmem:[#allocation6 + $0x1468] sm:$0xff]
    %v743 = vld [vmem:[#allocation6 + $0x1470] sm:$0xff]
    %v744 = vld [vmem:[#allocation6 + $0x1478] sm:$0xff]
    %v745 = vld [vmem:[#allocation6 + $0x1480] sm:$0xff]
    %v746 = vld [vmem:[#allocation6 + $0x1488] sm:$0xff]
    %v747 = vld [vmem:[#allocation6 + $0x1490] sm:$0xff]
    %v748 = vld [vmem:[#allocation6 + $0x1498] sm:$0xff]
    %v749 = vld [vmem:[#allocation6 + $0x14a0] sm:$0xff]
    %v750 = vld [vmem:[#allocation6 + $0x14a8] sm:$0xff]
    %v751 = vld [vmem:[#allocation6 + $0x14b0] sm:$0xff]
    %v752 = vld [vmem:[#allocation6 + $0x14b8] sm:$0xff]
    %v753 = vld [vmem:[#allocation6 + $0x14c0] sm:$0xff]
    %v754 = vld [vmem:[#allocation6 + $0x14c8] sm:$0xff]
    %v755 = vld [vmem:[#allocation6 + $0x14d0] sm:$0xff]
    %v756 = vld [vmem:[#allocation6 + $0x14d8] sm:$0xff]
    %v757 = vld [vmem:[#allocation6 + $0x14e0] sm:$0xff]
    %v758 = vld [vmem:[#allocation6 + $0x14e8] sm:$0xff]
    %v759 = vld [vmem:[#allocation6 + $0x14f0] sm:$0xff]
    %v760 = vld [vmem:[#allocation6 + $0x14f8] sm:$0xff]
    %v761 = vld [vmem:[#allocation6 + $0x1500] sm:$0xff]
    %v762 = vld [vmem:[#allocation6 + $0x1508] sm:$0xff]
    %v763 = vld [vmem:[#allocation6 + $0x1510] sm:$0xff]
    %v764 = vld [vmem:[#allocation6 + $0x1518] sm:$0xff]
    %v765 = vld [vmem:[#allocation6 + $0x1520] sm:$0xff]
    %v766 = vld [vmem:[#allocation6 + $0x1528] sm:$0xff]
    %v767 = vld [vmem:[#allocation6 + $0x1530] sm:$0xff]
    %v768 = vld [vmem:[#allocation6 + $0x1538] sm:$0xff]
    %v769 = vld [vmem:[#allocation6 + $0x1540] sm:$0xff]
    %v770 = vld [vmem:[#allocation6 + $0x1548] sm:$0xff]
    %v771 = vld [vmem:[#allocation6 + $0x1550] sm:$0xff]
    %v772 = vld [vmem:[#allocation6 + $0x1558] sm:$0xff]
    %v773 = vld [vmem:[#allocation6 + $0x1560] sm:$0xff]
    %v774 = vld [vmem:[#allocation6 + $0x1568] sm:$0xff]
    %v775 = vld [vmem:[#allocation6 + $0x1570] sm:$0xff]
    %v776 = vld [vmem:[#allocation6 + $0x1578] sm:$0xff]
    %v777 = vld [vmem:[#allocation6 + $0x1580] sm:$0xff]
    %v778 = vld [vmem:[#allocation6 + $0x1588] sm:$0xff]
    %v779 = vld [vmem:[#allocation6 + $0x1590] sm:$0xff]
    %v780 = vld [vmem:[#allocation6 + $0x1598] sm:$0xff]
    %v781 = vld [vmem:[#allocation6 + $0x15a0] sm:$0xff]
    %v782 = vld [vmem:[#allocation6 + $0x15a8] sm:$0xff]
    %v783 = vld [vmem:[#allocation6 + $0x15b0] sm:$0xff]
    %v784 = vld [vmem:[#allocation6 + $0x15b8] sm:$0xff]
    %v785 = vld [vmem:[#allocation6 + $0x15c0] sm:$0xff]
    %v786 = vld [vmem:[#allocation6 + $0x15c8] sm:$0xff]
    %v787 = vld [vmem:[#allocation6 + $0x15d0] sm:$0xff]
    %v788 = vld [vmem:[#allocation6 + $0x15d8] sm:$0xff]
    %v789 = vld [vmem:[#allocation6 + $0x15e0] sm:$0xff]
    %v790 = vld [vmem:[#allocation6 + $0x15e8] sm:$0xff]
    %v791 = vld [vmem:[#allocation6 + $0x15f0] sm:$0xff]
    %v792 = vld [vmem:[#allocation6 + $0x15f8] sm:$0xff]
    %v793 = vld [vmem:[#allocation6 + $0x1600] sm:$0xff]
    %v794 = vld [vmem:[#allocation6 + $0x1608] sm:$0xff]
    %v795 = vld [vmem:[#allocation6 + $0x1610] sm:$0xff]
    %v796 = vld [vmem:[#allocation6 + $0x1618] sm:$0xff]
    %v797 = vld [vmem:[#allocation6 + $0x1620] sm:$0xff]
    %v798 = vld [vmem:[#allocation6 + $0x1628] sm:$0xff]
    %v799 = vld [vmem:[#allocation6 + $0x1630] sm:$0xff]
    %v800 = vld [vmem:[#allocation6 + $0x1638] sm:$0xff]
    %v801 = vld [vmem:[#allocation6 + $0x1640] sm:$0xff]
    %v802 = vld [vmem:[#allocation6 + $0x1648] sm:$0xff]
    %v803 = vld [vmem:[#allocation6 + $0x1650] sm:$0xff]
    %v804 = vld [vmem:[#allocation6 + $0x1658] sm:$0xff]
    %v805 = vld [vmem:[#allocation6 + $0x1660] sm:$0xff]
    %v806 = vld [vmem:[#allocation6 + $0x1668] sm:$0xff]
    %v807 = vld [vmem:[#allocation6 + $0x1670] sm:$0xff]
    %v808 = vld [vmem:[#allocation6 + $0x1678] sm:$0xff]
    %v809 = vld [vmem:[#allocation6 + $0x1680] sm:$0xff]
    %v810 = vld [vmem:[#allocation6 + $0x1688] sm:$0xff]
    %v811 = vld [vmem:[#allocation6 + $0x1690] sm:$0xff]
    %v812 = vld [vmem:[#allocation6 + $0x1698] sm:$0xff]
    %v813 = vld [vmem:[#allocation6 + $0x16a0] sm:$0xff]
    %v814 = vld [vmem:[#allocation6 + $0x16a8] sm:$0xff]
    %v815 = vld [vmem:[#allocation6 + $0x16b0] sm:$0xff]
    %v816 = vld [vmem:[#allocation6 + $0x16b8] sm:$0xff]
    %v817 = vld [vmem:[#allocation6 + $0x16c0] sm:$0xff]
    %v818 = vld [vmem:[#allocation6 + $0x16c8] sm:$0xff]
    %v819 = vld [vmem:[#allocation6 + $0x16d0] sm:$0xff]
    %v820 = vld [vmem:[#allocation6 + $0x16d8] sm:$0xff]
    %v821 = vld [vmem:[#allocation6 + $0x16e0] sm:$0xff]
    %v822 = vld [vmem:[#allocation6 + $0x16e8] sm:$0xff]
    %v823 = vld [vmem:[#allocation6 + $0x16f0] sm:$0xff]
    %v824 = vld [vmem:[#allocation6 + $0x16f8] sm:$0xff]
    %v825 = vld [vmem:[#allocation6 + $0x1700] sm:$0xff]
    %v826 = vld [vmem:[#allocation6 + $0x1708] sm:$0xff]
    %v827 = vld [vmem:[#allocation6 + $0x1710] sm:$0xff]
    %v828 = vld [vmem:[#allocation6 + $0x1718] sm:$0xff]
    %v829 = vld [vmem:[#allocation6 + $0x1720] sm:$0xff]
    %v830 = vld [vmem:[#allocation6 + $0x1728] sm:$0xff]
    %v831 = vld [vmem:[#allocation6 + $0x1730] sm:$0xff]
    %v832 = vld [vmem:[#allocation6 + $0x1738] sm:$0xff]
    %v833 = vld [vmem:[#allocation6 + $0x1740] sm:$0xff]
    %v834 = vld [vmem:[#allocation6 + $0x1748] sm:$0xff]
    %v835 = vld [vmem:[#allocation6 + $0x1750] sm:$0xff]
    %v836 = vld [vmem:[#allocation6 + $0x1758] sm:$0xff]
    %v837 = vld [vmem:[#allocation6 + $0x1760] sm:$0xff]
    %v838 = vld [vmem:[#allocation6 + $0x1768] sm:$0xff]
    %v839 = vld [vmem:[#allocation6 + $0x1770] sm:$0xff]
    %v840 = vld [vmem:[#allocation6 + $0x1778] sm:$0xff]
    %v841 = vld [vmem:[#allocation6 + $0x1780] sm:$0xff]
    %v842 = vld [vmem:[#allocation6 + $0x1788] sm:$0xff]
    %v843 = vld [vmem:[#allocation6 + $0x1790] sm:$0xff]
    %v844 = vld [vmem:[#allocation6 + $0x1798] sm:$0xff]
    %v845 = vld [vmem:[#allocation6 + $0x17a0] sm:$0xff]
    %v846 = vld [vmem:[#allocation6 + $0x17a8] sm:$0xff]
    %v847 = vld [vmem:[#allocation6 + $0x17b0] sm:$0xff]
    %v848 = vld [vmem:[#allocation6 + $0x17b8] sm:$0xff]
    %v849 = vld [vmem:[#allocation6 + $0x17c0] sm:$0xff]
    %v850 = vld [vmem:[#allocation6 + $0x17c8] sm:$0xff]
    %v851 = vld [vmem:[#allocation6 + $0x17d0] sm:$0xff]
    %v852 = vld [vmem:[#allocation6 + $0x17d8] sm:$0xff]
    %v853 = vld [vmem:[#allocation6 + $0x17e0] sm:$0xff]
    %v854 = vld [vmem:[#allocation6 + $0x17e8] sm:$0xff]
    %v855 = vld [vmem:[#allocation6 + $0x17f0] sm:$0xff]
    %v856 = vld [vmem:[#allocation6 + $0x17f8] sm:$0xff]
    %v857 = vld [vmem:[#allocation6 + $0x1800] sm:$0xff]
    %v858 = vld [vmem:[#allocation6 + $0x1808] sm:$0xff]
    %v859 = vld [vmem:[#allocation6 + $0x1810] sm:$0xff]
    %v860 = vld [vmem:[#allocation6 + $0x1818] sm:$0xff]
    %v861 = vld [vmem:[#allocation6 + $0x1820] sm:$0xff]
    %v862 = vld [vmem:[#allocation6 + $0x1828] sm:$0xff]
    %v863 = vld [vmem:[#allocation6 + $0x1830] sm:$0xff]
    %v864 = vld [vmem:[#allocation6 + $0x1838] sm:$0xff]
    %v865 = vld [vmem:[#allocation6 + $0x1840] sm:$0xff]
    %v866 = vld [vmem:[#allocation6 + $0x1848] sm:$0xff]
    %v867 = vld [vmem:[#allocation6 + $0x1850] sm:$0xff]
    %v868 = vld [vmem:[#allocation6 + $0x1858] sm:$0xff]
    %v869 = vld [vmem:[#allocation6 + $0x1860] sm:$0xff]
    %v870 = vld [vmem:[#allocation6 + $0x1868] sm:$0xff]
    %v871 = vld [vmem:[#allocation6 + $0x1870] sm:$0xff]
    %v872 = vld [vmem:[#allocation6 + $0x1878] sm:$0xff]
    %v873 = vld [vmem:[#allocation6 + $0x1880] sm:$0xff]
    %v874 = vld [vmem:[#allocation6 + $0x1888] sm:$0xff]
    %v875 = vld [vmem:[#allocation6 + $0x1890] sm:$0xff]
    %v876 = vld [vmem:[#allocation6 + $0x1898] sm:$0xff]
    %v877 = vld [vmem:[#allocation6 + $0x18a0] sm:$0xff]
    %v878 = vld [vmem:[#allocation6 + $0x18a8] sm:$0xff]
    %v879 = vld [vmem:[#allocation6 + $0x18b0] sm:$0xff]
    %v880 = vld [vmem:[#allocation6 + $0x18b8] sm:$0xff]
    %v881 = vld [vmem:[#allocation6 + $0x18c0] sm:$0xff]
    %v882 = vld [vmem:[#allocation6 + $0x18c8] sm:$0xff]
    %v883 = vld [vmem:[#allocation6 + $0x18d0] sm:$0xff]
    %v884 = vld [vmem:[#allocation6 + $0x18d8] sm:$0xff]
    %v885 = vld [vmem:[#allocation6 + $0x18e0] sm:$0xff]
    %v886 = vld [vmem:[#allocation6 + $0x18e8] sm:$0xff]
    %v887 = vld [vmem:[#allocation6 + $0x18f0] sm:$0xff]
    %v888 = vld [vmem:[#allocation6 + $0x18f8] sm:$0xff]
    %v889 = vld [vmem:[#allocation6 + $0x1900] sm:$0xff]
    %v890 = vld [vmem:[#allocation6 + $0x1908] sm:$0xff]
    %v891 = vld [vmem:[#allocation6 + $0x1910] sm:$0xff]
    %v892 = vld [vmem:[#allocation6 + $0x1918] sm:$0xff]
    %v893 = vld [vmem:[#allocation6 + $0x1920] sm:$0xff]
    %v894 = vld [vmem:[#allocation6 + $0x1928] sm:$0xff]
    %v895 = vld [vmem:[#allocation6 + $0x1930] sm:$0xff]
    %v896 = vld [vmem:[#allocation6 + $0x1938] sm:$0xff]
    %v897 = vld [vmem:[#allocation6 + $0x1940] sm:$0xff]
    %v898 = vld [vmem:[#allocation6 + $0x1948] sm:$0xff]
    %v899 = vld [vmem:[#allocation6 + $0x1950] sm:$0xff]
    %v900 = vld [vmem:[#allocation6 + $0x1958] sm:$0xff]
    %v901 = vld [vmem:[#allocation6 + $0x1960] sm:$0xff]
    %v902 = vld [vmem:[#allocation6 + $0x1968] sm:$0xff]
    %v903 = vld [vmem:[#allocation6 + $0x1970] sm:$0xff]
    %v904 = vld [vmem:[#allocation6 + $0x1978] sm:$0xff]
    %v905 = vld [vmem:[#allocation6 + $0x1980] sm:$0xff]
    %v906 = vld [vmem:[#allocation6 + $0x1988] sm:$0xff]
    %v907 = vld [vmem:[#allocation6 + $0x1990] sm:$0xff]
    %v908 = vld [vmem:[#allocation6 + $0x1998] sm:$0xff]
    %v909 = vld [vmem:[#allocation6 + $0x19a0] sm:$0xff]
    %v910 = vld [vmem:[#allocation6 + $0x19a8] sm:$0xff]
    %v911 = vld [vmem:[#allocation6 + $0x19b0] sm:$0xff]
    %v912 = vld [vmem:[#allocation6 + $0x19b8] sm:$0xff]
    %v913 = vld [vmem:[#allocation6 + $0x19c0] sm:$0xff]
    %v914 = vld [vmem:[#allocation6 + $0x19c8] sm:$0xff]
    %v915 = vld [vmem:[#allocation6 + $0x19d0] sm:$0xff]
    %v916 = vld [vmem:[#allocation6 + $0x19d8] sm:$0xff]
    %v917 = vld [vmem:[#allocation6 + $0x19e0] sm:$0xff]
    %v918 = vld [vmem:[#allocation6 + $0x19e8] sm:$0xff]
    %v919 = vld [vmem:[#allocation6 + $0x19f0] sm:$0xff]
    %v920 = vld [vmem:[#allocation6 + $0x19f8] sm:$0xff]
    %v921 = vld [vmem:[#allocation6 + $0x1a00] sm:$0xff]
    %v922 = vld [vmem:[#allocation6 + $0x1a08] sm:$0xff]
    %v923 = vld [vmem:[#allocation6 + $0x1a10] sm:$0xff]
    %v924 = vld [vmem:[#allocation6 + $0x1a18] sm:$0xff]
    %v925 = vld [vmem:[#allocation6 + $0x1a20] sm:$0xff]
    %v926 = vld [vmem:[#allocation6 + $0x1a28] sm:$0xff]
    %v927 = vld [vmem:[#allocation6 + $0x1a30] sm:$0xff]
    %v928 = vld [vmem:[#allocation6 + $0x1a38] sm:$0xff]
    %v929 = vld [vmem:[#allocation6 + $0x1a40] sm:$0xff]
    %v930 = vld [vmem:[#allocation6 + $0x1a48] sm:$0xff]
    %v931 = vld [vmem:[#allocation6 + $0x1a50] sm:$0xff]
    %v932 = vld [vmem:[#allocation6 + $0x1a58] sm:$0xff]
    %v933 = vld [vmem:[#allocation6 + $0x1a60] sm:$0xff]
    %v934 = vld [vmem:[#allocation6 + $0x1a68] sm:$0xff]
    %v935 = vld [vmem:[#allocation6 + $0x1a70] sm:$0xff]
    %v936 = vld [vmem:[#allocation6 + $0x1a78] sm:$0xff]
    %v937 = vld [vmem:[#allocation6 + $0x1a80] sm:$0xff]
    %v938 = vld [vmem:[#allocation6 + $0x1a88] sm:$0xff]
    %v939 = vld [vmem:[#allocation6 + $0x1a90] sm:$0xff]
    %v940 = vld [vmem:[#allocation6 + $0x1a98] sm:$0xff]
    %v941 = vld [vmem:[#allocation6 + $0x1aa0] sm:$0xff]
    %v942 = vld [vmem:[#allocation6 + $0x1aa8] sm:$0xff]
    %v943 = vld [vmem:[#allocation6 + $0x1ab0] sm:$0xff]
    %v944 = vld [vmem:[#allocation6 + $0x1ab8] sm:$0xff]
    %v945 = vld [vmem:[#allocation6 + $0x1ac0] sm:$0xff]
    %v946 = vld [vmem:[#allocation6 + $0x1ac8] sm:$0xff]
    %v947 = vld [vmem:[#allocation6 + $0x1ad0] sm:$0xff]
    %v948 = vld [vmem:[#allocation6 + $0x1ad8] sm:$0xff]
    %v949 = vld [vmem:[#allocation6 + $0x1ae0] sm:$0xff]
    %v950 = vld [vmem:[#allocation6 + $0x1ae8] sm:$0xff]
    %v951 = vld [vmem:[#allocation6 + $0x1af0] sm:$0xff]
    %v952 = vld [vmem:[#allocation6 + $0x1af8] sm:$0xff]
    %v953 = vld [vmem:[#allocation6 + $0x1b00] sm:$0xff]
    %v954 = vld [vmem:[#allocation6 + $0x1b08] sm:$0xff]
    %v955 = vld [vmem:[#allocation6 + $0x1b10] sm:$0xff]
    %v956 = vld [vmem:[#allocation6 + $0x1b18] sm:$0xff]
    %v957 = vld [vmem:[#allocation6 + $0x1b20] sm:$0xff]
    %v958 = vld [vmem:[#allocation6 + $0x1b28] sm:$0xff]
    %v959 = vld [vmem:[#allocation6 + $0x1b30] sm:$0xff]
    %v960 = vld [vmem:[#allocation6 + $0x1b38] sm:$0xff]
    %v961 = vld [vmem:[#allocation6 + $0x1b40] sm:$0xff]
    %v962 = vld [vmem:[#allocation6 + $0x1b48] sm:$0xff]
    %v963 = vld [vmem:[#allocation6 + $0x1b50] sm:$0xff]
    %v964 = vld [vmem:[#allocation6 + $0x1b58] sm:$0xff]
    %v965 = vld [vmem:[#allocation6 + $0x1b60] sm:$0xff]
    %v966 = vld [vmem:[#allocation6 + $0x1b68] sm:$0xff]
    %v967 = vld [vmem:[#allocation6 + $0x1b70] sm:$0xff]
    %v968 = vld [vmem:[#allocation6 + $0x1b78] sm:$0xff]
    %v969 = vld [vmem:[#allocation6 + $0x1b80] sm:$0xff]
    %v970 = vld [vmem:[#allocation6 + $0x1b88] sm:$0xff]
    %v971 = vld [vmem:[#allocation6 + $0x1b90] sm:$0xff]
    %v972 = vld [vmem:[#allocation6 + $0x1b98] sm:$0xff]
    %v973 = vld [vmem:[#allocation6 + $0x1ba0] sm:$0xff]
    %v974 = vld [vmem:[#allocation6 + $0x1ba8] sm:$0xff]
    %v975 = vld [vmem:[#allocation6 + $0x1bb0] sm:$0xff]
    %v976 = vld [vmem:[#allocation6 + $0x1bb8] sm:$0xff]
    %v977 = vld [vmem:[#allocation6 + $0x1bc0] sm:$0xff]
    %v978 = vld [vmem:[#allocation6 + $0x1bc8] sm:$0xff]
    %v979 = vld [vmem:[#allocation6 + $0x1bd0] sm:$0xff]
    %v980 = vld [vmem:[#allocation6 + $0x1bd8] sm:$0xff]
    %v981 = vld [vmem:[#allocation6 + $0x1be0] sm:$0xff]
    %v982 = vld [vmem:[#allocation6 + $0x1be8] sm:$0xff]
    %v983 = vld [vmem:[#allocation6 + $0x1bf0] sm:$0xff]
    %v984 = vld [vmem:[#allocation6 + $0x1bf8] sm:$0xff]
    %v985 = vld [vmem:[#allocation6 + $0x1c00] sm:$0xff]
    %v986 = vld [vmem:[#allocation6 + $0x1c08] sm:$0xff]
    %v987 = vld [vmem:[#allocation6 + $0x1c10] sm:$0xff]
    %v988 = vld [vmem:[#allocation6 + $0x1c18] sm:$0xff]
    %v989 = vld [vmem:[#allocation6 + $0x1c20] sm:$0xff]
    %v990 = vld [vmem:[#allocation6 + $0x1c28] sm:$0xff]
    %v991 = vld [vmem:[#allocation6 + $0x1c30] sm:$0xff]
    %v992 = vld [vmem:[#allocation6 + $0x1c38] sm:$0xff]
    %v993 = vld [vmem:[#allocation6 + $0x1c40] sm:$0xff]
    %v994 = vld [vmem:[#allocation6 + $0x1c48] sm:$0xff]
    %v995 = vld [vmem:[#allocation6 + $0x1c50] sm:$0xff]
    %v996 = vld [vmem:[#allocation6 + $0x1c58] sm:$0xff]
    %v997 = vld [vmem:[#allocation6 + $0x1c60] sm:$0xff]
    %v998 = vld [vmem:[#allocation6 + $0x1c68] sm:$0xff]
    %v999 = vld [vmem:[#allocation6 + $0x1c70] sm:$0xff]
    %v1000 = vld [vmem:[#allocation6 + $0x1c78] sm:$0xff]
    %v1001 = vld [vmem:[#allocation6 + $0x1c80] sm:$0xff]
    %v1002 = vld [vmem:[#allocation6 + $0x1c88] sm:$0xff]
    %v1003 = vld [vmem:[#allocation6 + $0x1c90] sm:$0xff]
    %v1004 = vld [vmem:[#allocation6 + $0x1c98] sm:$0xff]
    %v1005 = vld [vmem:[#allocation6 + $0x1ca0] sm:$0xff]
    %v1006 = vld [vmem:[#allocation6 + $0x1ca8] sm:$0xff]
    %v1007 = vld [vmem:[#allocation6 + $0x1cb0] sm:$0xff]
    %v1008 = vld [vmem:[#allocation6 + $0x1cb8] sm:$0xff]
    %v1009 = vld [vmem:[#allocation6 + $0x1cc0] sm:$0xff]
    %v1010 = vld [vmem:[#allocation6 + $0x1cc8] sm:$0xff]
    %v1011 = vld [vmem:[#allocation6 + $0x1cd0] sm:$0xff]
    %v1012 = vld [vmem:[#allocation6 + $0x1cd8] sm:$0xff]
    %v1013 = vld [vmem:[#allocation6 + $0x1ce0] sm:$0xff]
    %v1014 = vld [vmem:[#allocation6 + $0x1ce8] sm:$0xff]
    %v1015 = vld [vmem:[#allocation6 + $0x1cf0] sm:$0xff]
    %v1016 = vld [vmem:[#allocation6 + $0x1cf8] sm:$0xff]
    %v1017 = vld [vmem:[#allocation6 + $0x1d00] sm:$0xff]
    %v1018 = vld [vmem:[#allocation6 + $0x1d08] sm:$0xff]
    %v1019 = vld [vmem:[#allocation6 + $0x1d10] sm:$0xff]
    %v1020 = vld [vmem:[#allocation6 + $0x1d18] sm:$0xff]
    %v1021 = vld [vmem:[#allocation6 + $0x1d20] sm:$0xff]
    %v1022 = vld [vmem:[#allocation6 + $0x1d28] sm:$0xff]
    %v1023 = vld [vmem:[#allocation6 + $0x1d30] sm:$0xff]
    %v1024 = vld [vmem:[#allocation6 + $0x1d38] sm:$0xff]
    %v1025 = vld [vmem:[#allocation6 + $0x1d40] sm:$0xff]
    %v1026 = vld [vmem:[#allocation6 + $0x1d48] sm:$0xff]
    %v1027 = vld [vmem:[#allocation6 + $0x1d50] sm:$0xff]
    %v1028 = vld [vmem:[#allocation6 + $0x1d58] sm:$0xff]
    %v1029 = vld [vmem:[#allocation6 + $0x1d60] sm:$0xff]
    %v1030 = vld [vmem:[#allocation6 + $0x1d68] sm:$0xff]
    %v1031 = vld [vmem:[#allocation6 + $0x1d70] sm:$0xff]
    %v1032 = vld [vmem:[#allocation6 + $0x1d78] sm:$0xff]
    %v1033 = vld [vmem:[#allocation6 + $0x1d80] sm:$0xff]
    %v1034 = vld [vmem:[#allocation6 + $0x1d88] sm:$0xff]
    %v1035 = vld [vmem:[#allocation6 + $0x1d90] sm:$0xff]
    %v1036 = vld [vmem:[#allocation6 + $0x1d98] sm:$0xff]
    %v1037 = vld [vmem:[#allocation6 + $0x1da0] sm:$0xff]
    %v1038 = vld [vmem:[#allocation6 + $0x1da8] sm:$0xff]
    %v1039 = vld [vmem:[#allocation6 + $0x1db0] sm:$0xff]
    %v1040 = vld [vmem:[#allocation6 + $0x1db8] sm:$0xff]
    %v1041 = vld [vmem:[#allocation6 + $0x1dc0] sm:$0xff]
    %v1042 = vld [vmem:[#allocation6 + $0x1dc8] sm:$0xff]
    %v1043 = vld [vmem:[#allocation6 + $0x1dd0] sm:$0xff]
    %v1044 = vld [vmem:[#allocation6 + $0x1dd8] sm:$0xff]
    %v1045 = vld [vmem:[#allocation6 + $0x1de0] sm:$0xff]
    %v1046 = vld [vmem:[#allocation6 + $0x1de8] sm:$0xff]
    %v1047 = vld [vmem:[#allocation6 + $0x1df0] sm:$0xff]
    %v1048 = vld [vmem:[#allocation6 + $0x1df8] sm:$0xff]
    %v1049 = vld [vmem:[#allocation6 + $0x1e00] sm:$0xff]
    %v1050 = vld [vmem:[#allocation6 + $0x1e08] sm:$0xff]
    %v1051 = vld [vmem:[#allocation6 + $0x1e10] sm:$0xff]
    %v1052 = vld [vmem:[#allocation6 + $0x1e18] sm:$0xff]
    %v1053 = vld [vmem:[#allocation6 + $0x1e20] sm:$0xff]
    %v1054 = vld [vmem:[#allocation6 + $0x1e28] sm:$0xff]
    %v1055 = vld [vmem:[#allocation6 + $0x1e30] sm:$0xff]
    %v1056 = vld [vmem:[#allocation6 + $0x1e38] sm:$0xff]
    %v1057 = vld [vmem:[#allocation6 + $0x1e40] sm:$0xff]
    %v1058 = vld [vmem:[#allocation6 + $0x1e48] sm:$0xff]
    %v1059 = vld [vmem:[#allocation6 + $0x1e50] sm:$0xff]
    %v1060 = vld [vmem:[#allocation6 + $0x1e58] sm:$0xff]
    %v1061 = vld [vmem:[#allocation6 + $0x1e60] sm:$0xff]
    %v1062 = vld [vmem:[#allocation6 + $0x1e68] sm:$0xff]
    %v1063 = vld [vmem:[#allocation6 + $0x1e70] sm:$0xff]
    %v1064 = vld [vmem:[#allocation6 + $0x1e78] sm:$0xff]
    %v1065 = vld [vmem:[#allocation6 + $0x1e80] sm:$0xff]
    %v1066 = vld [vmem:[#allocation6 + $0x1e88] sm:$0xff]
    %v1067 = vld [vmem:[#allocation6 + $0x1e90] sm:$0xff]
    %v1068 = vld [vmem:[#allocation6 + $0x1e98] sm:$0xff]
    %v1069 = vld [vmem:[#allocation6 + $0x1ea0] sm:$0xff]
    %v1070 = vld [vmem:[#allocation6 + $0x1ea8] sm:$0xff]
    %v1071 = vld [vmem:[#allocation6 + $0x1eb0] sm:$0xff]
    %v1072 = vld [vmem:[#allocation6 + $0x1eb8] sm:$0xff]
    %v1073 = vld [vmem:[#allocation6 + $0x1ec0] sm:$0xff]
    %v1074 = vld [vmem:[#allocation6 + $0x1ec8] sm:$0xff]
    %v1075 = vld [vmem:[#allocation6 + $0x1ed0] sm:$0xff]
    %v1076 = vld [vmem:[#allocation6 + $0x1ed8] sm:$0xff]
    %v1077 = vld [vmem:[#allocation6 + $0x1ee0] sm:$0xff]
    %v1078 = vld [vmem:[#allocation6 + $0x1ee8] sm:$0xff]
    %v1079 = vld [vmem:[#allocation6 + $0x1ef0] sm:$0xff]
    %v1080 = vld [vmem:[#allocation6 + $0x1ef8] sm:$0xff]
    %v1081 = vld [vmem:[#allocation6 + $0x1f00] sm:$0xff]
    %v1082 = vld [vmem:[#allocation6 + $0x1f08] sm:$0xff]
    %v1083 = vld [vmem:[#allocation6 + $0x1f10] sm:$0xff]
    %v1084 = vld [vmem:[#allocation6 + $0x1f18] sm:$0xff]
    %v1085 = vld [vmem:[#allocation6 + $0x1f20] sm:$0xff]
    %v1086 = vld [vmem:[#allocation6 + $0x1f28] sm:$0xff]
    %v1087 = vld [vmem:[#allocation6 + $0x1f30] sm:$0xff]
    %v1088 = vld [vmem:[#allocation6 + $0x1f38] sm:$0xff]
    %v1089 = vld [vmem:[#allocation6 + $0x1f40] sm:$0xff]
    %v1090 = vld [vmem:[#allocation6 + $0x1f48] sm:$0xff]
    %v1091 = vld [vmem:[#allocation6 + $0x1f50] sm:$0xff]
    %v1092 = vld [vmem:[#allocation6 + $0x1f58] sm:$0xff]
    %v1093 = vld [vmem:[#allocation6 + $0x1f60] sm:$0xff]
    %v1094 = vld [vmem:[#allocation6 + $0x1f68] sm:$0xff]
    %v1095 = vld [vmem:[#allocation6 + $0x1f70] sm:$0xff]
    %v1096 = vld [vmem:[#allocation6 + $0x1f78] sm:$0xff]
    %v1097 = vld [vmem:[#allocation6 + $0x1f80] sm:$0xff]
    %v1098 = vld [vmem:[#allocation6 + $0x1f88] sm:$0xff]
    %v1099 = vld [vmem:[#allocation6 + $0x1f90] sm:$0xff]
    %v1100 = vld [vmem:[#allocation6 + $0x1f98] sm:$0xff]
    %v1101 = vld [vmem:[#allocation6 + $0x1fa0] sm:$0xff]
    %v1102 = vld [vmem:[#allocation6 + $0x1fa8] sm:$0xff]
    %v1103 = vld [vmem:[#allocation6 + $0x1fb0] sm:$0xff]
    %v1104 = vld [vmem:[#allocation6 + $0x1fb8] sm:$0xff]
    %v1105 = vld [vmem:[#allocation6 + $0x1fc0] sm:$0xff]
    %v1106 = vld [vmem:[#allocation6 + $0x1fc8] sm:$0xff]
    %v1107 = vld [vmem:[#allocation6 + $0x1fd0] sm:$0xff]
    %v1108 = vld [vmem:[#allocation6 + $0x1fd8] sm:$0xff]
    %v1109 = vld [vmem:[#allocation6 + $0x1fe0] sm:$0xff]
    %v1110 = vld [vmem:[#allocation6 + $0x1fe8] sm:$0xff]
    %v1111 = vld [vmem:[#allocation6 + $0x1ff0] sm:$0xff]
    %v1112 = vld [vmem:[#allocation6 + $0x1ff8] sm:$0xff]
    %v1113 = vld [vmem:[#allocation6 + $0x2000] sm:$0xff]
    %v1114 = vld [vmem:[#allocation6 + $0x2008] sm:$0xff]
    %v1115 = vld [vmem:[#allocation6 + $0x2010] sm:$0xff]
    %v1116 = vld [vmem:[#allocation6 + $0x2018] sm:$0xff]
    %v1117 = vld [vmem:[#allocation6 + $0x2020] sm:$0xff]
    %v1118 = vld [vmem:[#allocation6 + $0x2028] sm:$0xff]
    %v1119 = vld [vmem:[#allocation6 + $0x2030] sm:$0xff]
    %v1120 = vld [vmem:[#allocation6 + $0x2038] sm:$0xff]
    %v1121 = vld [vmem:[#allocation6 + $0x2040] sm:$0xff]
    %v1122 = vld [vmem:[#allocation6 + $0x2048] sm:$0xff]
    %v1123 = vld [vmem:[#allocation6 + $0x2050] sm:$0xff]
    %v1124 = vld [vmem:[#allocation6 + $0x2058] sm:$0xff]
    %v1125 = vld [vmem:[#allocation6 + $0x2060] sm:$0xff]
    %v1126 = vld [vmem:[#allocation6 + $0x2068] sm:$0xff]
    %v1127 = vld [vmem:[#allocation6 + $0x2070] sm:$0xff]
    %v1128 = vld [vmem:[#allocation6 + $0x2078] sm:$0xff]
    %v1129 = vld [vmem:[#allocation6 + $0x2080] sm:$0xff]
    %v1130 = vld [vmem:[#allocation6 + $0x2088] sm:$0xff]
    %v1131 = vld [vmem:[#allocation6 + $0x2090] sm:$0xff]
    %v1132 = vld [vmem:[#allocation6 + $0x2098] sm:$0xff]
    %v1133 = vld [vmem:[#allocation6 + $0x20a0] sm:$0xff]
    %v1134 = vld [vmem:[#allocation6 + $0x20a8] sm:$0xff]
    %v1135 = vld [vmem:[#allocation6 + $0x20b0] sm:$0xff]
    %v1136 = vld [vmem:[#allocation6 + $0x20b8] sm:$0xff]
    %v1137 = vld [vmem:[#allocation6 + $0x20c0] sm:$0xff]
    %v1138 = vld [vmem:[#allocation6 + $0x20c8] sm:$0xff]
    %v1139 = vld [vmem:[#allocation6 + $0x20d0] sm:$0xff]
    %v1140 = vld [vmem:[#allocation6 + $0x20d8] sm:$0xff]
    %v1141 = vld [vmem:[#allocation6 + $0x20e0] sm:$0xff]
    %v1142 = vld [vmem:[#allocation6 + $0x20e8] sm:$0xff]
    %v1143 = vld [vmem:[#allocation6 + $0x20f0] sm:$0xff]
    %v1144 = vld [vmem:[#allocation6 + $0x20f8] sm:$0xff]
    %v1145 = vld [vmem:[#allocation6 + $0x2100] sm:$0xff]
    %v1146 = vld [vmem:[#allocation6 + $0x2108] sm:$0xff]
    %v1147 = vld [vmem:[#allocation6 + $0x2110] sm:$0xff]
    %v1148 = vld [vmem:[#allocation6 + $0x2118] sm:$0xff]
    %v1149 = vld [vmem:[#allocation6 + $0x2120] sm:$0xff]
    %v1150 = vld [vmem:[#allocation6 + $0x2128] sm:$0xff]
    %v1151 = vld [vmem:[#allocation6 + $0x2130] sm:$0xff]
    %v1152 = vld [vmem:[#allocation6 + $0x2138] sm:$0xff]
    %v1153 = vld [vmem:[#allocation6 + $0x2140] sm:$0xff]
    %v1154 = vld [vmem:[#allocation6 + $0x2148] sm:$0xff]
    %v1155 = vld [vmem:[#allocation6 + $0x2150] sm:$0xff]
    %v1156 = vld [vmem:[#allocation6 + $0x2158] sm:$0xff]
    %v1157 = vld [vmem:[#allocation6 + $0x2160] sm:$0xff]
    %v1158 = vld [vmem:[#allocation6 + $0x2168] sm:$0xff]
    %v1159 = vld [vmem:[#allocation6 + $0x2170] sm:$0xff]
    %v1160 = vld [vmem:[#allocation6 + $0x2178] sm:$0xff]
    %v1161 = vld [vmem:[#allocation6 + $0x2180] sm:$0xff]
    %v1162 = vld [vmem:[#allocation6 + $0x2188] sm:$0xff]
    %v1163 = vld [vmem:[#allocation6 + $0x2190] sm:$0xff]
    %v1164 = vld [vmem:[#allocation6 + $0x2198] sm:$0xff]
    %v1165 = vld [vmem:[#allocation6 + $0x21a0] sm:$0xff]
    %v1166 = vld [vmem:[#allocation6 + $0x21a8] sm:$0xff]
    %v1167 = vld [vmem:[#allocation6 + $0x21b0] sm:$0xff]
    %v1168 = vld [vmem:[#allocation6 + $0x21b8] sm:$0xff]
    %v1169 = vld [vmem:[#allocation6 + $0x21c0] sm:$0xff]
    %v1170 = vld [vmem:[#allocation6 + $0x21c8] sm:$0xff]
    %v1171 = vld [vmem:[#allocation6 + $0x21d0] sm:$0xff]
    %v1172 = vld [vmem:[#allocation6 + $0x21d8] sm:$0xff]
    %v1173 = vld [vmem:[#allocation6 + $0x21e0] sm:$0xff]
    %v1174 = vld [vmem:[#allocation6 + $0x21e8] sm:$0xff]
    %v1175 = vld [vmem:[#allocation6 + $0x21f0] sm:$0xff]
    %v1176 = vld [vmem:[#allocation6 + $0x21f8] sm:$0xff]
    %v1177 = vld [vmem:[#allocation6 + $0x2200] sm:$0xff]
    %v1178 = vld [vmem:[#allocation6 + $0x2208] sm:$0xff]
    %v1179 = vld [vmem:[#allocation6 + $0x2210] sm:$0xff]
    %v1180 = vld [vmem:[#allocation6 + $0x2218] sm:$0xff]
    %v1181 = vld [vmem:[#allocation6 + $0x2220] sm:$0xff]
    %v1182 = vld [vmem:[#allocation6 + $0x2228] sm:$0xff]
    %v1183 = vld [vmem:[#allocation6 + $0x2230] sm:$0xff]
    %v1184 = vld [vmem:[#allocation6 + $0x2238] sm:$0xff]
    %v1185 = vld [vmem:[#allocation6 + $0x2240] sm:$0xff]
    %v1186 = vld [vmem:[#allocation6 + $0x2248] sm:$0xff]
    %v1187 = vld [vmem:[#allocation6 + $0x2250] sm:$0xff]
    %v1188 = vld [vmem:[#allocation6 + $0x2258] sm:$0xff]
    %v1189 = vld [vmem:[#allocation6 + $0x2260] sm:$0xff]
    %v1190 = vld [vmem:[#allocation6 + $0x2268] sm:$0xff]
    %v1191 = vld [vmem:[#allocation6 + $0x2270] sm:$0xff]
    %v1192 = vld [vmem:[#allocation6 + $0x2278] sm:$0xff]
    %v1193 = vld [vmem:[#allocation6 + $0x2280] sm:$0xff]
    %v1194 = vld [vmem:[#allocation6 + $0x2288] sm:$0xff]
    %v1195 = vld [vmem:[#allocation6 + $0x2290] sm:$0xff]
    %v1196 = vld [vmem:[#allocation6 + $0x2298] sm:$0xff]
    %v1197 = vld [vmem:[#allocation6 + $0x22a0] sm:$0xff]
    %v1198 = vld [vmem:[#allocation6 + $0x22a8] sm:$0xff]
    %v1199 = vld [vmem:[#allocation6 + $0x22b0] sm:$0xff]
    %v1200 = vld [vmem:[#allocation6 + $0x22b8] sm:$0xff]
    %v1201 = vld [vmem:[#allocation6 + $0x22c0] sm:$0xff]
    %v1202 = vld [vmem:[#allocation6 + $0x22c8] sm:$0xff]
    %v1203 = vld [vmem:[#allocation6 + $0x22d0] sm:$0xff]
    %v1204 = vld [vmem:[#allocation6 + $0x22d8] sm:$0xff]
    %v1205 = vld [vmem:[#allocation6 + $0x22e0] sm:$0xff]
    %v1206 = vld [vmem:[#allocation6 + $0x22e8] sm:$0xff]
    %v1207 = vld [vmem:[#allocation6 + $0x22f0] sm:$0xff]
    %v1208 = vld [vmem:[#allocation6 + $0x22f8] sm:$0xff]
    %v1209 = vld [vmem:[#allocation6 + $0x2300] sm:$0xff]
    %v1210 = vld [vmem:[#allocation6 + $0x2308] sm:$0xff]
    %v1211 = vld [vmem:[#allocation6 + $0x2310] sm:$0xff]
    %v1212 = vld [vmem:[#allocation6 + $0x2318] sm:$0xff]
    %v1213 = vld [vmem:[#allocation6 + $0x2320] sm:$0xff]
    %v1214 = vld [vmem:[#allocation6 + $0x2328] sm:$0xff]
    %v1215 = vld [vmem:[#allocation6 + $0x2330] sm:$0xff]
    %v1216 = vld [vmem:[#allocation6 + $0x2338] sm:$0xff]
    %v1217 = vld [vmem:[#allocation6 + $0x2340] sm:$0xff]
    %v1218 = vld [vmem:[#allocation6 + $0x2348] sm:$0xff]
    %v1219 = vld [vmem:[#allocation6 + $0x2350] sm:$0xff]
    %v1220 = vld [vmem:[#allocation6 + $0x2358] sm:$0xff]
    %v1221 = vld [vmem:[#allocation6 + $0x2360] sm:$0xff]
    %v1222 = vld [vmem:[#allocation6 + $0x2368] sm:$0xff]
    %v1223 = vld [vmem:[#allocation6 + $0x2370] sm:$0xff]
    %v1224 = vld [vmem:[#allocation6 + $0x2378] sm:$0xff]
    %v1225 = vld [vmem:[#allocation6 + $0x2380] sm:$0xff]
    %v1226 = vld [vmem:[#allocation6 + $0x2388] sm:$0xff]
    %v1227 = vld [vmem:[#allocation6 + $0x2390] sm:$0xff]
    %v1228 = vld [vmem:[#allocation6 + $0x2398] sm:$0xff]
    %v1229 = vld [vmem:[#allocation6 + $0x23a0] sm:$0xff]
    %v1230 = vld [vmem:[#allocation6 + $0x23a8] sm:$0xff]
    %v1231 = vld [vmem:[#allocation6 + $0x23b0] sm:$0xff]
    %v1232 = vld [vmem:[#allocation6 + $0x23b8] sm:$0xff]
    %v1233 = vld [vmem:[#allocation6 + $0x23c0] sm:$0xff]
    %v1234 = vld [vmem:[#allocation6 + $0x23c8] sm:$0xff]
    %v1235 = vld [vmem:[#allocation6 + $0x23d0] sm:$0xff]
    %v1236 = vld [vmem:[#allocation6 + $0x23d8] sm:$0xff]
    %v1237 = vld [vmem:[#allocation6 + $0x23e0] sm:$0xff]
    %v1238 = vld [vmem:[#allocation6 + $0x23e8] sm:$0xff]
    %v1239 = vld [vmem:[#allocation6 + $0x23f0] sm:$0xff]
    %v1240 = vld [vmem:[#allocation6 + $0x23f8] sm:$0xff]
    %v1241 = vld [vmem:[#allocation6 + $0x2400] sm:$0xff]
    %v1242 = vld [vmem:[#allocation6 + $0x2408] sm:$0xff]
    %v1243 = vld [vmem:[#allocation6 + $0x2410] sm:$0xff]
    %v1244 = vld [vmem:[#allocation6 + $0x2418] sm:$0xff]
    %v1245 = vld [vmem:[#allocation6 + $0x2420] sm:$0xff]
    %v1246 = vld [vmem:[#allocation6 + $0x2428] sm:$0xff]
    %v1247 = vld [vmem:[#allocation6 + $0x2430] sm:$0xff]
    %v1248 = vld [vmem:[#allocation6 + $0x2438] sm:$0xff]
    %v1249 = vld [vmem:[#allocation6 + $0x2440] sm:$0xff]
    %v1250 = vld [vmem:[#allocation6 + $0x2448] sm:$0xff]
    %v1251 = vld [vmem:[#allocation6 + $0x2450] sm:$0xff]
    %v1252 = vld [vmem:[#allocation6 + $0x2458] sm:$0xff]
    %v1253 = vld [vmem:[#allocation6 + $0x2460] sm:$0xff]
    %v1254 = vld [vmem:[#allocation6 + $0x2468] sm:$0xff]
    %v1255 = vld [vmem:[#allocation6 + $0x2470] sm:$0xff]
    %v1256 = vld [vmem:[#allocation6 + $0x2478] sm:$0xff]
    %v1257 = vld [vmem:[#allocation6 + $0x2480] sm:$0xff]
    %v1258 = vld [vmem:[#allocation6 + $0x2488] sm:$0xff]
    %v1259 = vld [vmem:[#allocation6 + $0x2490] sm:$0xff]
    %v1260 = vld [vmem:[#allocation6 + $0x2498] sm:$0xff]
    %v1261 = vld [vmem:[#allocation6 + $0x24a0] sm:$0xff]
    %v1262 = vld [vmem:[#allocation6 + $0x24a8] sm:$0xff]
    %v1263 = vld [vmem:[#allocation6 + $0x24b0] sm:$0xff]
    %v1264 = vld [vmem:[#allocation6 + $0x24b8] sm:$0xff]
    %v1265 = vld [vmem:[#allocation6 + $0x24c0] sm:$0xff]
    %v1266 = vld [vmem:[#allocation6 + $0x24c8] sm:$0xff]
    %v1267 = vld [vmem:[#allocation6 + $0x24d0] sm:$0xff]
    %v1268 = vld [vmem:[#allocation6 + $0x24d8] sm:$0xff]
    %v1269 = vld [vmem:[#allocation6 + $0x24e0] sm:$0xff]
    %v1270 = vld [vmem:[#allocation6 + $0x24e8] sm:$0xff]
    %v1271 = vld [vmem:[#allocation6 + $0x24f0] sm:$0xff]
    %v1272 = vld [vmem:[#allocation6 + $0x24f8] sm:$0xff]
    %v1273 = vld [vmem:[#allocation6 + $0x2500] sm:$0xff]
    %v1274 = vld [vmem:[#allocation6 + $0x2508] sm:$0xff]
    %v1275 = vld [vmem:[#allocation6 + $0x2510] sm:$0xff]
    %v1276 = vld [vmem:[#allocation6 + $0x2518] sm:$0xff]
    %v1277 = vld [vmem:[#allocation6 + $0x2520] sm:$0xff]
    %v1278 = vld [vmem:[#allocation6 + $0x2528] sm:$0xff]
    %v1279 = vld [vmem:[#allocation6 + $0x2530] sm:$0xff]
    %v1280 = vld [vmem:[#allocation6 + $0x2538] sm:$0xff]
    %v1281 = vld [vmem:[#allocation6 + $0x2540] sm:$0xff]
    %v1282 = vld [vmem:[#allocation6 + $0x2548] sm:$0xff]
    %v1283 = vld [vmem:[#allocation6 + $0x2550] sm:$0xff]
    %v1284 = vld [vmem:[#allocation6 + $0x2558] sm:$0xff]
    %v1285 = vld [vmem:[#allocation6 + $0x2560] sm:$0xff]
    %v1286 = vld [vmem:[#allocation6 + $0x2568] sm:$0xff]
    %v1287 = vld [vmem:[#allocation6 + $0x2570] sm:$0xff]
    %v1288 = vld [vmem:[#allocation6 + $0x2578] sm:$0xff]
    %v1289 = vld [vmem:[#allocation6 + $0x2580] sm:$0xff]
    %v1290 = vld [vmem:[#allocation6 + $0x2588] sm:$0xff]
    %v1291 = vld [vmem:[#allocation6 + $0x2590] sm:$0xff]
    %v1292 = vld [vmem:[#allocation6 + $0x2598] sm:$0xff]
    %v1293 = vld [vmem:[#allocation6 + $0x25a0] sm:$0xff]
    %v1294 = vld [vmem:[#allocation6 + $0x25a8] sm:$0xff]
    %v1295 = vld [vmem:[#allocation6 + $0x25b0] sm:$0xff]
    %v1296 = vld [vmem:[#allocation6 + $0x25b8] sm:$0xff]
    %v1297 = vld [vmem:[#allocation6 + $0x25c0] sm:$0xff]
    %v1298 = vld [vmem:[#allocation6 + $0x25c8] sm:$0xff]
    %v1299 = vld [vmem:[#allocation6 + $0x25d0] sm:$0xff]
    %v1300 = vld [vmem:[#allocation6 + $0x25d8] sm:$0xff]
    %v1301 = vld [vmem:[#allocation6 + $0x25e0] sm:$0xff]
    %v1302 = vld [vmem:[#allocation6 + $0x25e8] sm:$0xff]
    %v1303 = vld [vmem:[#allocation6 + $0x25f0] sm:$0xff]
    %v1304 = vld [vmem:[#allocation6 + $0x25f8] sm:$0xff]
    %v1305 = vld [vmem:[#allocation6 + $0x2600] sm:$0xff]
    %v1306 = vld [vmem:[#allocation6 + $0x2608] sm:$0xff]
    %v1307 = vld [vmem:[#allocation6 + $0x2610] sm:$0xff]
    %v1308 = vld [vmem:[#allocation6 + $0x2618] sm:$0xff]
    %v1309 = vld [vmem:[#allocation6 + $0x2620] sm:$0xff]
    %v1310 = vld [vmem:[#allocation6 + $0x2628] sm:$0xff]
    %v1311 = vld [vmem:[#allocation6 + $0x2630] sm:$0xff]
    %v1312 = vld [vmem:[#allocation6 + $0x2638] sm:$0xff]
    %v1313 = vld [vmem:[#allocation6 + $0x2640] sm:$0xff]
    %v1314 = vld [vmem:[#allocation6 + $0x2648] sm:$0xff]
    %v1315 = vld [vmem:[#allocation6 + $0x2650] sm:$0xff]
    %v1316 = vld [vmem:[#allocation6 + $0x2658] sm:$0xff]
    %v1317 = vld [vmem:[#allocation6 + $0x2660] sm:$0xff]
    %v1318 = vld [vmem:[#allocation6 + $0x2668] sm:$0xff]
    %v1319 = vld [vmem:[#allocation6 + $0x2670] sm:$0xff]
    %v1320 = vld [vmem:[#allocation6 + $0x2678] sm:$0xff]
    %v1321 = vld [vmem:[#allocation6 + $0x2680] sm:$0xff]
    %v1322 = vld [vmem:[#allocation6 + $0x2688] sm:$0xff]
    %v1323 = vld [vmem:[#allocation6 + $0x2690] sm:$0xff]
    %v1324 = vld [vmem:[#allocation6 + $0x2698] sm:$0xff]
    %v1325 = vld [vmem:[#allocation6 + $0x26a0] sm:$0xff]
    %v1326 = vld [vmem:[#allocation6 + $0x26a8] sm:$0xff]
    %v1327 = vld [vmem:[#allocation6 + $0x26b0] sm:$0xff]
    %v1328 = vld [vmem:[#allocation6 + $0x26b8] sm:$0xff]
    %v1329 = vld [vmem:[#allocation6 + $0x26c0] sm:$0xff]
    %v1330 = vld [vmem:[#allocation6 + $0x26c8] sm:$0xff]
    %v1331 = vld [vmem:[#allocation6 + $0x26d0] sm:$0xff]
    %v1332 = vld [vmem:[#allocation6 + $0x26d8] sm:$0xff]
    %v1333 = vld [vmem:[#allocation6 + $0x26e0] sm:$0xff]
    %v1334 = vld [vmem:[#allocation6 + $0x26e8] sm:$0xff]
    %v1335 = vld [vmem:[#allocation6 + $0x26f0] sm:$0xff]
    %v1336 = vld [vmem:[#allocation6 + $0x26f8] sm:$0xff]
    %v1337 = vld [vmem:[#allocation6 + $0x2700] sm:$0xff]
    %v1338 = vld [vmem:[#allocation6 + $0x2708] sm:$0xff]
    %v1339 = vld [vmem:[#allocation6 + $0x2710] sm:$0xff]
    %v1340 = vld [vmem:[#allocation6 + $0x2718] sm:$0xff]
    %v1341 = vld [vmem:[#allocation6 + $0x2720] sm:$0xff]
    %v1342 = vld [vmem:[#allocation6 + $0x2728] sm:$0xff]
    %v1343 = vld [vmem:[#allocation6 + $0x2730] sm:$0xff]
    %v1344 = vld [vmem:[#allocation6 + $0x2738] sm:$0xff]
    %v1345 = vld [vmem:[#allocation6 + $0x2740] sm:$0xff]
    %v1346 = vld [vmem:[#allocation6 + $0x2748] sm:$0xff]
    %v1347 = vld [vmem:[#allocation6 + $0x2750] sm:$0xff]
    %v1348 = vld [vmem:[#allocation6 + $0x2758] sm:$0xff]
    %v1349 = vld [vmem:[#allocation6 + $0x2760] sm:$0xff]
    %v1350 = vld [vmem:[#allocation6 + $0x2768] sm:$0xff]
    %v1351 = vld [vmem:[#allocation6 + $0x2770] sm:$0xff]
    %v1352 = vld [vmem:[#allocation6 + $0x2778] sm:$0xff]
    %v1353 = vld [vmem:[#allocation6 + $0x2780] sm:$0xff]
    %v1354 = vld [vmem:[#allocation6 + $0x2788] sm:$0xff]
    %v1355 = vld [vmem:[#allocation6 + $0x2790] sm:$0xff]
    %v1356 = vld [vmem:[#allocation6 + $0x2798] sm:$0xff]
    %v1357 = vld [vmem:[#allocation6 + $0x27a0] sm:$0xff]
    %v1358 = vld [vmem:[#allocation6 + $0x27a8] sm:$0xff]
    %v1359 = vld [vmem:[#allocation6 + $0x27b0] sm:$0xff]
    %v1360 = vld [vmem:[#allocation6 + $0x27b8] sm:$0xff]
    %v1361 = vld [vmem:[#allocation6 + $0x27c0] sm:$0xff]
    %v1362 = vld [vmem:[#allocation6 + $0x27c8] sm:$0xff]
    %v1363 = vld [vmem:[#allocation6 + $0x27d0] sm:$0xff]
    %v1364 = vld [vmem:[#allocation6 + $0x27d8] sm:$0xff]
    %v1365 = vld [vmem:[#allocation6 + $0x27e0] sm:$0xff]
    %v1366 = vld [vmem:[#allocation6 + $0x27e8] sm:$0xff]
    %v1367 = vld [vmem:[#allocation6 + $0x27f0] sm:$0xff]
    %v1368 = vld [vmem:[#allocation6 + $0x27f8] sm:$0xff]
    %v1369 = vld [vmem:[#allocation6 + $0x2800] sm:$0xff]
    %v1370 = vld [vmem:[#allocation6 + $0x2808] sm:$0xff]
    %v1371 = vld [vmem:[#allocation6 + $0x2810] sm:$0xff]
    %v1372 = vld [vmem:[#allocation6 + $0x2818] sm:$0xff]
    %v1373 = vld [vmem:[#allocation6 + $0x2820] sm:$0xff]
    %v1374 = vld [vmem:[#allocation6 + $0x2828] sm:$0xff]
    %v1375 = vld [vmem:[#allocation6 + $0x2830] sm:$0xff]
    %v1376 = vld [vmem:[#allocation6 + $0x2838] sm:$0xff]
    %v1377 = vld [vmem:[#allocation6 + $0x2840] sm:$0xff]
    %v1378 = vld [vmem:[#allocation6 + $0x2848] sm:$0xff]
    %v1379 = vld [vmem:[#allocation6 + $0x2850] sm:$0xff]
    %v1380 = vld [vmem:[#allocation6 + $0x2858] sm:$0xff]
    %v1381 = vld [vmem:[#allocation6 + $0x2860] sm:$0xff]
    %v1382 = vld [vmem:[#allocation6 + $0x2868] sm:$0xff]
    %v1383 = vld [vmem:[#allocation6 + $0x2870] sm:$0xff]
    %v1384 = vld [vmem:[#allocation6 + $0x2878] sm:$0xff]
    %v1385 = vld [vmem:[#allocation6 + $0x2880] sm:$0xff]
    %v1386 = vld [vmem:[#allocation6 + $0x2888] sm:$0xff]
    %v1387 = vld [vmem:[#allocation6 + $0x2890] sm:$0xff]
    %v1388 = vld [vmem:[#allocation6 + $0x2898] sm:$0xff]
    %v1389 = vld [vmem:[#allocation6 + $0x28a0] sm:$0xff]
    %v1390 = vld [vmem:[#allocation6 + $0x28a8] sm:$0xff]
    %v1391 = vld [vmem:[#allocation6 + $0x28b0] sm:$0xff]
    %v1392 = vld [vmem:[#allocation6 + $0x28b8] sm:$0xff]
    %v1393 = vld [vmem:[#allocation6 + $0x28c0] sm:$0xff]
    %v1394 = vld [vmem:[#allocation6 + $0x28c8] sm:$0xff]
    %v1395 = vld [vmem:[#allocation6 + $0x28d0] sm:$0xff]
    %v1396 = vld [vmem:[#allocation6 + $0x28d8] sm:$0xff]
    %v1397 = vld [vmem:[#allocation6 + $0x28e0] sm:$0xff]
    %v1398 = vld [vmem:[#allocation6 + $0x28e8] sm:$0xff]
    %v1399 = vld [vmem:[#allocation6 + $0x28f0] sm:$0xff]
    %v1400 = vld [vmem:[#allocation6 + $0x28f8] sm:$0xff]
    %v1401 = vld [vmem:[#allocation6 + $0x2900] sm:$0xff]
    %v1402 = vld [vmem:[#allocation6 + $0x2908] sm:$0xff]
    %v1403 = vld [vmem:[#allocation6 + $0x2910] sm:$0xff]
    %v1404 = vld [vmem:[#allocation6 + $0x2918] sm:$0xff]
    %v1405 = vld [vmem:[#allocation6 + $0x2920] sm:$0xff]
    %v1406 = vld [vmem:[#allocation6 + $0x2928] sm:$0xff]
    %v1407 = vld [vmem:[#allocation6 + $0x2930] sm:$0xff]
    %v1408 = vld [vmem:[#allocation6 + $0x2938] sm:$0xff]
    %v1409 = vld [vmem:[#allocation6 + $0x2940] sm:$0xff]
    %v1410 = vld [vmem:[#allocation6 + $0x2948] sm:$0xff]
    %v1411 = vld [vmem:[#allocation6 + $0x2950] sm:$0xff]
    %v1412 = vld [vmem:[#allocation6 + $0x2958] sm:$0xff]
    %v1413 = vld [vmem:[#allocation6 + $0x2960] sm:$0xff]
    %v1414 = vld [vmem:[#allocation6 + $0x2968] sm:$0xff]
    %v1415 = vld [vmem:[#allocation6 + $0x2970] sm:$0xff]
    %v1416 = vld [vmem:[#allocation6 + $0x2978] sm:$0xff]
    %v1417 = vld [vmem:[#allocation6 + $0x2980] sm:$0xff]
    %v1418 = vld [vmem:[#allocation6 + $0x2988] sm:$0xff]
    %v1419 = vld [vmem:[#allocation6 + $0x2990] sm:$0xff]
    %v1420 = vld [vmem:[#allocation6 + $0x2998] sm:$0xff]
    %v1421 = vld [vmem:[#allocation6 + $0x29a0] sm:$0xff]
    %v1422 = vld [vmem:[#allocation6 + $0x29a8] sm:$0xff]
    %v1423 = vld [vmem:[#allocation6 + $0x29b0] sm:$0xff]
    %v1424 = vld [vmem:[#allocation6 + $0x29b8] sm:$0xff]
    %v1425 = vld [vmem:[#allocation6 + $0x29c0] sm:$0xff]
    %v1426 = vld [vmem:[#allocation6 + $0x29c8] sm:$0xff]
    %v1427 = vld [vmem:[#allocation6 + $0x29d0] sm:$0xff]
    %v1428 = vld [vmem:[#allocation6 + $0x29d8] sm:$0xff]
    %v1429 = vld [vmem:[#allocation6 + $0x29e0] sm:$0xff]
    %v1430 = vld [vmem:[#allocation6 + $0x29e8] sm:$0xff]
    %v1431 = vld [vmem:[#allocation6 + $0x29f0] sm:$0xff]
    %v1432 = vld [vmem:[#allocation6 + $0x29f8] sm:$0xff]
    %v1433 = vld [vmem:[#allocation6 + $0x2a00] sm:$0xff]
    %v1434 = vld [vmem:[#allocation6 + $0x2a08] sm:$0xff]
    %v1435 = vld [vmem:[#allocation6 + $0x2a10] sm:$0xff]
    %v1436 = vld [vmem:[#allocation6 + $0x2a18] sm:$0xff]
    %v1437 = vld [vmem:[#allocation6 + $0x2a20] sm:$0xff]
    %v1438 = vld [vmem:[#allocation6 + $0x2a28] sm:$0xff]
    %v1439 = vld [vmem:[#allocation6 + $0x2a30] sm:$0xff]
    %v1440 = vld [vmem:[#allocation6 + $0x2a38] sm:$0xff]
    %v1441 = vld [vmem:[#allocation6 + $0x2a40] sm:$0xff]
    %v1442 = vld [vmem:[#allocation6 + $0x2a48] sm:$0xff]
    %v1443 = vld [vmem:[#allocation6 + $0x2a50] sm:$0xff]
    %v1444 = vld [vmem:[#allocation6 + $0x2a58] sm:$0xff]
    %v1445 = vld [vmem:[#allocation6 + $0x2a60] sm:$0xff]
    %v1446 = vld [vmem:[#allocation6 + $0x2a68] sm:$0xff]
    %v1447 = vld [vmem:[#allocation6 + $0x2a70] sm:$0xff]
    %v1448 = vld [vmem:[#allocation6 + $0x2a78] sm:$0xff]
    %v1449 = vld [vmem:[#allocation6 + $0x2a80] sm:$0xff]
    %v1450 = vld [vmem:[#allocation6 + $0x2a88] sm:$0xff]
    %v1451 = vld [vmem:[#allocation6 + $0x2a90] sm:$0xff]
    %v1452 = vld [vmem:[#allocation6 + $0x2a98] sm:$0xff]
    %v1453 = vld [vmem:[#allocation6 + $0x2aa0] sm:$0xff]
    %v1454 = vld [vmem:[#allocation6 + $0x2aa8] sm:$0xff]
    %v1455 = vld [vmem:[#allocation6 + $0x2ab0] sm:$0xff]
    %v1456 = vld [vmem:[#allocation6 + $0x2ab8] sm:$0xff]
    %v1457 = vld [vmem:[#allocation6 + $0x2ac0] sm:$0xff]
    %v1458 = vld [vmem:[#allocation6 + $0x2ac8] sm:$0xff]
    %v1459 = vld [vmem:[#allocation6 + $0x2ad0] sm:$0xff]
    %v1460 = vld [vmem:[#allocation6 + $0x2ad8] sm:$0xff]
    %v1461 = vld [vmem:[#allocation6 + $0x2ae0] sm:$0xff]
    %v1462 = vld [vmem:[#allocation6 + $0x2ae8] sm:$0xff]
    %v1463 = vld [vmem:[#allocation6 + $0x2af0] sm:$0xff]
    %v1464 = vld [vmem:[#allocation6 + $0x2af8] sm:$0xff]
    %v1465 = vld [vmem:[#allocation6 + $0x2b00] sm:$0xff]
    %v1466 = vld [vmem:[#allocation6 + $0x2b08] sm:$0xff]
    %v1467 = vld [vmem:[#allocation6 + $0x2b10] sm:$0xff]
    %v1468 = vld [vmem:[#allocation6 + $0x2b18] sm:$0xff]
    %v1469 = vld [vmem:[#allocation6 + $0x2b20] sm:$0xff]
    %v1470 = vld [vmem:[#allocation6 + $0x2b28] sm:$0xff]
    %v1471 = vld [vmem:[#allocation6 + $0x2b30] sm:$0xff]
    %v1472 = vld [vmem:[#allocation6 + $0x2b38] sm:$0xff]
    %v1473 = vld [vmem:[#allocation6 + $0x2b40] sm:$0xff]
    %v1474 = vld [vmem:[#allocation6 + $0x2b48] sm:$0xff]
    %v1475 = vld [vmem:[#allocation6 + $0x2b50] sm:$0xff]
    %v1476 = vld [vmem:[#allocation6 + $0x2b58] sm:$0xff]
    %v1477 = vld [vmem:[#allocation6 + $0x2b60] sm:$0xff]
    %v1478 = vld [vmem:[#allocation6 + $0x2b68] sm:$0xff]
    %v1479 = vld [vmem:[#allocation6 + $0x2b70] sm:$0xff]
    %v1480 = vld [vmem:[#allocation6 + $0x2b78] sm:$0xff]
    %v1481 = vld [vmem:[#allocation6 + $0x2b80] sm:$0xff]
    %v1482 = vld [vmem:[#allocation6 + $0x2b88] sm:$0xff]
    %v1483 = vld [vmem:[#allocation6 + $0x2b90] sm:$0xff]
    %v1484 = vld [vmem:[#allocation6 + $0x2b98] sm:$0xff]
    %v1485 = vld [vmem:[#allocation6 + $0x2ba0] sm:$0xff]
    %v1486 = vld [vmem:[#allocation6 + $0x2ba8] sm:$0xff]
    %v1487 = vld [vmem:[#allocation6 + $0x2bb0] sm:$0xff]
    %v1488 = vld [vmem:[#allocation6 + $0x2bb8] sm:$0xff]
    %v1489 = vld [vmem:[#allocation6 + $0x2bc0] sm:$0xff]
    %v1490 = vld [vmem:[#allocation6 + $0x2bc8] sm:$0xff]
    %v1491 = vld [vmem:[#allocation6 + $0x2bd0] sm:$0xff]
    %v1492 = vld [vmem:[#allocation6 + $0x2bd8] sm:$0xff]
    %v1493 = vld [vmem:[#allocation6 + $0x2be0] sm:$0xff]
    %v1494 = vld [vmem:[#allocation6 + $0x2be8] sm:$0xff]
    %v1495 = vld [vmem:[#allocation6 + $0x2bf0] sm:$0xff]
    %v1496 = vld [vmem:[#allocation6 + $0x2bf8] sm:$0xff]
    %v1497 = vld [vmem:[#allocation6 + $0x2c00] sm:$0xff]
    %v1498 = vld [vmem:[#allocation6 + $0x2c08] sm:$0xff]
    %v1499 = vld [vmem:[#allocation6 + $0x2c10] sm:$0xff]
    %v1500 = vld [vmem:[#allocation6 + $0x2c18] sm:$0xff]
    %v1501 = vld [vmem:[#allocation6 + $0x2c20] sm:$0xff]
    %v1502 = vld [vmem:[#allocation6 + $0x2c28] sm:$0xff]
    %v1503 = vld [vmem:[#allocation6 + $0x2c30] sm:$0xff]
    %v1504 = vld [vmem:[#allocation6 + $0x2c38] sm:$0xff]
    %v1505 = vld [vmem:[#allocation6 + $0x2c40] sm:$0xff]
    %v1506 = vld [vmem:[#allocation6 + $0x2c48] sm:$0xff]
    %v1507 = vld [vmem:[#allocation6 + $0x2c50] sm:$0xff]
    %v1508 = vld [vmem:[#allocation6 + $0x2c58] sm:$0xff]
    %v1509 = vld [vmem:[#allocation6 + $0x2c60] sm:$0xff]
    %v1510 = vld [vmem:[#allocation6 + $0x2c68] sm:$0xff]
    %v1511 = vld [vmem:[#allocation6 + $0x2c70] sm:$0xff]
    %v1512 = vld [vmem:[#allocation6 + $0x2c78] sm:$0xff]
    %v1513 = vld [vmem:[#allocation6 + $0x2c80] sm:$0xff]
    %v1514 = vld [vmem:[#allocation6 + $0x2c88] sm:$0xff]
    %v1515 = vld [vmem:[#allocation6 + $0x2c90] sm:$0xff]
    %v1516 = vld [vmem:[#allocation6 + $0x2c98] sm:$0xff]
    %v1517 = vld [vmem:[#allocation6 + $0x2ca0] sm:$0xff]
    %v1518 = vld [vmem:[#allocation6 + $0x2ca8] sm:$0xff]
    %v1519 = vld [vmem:[#allocation6 + $0x2cb0] sm:$0xff]
    %v1520 = vld [vmem:[#allocation6 + $0x2cb8] sm:$0xff]
    %v1521 = vld [vmem:[#allocation6 + $0x2cc0] sm:$0xff]
    %v1522 = vld [vmem:[#allocation6 + $0x2cc8] sm:$0xff]
    %v1523 = vld [vmem:[#allocation6 + $0x2cd0] sm:$0xff]
    %v1524 = vld [vmem:[#allocation6 + $0x2cd8] sm:$0xff]
    %v1525 = vld [vmem:[#allocation6 + $0x2ce0] sm:$0xff]
    %v1526 = vld [vmem:[#allocation6 + $0x2ce8] sm:$0xff]
    %v1527 = vld [vmem:[#allocation6 + $0x2cf0] sm:$0xff]
    %v1528 = vld [vmem:[#allocation6 + $0x2cf8] sm:$0xff]
    %v1529 = vld [vmem:[#allocation6 + $0x2d00] sm:$0xff]
    %v1530 = vld [vmem:[#allocation6 + $0x2d08] sm:$0xff]
    %v1531 = vld [vmem:[#allocation6 + $0x2d10] sm:$0xff]
    %v1532 = vld [vmem:[#allocation6 + $0x2d18] sm:$0xff]
    %v1533 = vld [vmem:[#allocation6 + $0x2d20] sm:$0xff]
    %v1534 = vld [vmem:[#allocation6 + $0x2d28] sm:$0xff]
    %v1535 = vld [vmem:[#allocation6 + $0x2d30] sm:$0xff]
    %v1536 = vld [vmem:[#allocation6 + $0x2d38] sm:$0xff]
    %v1537 = vld [vmem:[#allocation6 + $0x2d40] sm:$0xff]
    %v1538 = vld [vmem:[#allocation6 + $0x2d48] sm:$0xff]
    %v1539 = vld [vmem:[#allocation6 + $0x2d50] sm:$0xff]
    %v1540 = vld [vmem:[#allocation6 + $0x2d58] sm:$0xff]
    %v1541 = vld [vmem:[#allocation6 + $0x2d60] sm:$0xff]
    %v1542 = vld [vmem:[#allocation6 + $0x2d68] sm:$0xff]
    %v1543 = vld [vmem:[#allocation6 + $0x2d70] sm:$0xff]
    %v1544 = vld [vmem:[#allocation6 + $0x2d78] sm:$0xff]
    %v1545 = vld [vmem:[#allocation6 + $0x2d80] sm:$0xff]
    %v1546 = vld [vmem:[#allocation6 + $0x2d88] sm:$0xff]
    %v1548 = vsel %vm80, %v72, 0
    %1550 = vmatpush.msra.mxu0 %v224
    %1551 = vmatpush.msra.mxu0 %v215
    %1552 = vmatpush.msra.mxu0 %v206
    %1553 = vmatpush.msra.mxu0 %v197
    %1554 = vmatpush.msra.mxu0 %v188
    %1555 = vmatpush.msra.mxu0 %v179
    %1556 = vmatpush.msra.mxu0 %v170
    %1557 = vmatpush.msra.mxu0 %v161
    %1558 = vmatpush.msra.mxu0 %v152
    %1559 = vmatpush.msra.mxu0 %v143
    %1560 = vmatpush.msra.mxu0 %v134
    %1561 = vmatpush.msra.mxu0 %v125
    %1562 = vmatpush.msra.mxu0 %v116
    %1563 = vmatpush.msra.mxu0 %v107
    %1564 = vmatpush.msra.mxu0 %v98
    %1565 = vmatpush.msra.mxu0 %v89
    %1566 = vmatmul.f32.gmra.mxu0 %v62
    %v1567 = vpop.f32.mrf.mxu0
    %v1568 = vadd.f32 0.0, %v1567
    %1569 = vdwg.mxu0
    %1570 = vmatpush.msra.mxu0 %v368
    %1571 = vmatpush.msra.mxu0 %v359
    %1572 = vmatpush.msra.mxu0 %v350
    %1573 = vmatpush.msra.mxu0 %v341
    %1574 = vmatpush.msra.mxu0 %v332
    %1575 = vmatpush.msra.mxu0 %v323
    %1576 = vmatpush.msra.mxu0 %v314
    %1577 = vmatpush.msra.mxu0 %v305
    %1578 = vmatpush.msra.mxu0 %v296
    %1579 = vmatpush.msra.mxu0 %v287
    %1580 = vmatpush.msra.mxu0 %v278
    %1581 = vmatpush.msra.mxu0 %v269
    %1582 = vmatpush.msra.mxu0 %v260
    %1583 = vmatpush.msra.mxu0 %v251
    %1584 = vmatpush.msra.mxu0 %v242
    %1585 = vmatpush.msra.mxu0 %v233
    %1586 = vmatmul.f32.gmra.mxu0 %v63
    %v1587 = vpop.f32.mrf.mxu0
    %v1588 = vadd.f32 %v1568, %v1587
    %1589 = vdwg.mxu0
    %1590 = vmatpush.msra.mxu0 %v512
    %1591 = vmatpush.msra.mxu0 %v503
    %1592 = vmatpush.msra.mxu0 %v494
    %1593 = vmatpush.msra.mxu0 %v485
    %1594 = vmatpush.msra.mxu0 %v476
    %1595 = vmatpush.msra.mxu0 %v467
    %1596 = vmatpush.msra.mxu0 %v458
    %1597 = vmatpush.msra.mxu0 %v449
    %1598 = vmatpush.msra.mxu0 %v440
    %1599 = vmatpush.msra.mxu0 %v431
    %1600 = vmatpush.msra.mxu0 %v422
    %1601 = vmatpush.msra.mxu0 %v413
    %1602 = vmatpush.msra.mxu0 %v404
    %1603 = vmatpush.msra.mxu0 %v395
    %1604 = vmatpush.msra.mxu0 %v386
    %1605 = vmatpush.msra.mxu0 %v377
    %1606 = vmatmul.f32.gmra.mxu0 %v64
    %v1607 = vpop.f32.mrf.mxu0
    %v1608 = vadd.f32 %v1588, %v1607
    %1609 = vdwg.mxu0
    %1610 = vmatpush.msra.mxu0 %v656
    %1611 = vmatpush.msra.mxu0 %v647
    %1612 = vmatpush.msra.mxu0 %v638
    %1613 = vmatpush.msra.mxu0 %v629
    %1614 = vmatpush.msra.mxu0 %v620
    %1615 = vmatpush.msra.mxu0 %v611
    %1616 = vmatpush.msra.mxu0 %v602
    %1617 = vmatpush.msra.mxu0 %v593
    %1618 = vmatpush.msra.mxu0 %v584
    %1619 = vmatpush.msra.mxu0 %v575
    %1620 = vmatpush.msra.mxu0 %v566
    %1621 = vmatpush.msra.mxu0 %v557
    %1622 = vmatpush.msra.mxu0 %v548
    %1623 = vmatpush.msra.mxu0 %v539
    %1624 = vmatpush.msra.mxu0 %v530
    %1625 = vmatpush.msra.mxu0 %v521
    %1626 = vmatmul.f32.gmra.mxu0 %v65
    %v1627 = vpop.f32.mrf.mxu0
    %v1628 = vadd.f32 %v1608, %v1627
    %1629 = vdwg.mxu0
    %1630 = vmatpush.msra.mxu0 %v800
    %1631 = vmatpush.msra.mxu0 %v791
    %1632 = vmatpush.msra.mxu0 %v782
    %1633 = vmatpush.msra.mxu0 %v773
    %1634 = vmatpush.msra.mxu0 %v764
    %1635 = vmatpush.msra.mxu0 %v755
    %1636 = vmatpush.msra.mxu0 %v746
    %1637 = vmatpush.msra.mxu0 %v737
    %1638 = vmatpush.msra.mxu0 %v728
    %1639 = vmatpush.msra.mxu0 %v719
    %1640 = vmatpush.msra.mxu0 %v710
    %1641 = vmatpush.msra.mxu0 %v701
    %1642 = vmatpush.msra.mxu0 %v692
    %1643 = vmatpush.msra.mxu0 %v683
    %1644 = vmatpush.msra.mxu0 %v674
    %1645 = vmatpush.msra.mxu0 %v665
    %1646 = vmatmul.f32.gmra.mxu0 %v66
    %v1647 = vpop.f32.mrf.mxu0
    %v1648 = vadd.f32 %v1628, %v1647
    %1649 = vdwg.mxu0
    %1650 = vmatpush.msra.mxu0 %v944
    %1651 = vmatpush.msra.mxu0 %v935
    %1652 = vmatpush.msra.mxu0 %v926
    %1653 = vmatpush.msra.mxu0 %v917
    %1654 = vmatpush.msra.mxu0 %v908
    %1655 = vmatpush.msra.mxu0 %v899
    %1656 = vmatpush.msra.mxu0 %v890
    %1657 = vmatpush.msra.mxu0 %v881
    %1658 = vmatpush.msra.mxu0 %v872
    %1659 = vmatpush.msra.mxu0 %v863
    %1660 = vmatpush.msra.mxu0 %v854
    %1661 = vmatpush.msra.mxu0 %v845
    %1662 = vmatpush.msra.mxu0 %v836
    %1663 = vmatpush.msra.mxu0 %v827
    %1664 = vmatpush.msra.mxu0 %v818
    %1665 = vmatpush.msra.mxu0 %v809
    %1666 = vmatmul.f32.gmra.mxu0 %v67
    %v1667 = vpop.f32.mrf.mxu0
    %v1668 = vadd.f32 %v1648, %v1667
    %1669 = vdwg.mxu0
    %1670 = vmatpush.msra.mxu0 %v1088
    %1671 = vmatpush.msra.mxu0 %v1079
    %1672 = vmatpush.msra.mxu0 %v1070
    %1673 = vmatpush.msra.mxu0 %v1061
    %1674 = vmatpush.msra.mxu0 %v1052
    %1675 = vmatpush.msra.mxu0 %v1043
    %1676 = vmatpush.msra.mxu0 %v1034
    %1677 = vmatpush.msra.mxu0 %v1025
    %1678 = vmatpush.msra.mxu0 %v1016
    %1679 = vmatpush.msra.mxu0 %v1007
    %1680 = vmatpush.msra.mxu0 %v998
    %1681 = vmatpush.msra.mxu0 %v989
    %1682 = vmatpush.msra.mxu0 %v980
    %1683 = vmatpush.msra.mxu0 %v971
    %1684 = vmatpush.msra.mxu0 %v962
    %1685 = vmatpush.msra.mxu0 %v953
    %1686 = vmatmul.f32.gmra.mxu0 %v68
    %v1687 = vpop.f32.mrf.mxu0
    %v1688 = vadd.f32 %v1668, %v1687
    %1689 = vdwg.mxu0
    %1690 = vmatpush.msra.mxu0 %v1232
    %1691 = vmatpush.msra.mxu0 %v1223
    %1692 = vmatpush.msra.mxu0 %v1214
    %1693 = vmatpush.msra.mxu0 %v1205
    %1694 = vmatpush.msra.mxu0 %v1196
    %1695 = vmatpush.msra.mxu0 %v1187
    %1696 = vmatpush.msra.mxu0 %v1178
    %1697 = vmatpush.msra.mxu0 %v1169
    %1698 = vmatpush.msra.mxu0 %v1160
    %1699 = vmatpush.msra.mxu0 %v1151
    %1700 = vmatpush.msra.mxu0 %v1142
    %1701 = vmatpush.msra.mxu0 %v1133
    %1702 = vmatpush.msra.mxu0 %v1124
    %1703 = vmatpush.msra.mxu0 %v1115
    %1704 = vmatpush.msra.mxu0 %v1106
    %1705 = vmatpush.msra.mxu0 %v1097
    %1706 = vmatmul.f32.gmra.mxu0 %v69
    %v1707 = vpop.f32.mrf.mxu0
    %v1708 = vadd.f32 %v1688, %v1707
    %1709 = vdwg.mxu0
    %1710 = vmatpush.msra.mxu0 %v1376
    %1711 = vmatpush.msra.mxu0 %v1367
    %1712 = vmatpush.msra.mxu0 %v1358
    %1713 = vmatpush.msra.mxu0 %v1349
    %1714 = vmatpush.msra.mxu0 %v1340
    %1715 = vmatpush.msra.mxu0 %v1331
    %1716 = vmatpush.msra.mxu0 %v1322
    %1717 = vmatpush.msra.mxu0 %v1313
    %1718 = vmatpush.msra.mxu0 %v1304
    %1719 = vmatpush.msra.mxu0 %v1295
    %1720 = vmatpush.msra.mxu0 %v1286
    %1721 = vmatpush.msra.mxu0 %v1277
    %1722 = vmatpush.msra.mxu0 %v1268
    %1723 = vmatpush.msra.mxu0 %v1259
    %1724 = vmatpush.msra.mxu0 %v1250
    %1725 = vmatpush.msra.mxu0 %v1241
    %1726 = vmatmul.f32.gmra.mxu0 %v70
    %v1727 = vpop.f32.mrf.mxu0
    %v1728 = vadd.f32 %v1708, %v1727
    %1729 = vdwg.mxu0
    %1730 = vmatpush.msra.mxu0 %v1520
    %1731 = vmatpush.msra.mxu0 %v1511
    %1732 = vmatpush.msra.mxu0 %v1502
    %1733 = vmatpush.msra.mxu0 %v1493
    %1734 = vmatpush.msra.mxu0 %v1484
    %1735 = vmatpush.msra.mxu0 %v1475
    %1736 = vmatpush.msra.mxu0 %v1466
    %1737 = vmatpush.msra.mxu0 %v1457
    %1738 = vmatpush.msra.mxu0 %v1448
    %1739 = vmatpush.msra.mxu0 %v1439
    %1740 = vmatpush.msra.mxu0 %v1430
    %1741 = vmatpush.msra.mxu0 %v1421
    %1742 = vmatpush.msra.mxu0 %v1412
    %1743 = vmatpush.msra.mxu0 %v1403
    %1744 = vmatpush.msra.mxu0 %v1394
    %1745 = vmatpush.msra.mxu0 %v1385
    %1746 = vmatmul.f32.gmra.mxu0 %v71
    %v1747 = vpop.f32.mrf.mxu0
    %v1748 = vadd.f32 %v1728, %v1747
    %1749 = vdwg.mxu0
    %1750 = vmatpush.msra.mxu0 0.0
    %1751 = vmatpush.msra.mxu0 0.0
    %1752 = vmatpush.msra.mxu0 0.0
    %1753 = vmatpush.msra.mxu0 0.0
    %1754 = vmatpush.msra.mxu0 0.0
    %1755 = vmatpush.msra.mxu0 0.0
    %1756 = vmatpush.msra.mxu0 0.0
    %1757 = vmatpush.msra.mxu0 0.0
    %1758 = vmatpush.msra.mxu0 0.0
    %1759 = vmatpush.msra.mxu0 0.0
    %1760 = vmatpush.msra.mxu0 0.0
    %1761 = vmatpush.msra.mxu0 0.0
    %1762 = vmatpush.msra.mxu0 0.0
    %1763 = vmatpush.msra.mxu0 0.0
    %1764 = vmatpush.msra.mxu0 %v1538
    %1765 = vmatpush.msra.mxu0 %v1529
    %1766 = vmatmul.f32.gmra.mxu0 %v1548
    %v1767 = vpop.f32.mrf.mxu0
    %v1768 = vadd.f32 %v1748, %v1767
    %1769 = vdwg.mxu0
    %1770 = vmatpush.msra.mxu0 %v225
    %1771 = vmatpush.msra.mxu0 %v216
    %1772 = vmatpush.msra.mxu0 %v207
    %1773 = vmatpush.msra.mxu0 %v198
    %1774 = vmatpush.msra.mxu0 %v189
    %1775 = vmatpush.msra.mxu0 %v180
    %1776 = vmatpush.msra.mxu0 %v171
    %1777 = vmatpush.msra.mxu0 %v162
    %1778 = vmatpush.msra.mxu0 %v153
    %1779 = vmatpush.msra.mxu0 %v144
    %1780 = vmatpush.msra.mxu0 %v135
    %1781 = vmatpush.msra.mxu0 %v126
    %1782 = vmatpush.msra.mxu0 %v117
    %1783 = vmatpush.msra.mxu0 %v108
    %1784 = vmatpush.msra.mxu0 %v99
    %1785 = vmatpush.msra.mxu0 %v90
    %1786 = vmatmul.f32.gmra.mxu0 %v62
    %v1787 = vpop.f32.mrf.mxu0
    %v1788 = vadd.f32 0.0, %v1787
    %1789 = vdwg.mxu0
    %1790 = vmatpush.msra.mxu0 %v369
    %1791 = vmatpush.msra.mxu0 %v360
    %1792 = vmatpush.msra.mxu0 %v351
    %1793 = vmatpush.msra.mxu0 %v342
    %1794 = vmatpush.msra.mxu0 %v333
    %1795 = vmatpush.msra.mxu0 %v324
    %1796 = vmatpush.msra.mxu0 %v315
    %1797 = vmatpush.msra.mxu0 %v306
    %1798 = vmatpush.msra.mxu0 %v297
    %1799 = vmatpush.msra.mxu0 %v288
    %1800 = vmatpush.msra.mxu0 %v279
    %1801 = vmatpush.msra.mxu0 %v270
    %1802 = vmatpush.msra.mxu0 %v261
    %1803 = vmatpush.msra.mxu0 %v252
    %1804 = vmatpush.msra.mxu0 %v243
    %1805 = vmatpush.msra.mxu0 %v234
    %1806 = vmatmul.f32.gmra.mxu0 %v63
    %v1807 = vpop.f32.mrf.mxu0
    %v1808 = vadd.f32 %v1788, %v1807
    %1809 = vdwg.mxu0
    %1810 = vmatpush.msra.mxu0 %v513
    %1811 = vmatpush.msra.mxu0 %v504
    %1812 = vmatpush.msra.mxu0 %v495
    %1813 = vmatpush.msra.mxu0 %v486
    %1814 = vmatpush.msra.mxu0 %v477
    %1815 = vmatpush.msra.mxu0 %v468
    %1816 = vmatpush.msra.mxu0 %v459
    %1817 = vmatpush.msra.mxu0 %v450
    %1818 = vmatpush.msra.mxu0 %v441
    %1819 = vmatpush.msra.mxu0 %v432
    %1820 = vmatpush.msra.mxu0 %v423
    %1821 = vmatpush.msra.mxu0 %v414
    %1822 = vmatpush.msra.mxu0 %v405
    %1823 = vmatpush.msra.mxu0 %v396
    %1824 = vmatpush.msra.mxu0 %v387
    %1825 = vmatpush.msra.mxu0 %v378
    %1826 = vmatmul.f32.gmra.mxu0 %v64
    %v1827 = vpop.f32.mrf.mxu0
    %v1828 = vadd.f32 %v1808, %v1827
    %1829 = vdwg.mxu0
    %1830 = vmatpush.msra.mxu0 %v657
    %1831 = vmatpush.msra.mxu0 %v648
    %1832 = vmatpush.msra.mxu0 %v639
    %1833 = vmatpush.msra.mxu0 %v630
    %1834 = vmatpush.msra.mxu0 %v621
    %1835 = vmatpush.msra.mxu0 %v612
    %1836 = vmatpush.msra.mxu0 %v603
    %1837 = vmatpush.msra.mxu0 %v594
    %1838 = vmatpush.msra.mxu0 %v585
    %1839 = vmatpush.msra.mxu0 %v576
    %1840 = vmatpush.msra.mxu0 %v567
    %1841 = vmatpush.msra.mxu0 %v558
    %1842 = vmatpush.msra.mxu0 %v549
    %1843 = vmatpush.msra.mxu0 %v540
    %1844 = vmatpush.msra.mxu0 %v531
    %1845 = vmatpush.msra.mxu0 %v522
    %1846 = vmatmul.f32.gmra.mxu0 %v65
    %v1847 = vpop.f32.mrf.mxu0
    %v1848 = vadd.f32 %v1828, %v1847
    %1849 = vdwg.mxu0
    %1850 = vmatpush.msra.mxu0 %v801
    %1851 = vmatpush.msra.mxu0 %v792
    %1852 = vmatpush.msra.mxu0 %v783
    %1853 = vmatpush.msra.mxu0 %v774
    %1854 = vmatpush.msra.mxu0 %v765
    %1855 = vmatpush.msra.mxu0 %v756
    %1856 = vmatpush.msra.mxu0 %v747
    %1857 = vmatpush.msra.mxu0 %v738
    %1858 = vmatpush.msra.mxu0 %v729
    %1859 = vmatpush.msra.mxu0 %v720
    %1860 = vmatpush.msra.mxu0 %v711
    %1861 = vmatpush.msra.mxu0 %v702
    %1862 = vmatpush.msra.mxu0 %v693
    %1863 = vmatpush.msra.mxu0 %v684
    %1864 = vmatpush.msra.mxu0 %v675
    %1865 = vmatpush.msra.mxu0 %v666
    %1866 = vmatmul.f32.gmra.mxu0 %v66
    %v1867 = vpop.f32.mrf.mxu0
    %v1868 = vadd.f32 %v1848, %v1867
    %1869 = vdwg.mxu0
    %1870 = vmatpush.msra.mxu0 %v945
    %1871 = vmatpush.msra.mxu0 %v936
    %1872 = vmatpush.msra.mxu0 %v927
    %1873 = vmatpush.msra.mxu0 %v918
    %1874 = vmatpush.msra.mxu0 %v909
    %1875 = vmatpush.msra.mxu0 %v900
    %1876 = vmatpush.msra.mxu0 %v891
    %1877 = vmatpush.msra.mxu0 %v882
    %1878 = vmatpush.msra.mxu0 %v873
    %1879 = vmatpush.msra.mxu0 %v864
    %1880 = vmatpush.msra.mxu0 %v855
    %1881 = vmatpush.msra.mxu0 %v846
    %1882 = vmatpush.msra.mxu0 %v837
    %1883 = vmatpush.msra.mxu0 %v828
    %1884 = vmatpush.msra.mxu0 %v819
    %1885 = vmatpush.msra.mxu0 %v810
    %1886 = vmatmul.f32.gmra.mxu0 %v67
    %v1887 = vpop.f32.mrf.mxu0
    %v1888 = vadd.f32 %v1868, %v1887
    %1889 = vdwg.mxu0
    %1890 = vmatpush.msra.mxu0 %v1089
    %1891 = vmatpush.msra.mxu0 %v1080
    %1892 = vmatpush.msra.mxu0 %v1071
    %1893 = vmatpush.msra.mxu0 %v1062
    %1894 = vmatpush.msra.mxu0 %v1053
    %1895 = vmatpush.msra.mxu0 %v1044
    %1896 = vmatpush.msra.mxu0 %v1035
    %1897 = vmatpush.msra.mxu0 %v1026
    %1898 = vmatpush.msra.mxu0 %v1017
    %1899 = vmatpush.msra.mxu0 %v1008
    %1900 = vmatpush.msra.mxu0 %v999
    %1901 = vmatpush.msra.mxu0 %v990
    %1902 = vmatpush.msra.mxu0 %v981
    %1903 = vmatpush.msra.mxu0 %v972
    %1904 = vmatpush.msra.mxu0 %v963
    %1905 = vmatpush.msra.mxu0 %v954
    %1906 = vmatmul.f32.gmra.mxu0 %v68
    %v1907 = vpop.f32.mrf.mxu0
    %v1908 = vadd.f32 %v1888, %v1907
    %1909 = vdwg.mxu0
    %1910 = vmatpush.msra.mxu0 %v1233
    %1911 = vmatpush.msra.mxu0 %v1224
    %1912 = vmatpush.msra.mxu0 %v1215
    %1913 = vmatpush.msra.mxu0 %v1206
    %1914 = vmatpush.msra.mxu0 %v1197
    %1915 = vmatpush.msra.mxu0 %v1188
    %1916 = vmatpush.msra.mxu0 %v1179
    %1917 = vmatpush.msra.mxu0 %v1170
    %1918 = vmatpush.msra.mxu0 %v1161
    %1919 = vmatpush.msra.mxu0 %v1152
    %1920 = vmatpush.msra.mxu0 %v1143
    %1921 = vmatpush.msra.mxu0 %v1134
    %1922 = vmatpush.msra.mxu0 %v1125
    %1923 = vmatpush.msra.mxu0 %v1116
    %1924 = vmatpush.msra.mxu0 %v1107
    %1925 = vmatpush.msra.mxu0 %v1098
    %1926 = vmatmul.f32.gmra.mxu0 %v69
    %v1927 = vpop.f32.mrf.mxu0
    %v1928 = vadd.f32 %v1908, %v1927
    %1929 = vdwg.mxu0
    %1930 = vmatpush.msra.mxu0 %v1377
    %1931 = vmatpush.msra.mxu0 %v1368
    %1932 = vmatpush.msra.mxu0 %v1359
    %1933 = vmatpush.msra.mxu0 %v1350
    %1934 = vmatpush.msra.mxu0 %v1341
    %1935 = vmatpush.msra.mxu0 %v1332
    %1936 = vmatpush.msra.mxu0 %v1323
    %1937 = vmatpush.msra.mxu0 %v1314
    %1938 = vmatpush.msra.mxu0 %v1305
    %1939 = vmatpush.msra.mxu0 %v1296
    %1940 = vmatpush.msra.mxu0 %v1287
    %1941 = vmatpush.msra.mxu0 %v1278
    %1942 = vmatpush.msra.mxu0 %v1269
    %1943 = vmatpush.msra.mxu0 %v1260
    %1944 = vmatpush.msra.mxu0 %v1251
    %1945 = vmatpush.msra.mxu0 %v1242
    %1946 = vmatmul.f32.gmra.mxu0 %v70
    %v1947 = vpop.f32.mrf.mxu0
    %v1948 = vadd.f32 %v1928, %v1947
    %1949 = vdwg.mxu0
    %1950 = vmatpush.msra.mxu0 %v1521
    %1951 = vmatpush.msra.mxu0 %v1512
    %1952 = vmatpush.msra.mxu0 %v1503
    %1953 = vmatpush.msra.mxu0 %v1494
    %1954 = vmatpush.msra.mxu0 %v1485
    %1955 = vmatpush.msra.mxu0 %v1476
    %1956 = vmatpush.msra.mxu0 %v1467
    %1957 = vmatpush.msra.mxu0 %v1458
    %1958 = vmatpush.msra.mxu0 %v1449
    %1959 = vmatpush.msra.mxu0 %v1440
    %1960 = vmatpush.msra.mxu0 %v1431
    %1961 = vmatpush.msra.mxu0 %v1422
    %1962 = vmatpush.msra.mxu0 %v1413
    %1963 = vmatpush.msra.mxu0 %v1404
    %1964 = vmatpush.msra.mxu0 %v1395
    %1965 = vmatpush.msra.mxu0 %v1386
    %1966 = vmatmul.f32.gmra.mxu0 %v71
    %v1967 = vpop.f32.mrf.mxu0
    %v1968 = vadd.f32 %v1948, %v1967
    %1969 = vdwg.mxu0
    %1970 = vmatpush.msra.mxu0 0.0
    %1971 = vmatpush.msra.mxu0 0.0
    %1972 = vmatpush.msra.mxu0 0.0
    %1973 = vmatpush.msra.mxu0 0.0
    %1974 = vmatpush.msra.mxu0 0.0
    %1975 = vmatpush.msra.mxu0 0.0
    %1976 = vmatpush.msra.mxu0 0.0
    %1977 = vmatpush.msra.mxu0 0.0
    %1978 = vmatpush.msra.mxu0 0.0
    %1979 = vmatpush.msra.mxu0 0.0
    %1980 = vmatpush.msra.mxu0 0.0
    %1981 = vmatpush.msra.mxu0 0.0
    %1982 = vmatpush.msra.mxu0 0.0
    %1983 = vmatpush.msra.mxu0 0.0
    %1984 = vmatpush.msra.mxu0 %v1539
    %1985 = vmatpush.msra.mxu0 %v1530
    %1986 = vmatmul.f32.gmra.mxu0 %v1548
    %v1987 = vpop.f32.mrf.mxu0
    %v1988 = vadd.f32 %v1968, %v1987
    %1989 = vdwg.mxu0
    %1990 = vmatpush.msra.mxu0 %v226
    %1991 = vmatpush.msra.mxu0 %v217
    %1992 = vmatpush.msra.mxu0 %v208
    %1993 = vmatpush.msra.mxu0 %v199
    %1994 = vmatpush.msra.mxu0 %v190
    %1995 = vmatpush.msra.mxu0 %v181
    %1996 = vmatpush.msra.mxu0 %v172
    %1997 = vmatpush.msra.mxu0 %v163
    %1998 = vmatpush.msra.mxu0 %v154
    %1999 = vmatpush.msra.mxu0 %v145
    %2000 = vmatpush.msra.mxu0 %v136
    %2001 = vmatpush.msra.mxu0 %v127
    %2002 = vmatpush.msra.mxu0 %v118
    %2003 = vmatpush.msra.mxu0 %v109
    %2004 = vmatpush.msra.mxu0 %v100
    %2005 = vmatpush.msra.mxu0 %v91
    %2006 = vmatmul.f32.gmra.mxu0 %v62
    %v2007 = vpop.f32.mrf.mxu0
    %v2008 = vadd.f32 0.0, %v2007
    %2009 = vdwg.mxu0
    %2010 = vmatpush.msra.mxu0 %v370
    %2011 = vmatpush.msra.mxu0 %v361
    %2012 = vmatpush.msra.mxu0 %v352
    %2013 = vmatpush.msra.mxu0 %v343
    %2014 = vmatpush.msra.mxu0 %v334
    %2015 = vmatpush.msra.mxu0 %v325
    %2016 = vmatpush.msra.mxu0 %v316
    %2017 = vmatpush.msra.mxu0 %v307
    %2018 = vmatpush.msra.mxu0 %v298
    %2019 = vmatpush.msra.mxu0 %v289
    %2020 = vmatpush.msra.mxu0 %v280
    %2021 = vmatpush.msra.mxu0 %v271
    %2022 = vmatpush.msra.mxu0 %v262
    %2023 = vmatpush.msra.mxu0 %v253
    %2024 = vmatpush.msra.mxu0 %v244
    %2025 = vmatpush.msra.mxu0 %v235
    %2026 = vmatmul.f32.gmra.mxu0 %v63
    %v2027 = vpop.f32.mrf.mxu0
    %v2028 = vadd.f32 %v2008, %v2027
    %2029 = vdwg.mxu0
    %2030 = vmatpush.msra.mxu0 %v514
    %2031 = vmatpush.msra.mxu0 %v505
    %2032 = vmatpush.msra.mxu0 %v496
    %2033 = vmatpush.msra.mxu0 %v487
    %2034 = vmatpush.msra.mxu0 %v478
    %2035 = vmatpush.msra.mxu0 %v469
    %2036 = vmatpush.msra.mxu0 %v460
    %2037 = vmatpush.msra.mxu0 %v451
    %2038 = vmatpush.msra.mxu0 %v442
    %2039 = vmatpush.msra.mxu0 %v433
    %2040 = vmatpush.msra.mxu0 %v424
    %2041 = vmatpush.msra.mxu0 %v415
    %2042 = vmatpush.msra.mxu0 %v406
    %2043 = vmatpush.msra.mxu0 %v397
    %2044 = vmatpush.msra.mxu0 %v388
    %2045 = vmatpush.msra.mxu0 %v379
    %2046 = vmatmul.f32.gmra.mxu0 %v64
    %v2047 = vpop.f32.mrf.mxu0
    %v2048 = vadd.f32 %v2028, %v2047
    %2049 = vdwg.mxu0
    %2050 = vmatpush.msra.mxu0 %v658
    %2051 = vmatpush.msra.mxu0 %v649
    %2052 = vmatpush.msra.mxu0 %v640
    %2053 = vmatpush.msra.mxu0 %v631
    %2054 = vmatpush.msra.mxu0 %v622
    %2055 = vmatpush.msra.mxu0 %v613
    %2056 = vmatpush.msra.mxu0 %v604
    %2057 = vmatpush.msra.mxu0 %v595
    %2058 = vmatpush.msra.mxu0 %v586
    %2059 = vmatpush.msra.mxu0 %v577
    %2060 = vmatpush.msra.mxu0 %v568
    %2061 = vmatpush.msra.mxu0 %v559
    %2062 = vmatpush.msra.mxu0 %v550
    %2063 = vmatpush.msra.mxu0 %v541
    %2064 = vmatpush.msra.mxu0 %v532
    %2065 = vmatpush.msra.mxu0 %v523
    %2066 = vmatmul.f32.gmra.mxu0 %v65
    %v2067 = vpop.f32.mrf.mxu0
    %v2068 = vadd.f32 %v2048, %v2067
    %2069 = vdwg.mxu0
    %2070 = vmatpush.msra.mxu0 %v802
    %2071 = vmatpush.msra.mxu0 %v793
    %2072 = vmatpush.msra.mxu0 %v784
    %2073 = vmatpush.msra.mxu0 %v775
    %2074 = vmatpush.msra.mxu0 %v766
    %2075 = vmatpush.msra.mxu0 %v757
    %2076 = vmatpush.msra.mxu0 %v748
    %2077 = vmatpush.msra.mxu0 %v739
    %2078 = vmatpush.msra.mxu0 %v730
    %2079 = vmatpush.msra.mxu0 %v721
    %2080 = vmatpush.msra.mxu0 %v712
    %2081 = vmatpush.msra.mxu0 %v703
    %2082 = vmatpush.msra.mxu0 %v694
    %2083 = vmatpush.msra.mxu0 %v685
    %2084 = vmatpush.msra.mxu0 %v676
    %2085 = vmatpush.msra.mxu0 %v667
    %2086 = vmatmul.f32.gmra.mxu0 %v66
    %v2087 = vpop.f32.mrf.mxu0
    %v2088 = vadd.f32 %v2068, %v2087
    %2089 = vdwg.mxu0
    %2090 = vmatpush.msra.mxu0 %v946
    %2091 = vmatpush.msra.mxu0 %v937
    %2092 = vmatpush.msra.mxu0 %v928
    %2093 = vmatpush.msra.mxu0 %v919
    %2094 = vmatpush.msra.mxu0 %v910
    %2095 = vmatpush.msra.mxu0 %v901
    %2096 = vmatpush.msra.mxu0 %v892
    %2097 = vmatpush.msra.mxu0 %v883
    %2098 = vmatpush.msra.mxu0 %v874
    %2099 = vmatpush.msra.mxu0 %v865
    %2100 = vmatpush.msra.mxu0 %v856
    %2101 = vmatpush.msra.mxu0 %v847
    %2102 = vmatpush.msra.mxu0 %v838
    %2103 = vmatpush.msra.mxu0 %v829
    %2104 = vmatpush.msra.mxu0 %v820
    %2105 = vmatpush.msra.mxu0 %v811
    %2106 = vmatmul.f32.gmra.mxu0 %v67
    %v2107 = vpop.f32.mrf.mxu0
    %v2108 = vadd.f32 %v2088, %v2107
    %2109 = vdwg.mxu0
    %2110 = vmatpush.msra.mxu0 %v1090
    %2111 = vmatpush.msra.mxu0 %v1081
    %2112 = vmatpush.msra.mxu0 %v1072
    %2113 = vmatpush.msra.mxu0 %v1063
    %2114 = vmatpush.msra.mxu0 %v1054
    %2115 = vmatpush.msra.mxu0 %v1045
    %2116 = vmatpush.msra.mxu0 %v1036
    %2117 = vmatpush.msra.mxu0 %v1027
    %2118 = vmatpush.msra.mxu0 %v1018
    %2119 = vmatpush.msra.mxu0 %v1009
    %2120 = vmatpush.msra.mxu0 %v1000
    %2121 = vmatpush.msra.mxu0 %v991
    %2122 = vmatpush.msra.mxu0 %v982
    %2123 = vmatpush.msra.mxu0 %v973
    %2124 = vmatpush.msra.mxu0 %v964
    %2125 = vmatpush.msra.mxu0 %v955
    %2126 = vmatmul.f32.gmra.mxu0 %v68
    %v2127 = vpop.f32.mrf.mxu0
    %v2128 = vadd.f32 %v2108, %v2127
    %2129 = vdwg.mxu0
    %2130 = vmatpush.msra.mxu0 %v1234
    %2131 = vmatpush.msra.mxu0 %v1225
    %2132 = vmatpush.msra.mxu0 %v1216
    %2133 = vmatpush.msra.mxu0 %v1207
    %2134 = vmatpush.msra.mxu0 %v1198
    %2135 = vmatpush.msra.mxu0 %v1189
    %2136 = vmatpush.msra.mxu0 %v1180
    %2137 = vmatpush.msra.mxu0 %v1171
    %2138 = vmatpush.msra.mxu0 %v1162
    %2139 = vmatpush.msra.mxu0 %v1153
    %2140 = vmatpush.msra.mxu0 %v1144
    %2141 = vmatpush.msra.mxu0 %v1135
    %2142 = vmatpush.msra.mxu0 %v1126
    %2143 = vmatpush.msra.mxu0 %v1117
    %2144 = vmatpush.msra.mxu0 %v1108
    %2145 = vmatpush.msra.mxu0 %v1099
    %2146 = vmatmul.f32.gmra.mxu0 %v69
    %v2147 = vpop.f32.mrf.mxu0
    %v2148 = vadd.f32 %v2128, %v2147
    %2149 = vdwg.mxu0
    %2150 = vmatpush.msra.mxu0 %v1378
    %2151 = vmatpush.msra.mxu0 %v1369
    %2152 = vmatpush.msra.mxu0 %v1360
    %2153 = vmatpush.msra.mxu0 %v1351
    %2154 = vmatpush.msra.mxu0 %v1342
    %2155 = vmatpush.msra.mxu0 %v1333
    %2156 = vmatpush.msra.mxu0 %v1324
    %2157 = vmatpush.msra.mxu0 %v1315
    %2158 = vmatpush.msra.mxu0 %v1306
    %2159 = vmatpush.msra.mxu0 %v1297
    %2160 = vmatpush.msra.mxu0 %v1288
    %2161 = vmatpush.msra.mxu0 %v1279
    %2162 = vmatpush.msra.mxu0 %v1270
    %2163 = vmatpush.msra.mxu0 %v1261
    %2164 = vmatpush.msra.mxu0 %v1252
    %2165 = vmatpush.msra.mxu0 %v1243
    %2166 = vmatmul.f32.gmra.mxu0 %v70
    %v2167 = vpop.f32.mrf.mxu0
    %v2168 = vadd.f32 %v2148, %v2167
    %2169 = vdwg.mxu0
    %2170 = vmatpush.msra.mxu0 %v1522
    %2171 = vmatpush.msra.mxu0 %v1513
    %2172 = vmatpush.msra.mxu0 %v1504
    %2173 = vmatpush.msra.mxu0 %v1495
    %2174 = vmatpush.msra.mxu0 %v1486
    %2175 = vmatpush.msra.mxu0 %v1477
    %2176 = vmatpush.msra.mxu0 %v1468
    %2177 = vmatpush.msra.mxu0 %v1459
    %2178 = vmatpush.msra.mxu0 %v1450
    %2179 = vmatpush.msra.mxu0 %v1441
    %2180 = vmatpush.msra.mxu0 %v1432
    %2181 = vmatpush.msra.mxu0 %v1423
    %2182 = vmatpush.msra.mxu0 %v1414
    %2183 = vmatpush.msra.mxu0 %v1405
    %2184 = vmatpush.msra.mxu0 %v1396
    %2185 = vmatpush.msra.mxu0 %v1387
    %2186 = vmatmul.f32.gmra.mxu0 %v71
    %v2187 = vpop.f32.mrf.mxu0
    %v2188 = vadd.f32 %v2168, %v2187
    %2189 = vdwg.mxu0
    %2190 = vmatpush.msra.mxu0 0.0
    %2191 = vmatpush.msra.mxu0 0.0
    %2192 = vmatpush.msra.mxu0 0.0
    %2193 = vmatpush.msra.mxu0 0.0
    %2194 = vmatpush.msra.mxu0 0.0
    %2195 = vmatpush.msra.mxu0 0.0
    %2196 = vmatpush.msra.mxu0 0.0
    %2197 = vmatpush.msra.mxu0 0.0
    %2198 = vmatpush.msra.mxu0 0.0
    %2199 = vmatpush.msra.mxu0 0.0
    %2200 = vmatpush.msra.mxu0 0.0
    %2201 = vmatpush.msra.mxu0 0.0
    %2202 = vmatpush.msra.mxu0 0.0
    %2203 = vmatpush.msra.mxu0 0.0
    %2204 = vmatpush.msra.mxu0 %v1540
    %2205 = vmatpush.msra.mxu0 %v1531
    %2206 = vmatmul.f32.gmra.mxu0 %v1548
    %v2207 = vpop.f32.mrf.mxu0
    %v2208 = vadd.f32 %v2188, %v2207
    %2209 = vdwg.mxu0
    %2210 = vmatpush.msra.mxu0 %v227
    %2211 = vmatpush.msra.mxu0 %v218
    %2212 = vmatpush.msra.mxu0 %v209
    %2213 = vmatpush.msra.mxu0 %v200
    %2214 = vmatpush.msra.mxu0 %v191
    %2215 = vmatpush.msra.mxu0 %v182
    %2216 = vmatpush.msra.mxu0 %v173
    %2217 = vmatpush.msra.mxu0 %v164
    %2218 = vmatpush.msra.mxu0 %v155
    %2219 = vmatpush.msra.mxu0 %v146
    %2220 = vmatpush.msra.mxu0 %v137
    %2221 = vmatpush.msra.mxu0 %v128
    %2222 = vmatpush.msra.mxu0 %v119
    %2223 = vmatpush.msra.mxu0 %v110
    %2224 = vmatpush.msra.mxu0 %v101
    %2225 = vmatpush.msra.mxu0 %v92
    %2226 = vmatmul.f32.gmra.mxu0 %v62
    %v2227 = vpop.f32.mrf.mxu0
    %v2228 = vadd.f32 0.0, %v2227
    %2229 = vdwg.mxu0
    %2230 = vmatpush.msra.mxu0 %v371
    %2231 = vmatpush.msra.mxu0 %v362
    %2232 = vmatpush.msra.mxu0 %v353
    %2233 = vmatpush.msra.mxu0 %v344
    %2234 = vmatpush.msra.mxu0 %v335
    %2235 = vmatpush.msra.mxu0 %v326
    %2236 = vmatpush.msra.mxu0 %v317
    %2237 = vmatpush.msra.mxu0 %v308
    %2238 = vmatpush.msra.mxu0 %v299
    %2239 = vmatpush.msra.mxu0 %v290
    %2240 = vmatpush.msra.mxu0 %v281
    %2241 = vmatpush.msra.mxu0 %v272
    %2242 = vmatpush.msra.mxu0 %v263
    %2243 = vmatpush.msra.mxu0 %v254
    %2244 = vmatpush.msra.mxu0 %v245
    %2245 = vmatpush.msra.mxu0 %v236
    %2246 = vmatmul.f32.gmra.mxu0 %v63
    %v2247 = vpop.f32.mrf.mxu0
    %v2248 = vadd.f32 %v2228, %v2247
    %2249 = vdwg.mxu0
    %2250 = vmatpush.msra.mxu0 %v515
    %2251 = vmatpush.msra.mxu0 %v506
    %2252 = vmatpush.msra.mxu0 %v497
    %2253 = vmatpush.msra.mxu0 %v488
    %2254 = vmatpush.msra.mxu0 %v479
    %2255 = vmatpush.msra.mxu0 %v470
    %2256 = vmatpush.msra.mxu0 %v461
    %2257 = vmatpush.msra.mxu0 %v452
    %2258 = vmatpush.msra.mxu0 %v443
    %2259 = vmatpush.msra.mxu0 %v434
    %2260 = vmatpush.msra.mxu0 %v425
    %2261 = vmatpush.msra.mxu0 %v416
    %2262 = vmatpush.msra.mxu0 %v407
    %2263 = vmatpush.msra.mxu0 %v398
    %2264 = vmatpush.msra.mxu0 %v389
    %2265 = vmatpush.msra.mxu0 %v380
    %2266 = vmatmul.f32.gmra.mxu0 %v64
    %v2267 = vpop.f32.mrf.mxu0
    %v2268 = vadd.f32 %v2248, %v2267
    %2269 = vdwg.mxu0
    %2270 = vmatpush.msra.mxu0 %v659
    %2271 = vmatpush.msra.mxu0 %v650
    %2272 = vmatpush.msra.mxu0 %v641
    %2273 = vmatpush.msra.mxu0 %v632
    %2274 = vmatpush.msra.mxu0 %v623
    %2275 = vmatpush.msra.mxu0 %v614
    %2276 = vmatpush.msra.mxu0 %v605
    %2277 = vmatpush.msra.mxu0 %v596
    %2278 = vmatpush.msra.mxu0 %v587
    %2279 = vmatpush.msra.mxu0 %v578
    %2280 = vmatpush.msra.mxu0 %v569
    %2281 = vmatpush.msra.mxu0 %v560
    %2282 = vmatpush.msra.mxu0 %v551
    %2283 = vmatpush.msra.mxu0 %v542
    %2284 = vmatpush.msra.mxu0 %v533
    %2285 = vmatpush.msra.mxu0 %v524
    %2286 = vmatmul.f32.gmra.mxu0 %v65
    %v2287 = vpop.f32.mrf.mxu0
    %v2288 = vadd.f32 %v2268, %v2287
    %2289 = vdwg.mxu0
    %2290 = vmatpush.msra.mxu0 %v803
    %2291 = vmatpush.msra.mxu0 %v794
    %2292 = vmatpush.msra.mxu0 %v785
    %2293 = vmatpush.msra.mxu0 %v776
    %2294 = vmatpush.msra.mxu0 %v767
    %2295 = vmatpush.msra.mxu0 %v758
    %2296 = vmatpush.msra.mxu0 %v749
    %2297 = vmatpush.msra.mxu0 %v740
    %2298 = vmatpush.msra.mxu0 %v731
    %2299 = vmatpush.msra.mxu0 %v722
    %2300 = vmatpush.msra.mxu0 %v713
    %2301 = vmatpush.msra.mxu0 %v704
    %2302 = vmatpush.msra.mxu0 %v695
    %2303 = vmatpush.msra.mxu0 %v686
    %2304 = vmatpush.msra.mxu0 %v677
    %2305 = vmatpush.msra.mxu0 %v668
    %2306 = vmatmul.f32.gmra.mxu0 %v66
    %v2307 = vpop.f32.mrf.mxu0
    %v2308 = vadd.f32 %v2288, %v2307
    %2309 = vdwg.mxu0
    %2310 = vmatpush.msra.mxu0 %v947
    %2311 = vmatpush.msra.mxu0 %v938
    %2312 = vmatpush.msra.mxu0 %v929
    %2313 = vmatpush.msra.mxu0 %v920
    %2314 = vmatpush.msra.mxu0 %v911
    %2315 = vmatpush.msra.mxu0 %v902
    %2316 = vmatpush.msra.mxu0 %v893
    %2317 = vmatpush.msra.mxu0 %v884
    %2318 = vmatpush.msra.mxu0 %v875
    %2319 = vmatpush.msra.mxu0 %v866
    %2320 = vmatpush.msra.mxu0 %v857
    %2321 = vmatpush.msra.mxu0 %v848
    %2322 = vmatpush.msra.mxu0 %v839
    %2323 = vmatpush.msra.mxu0 %v830
    %2324 = vmatpush.msra.mxu0 %v821
    %2325 = vmatpush.msra.mxu0 %v812
    %2326 = vmatmul.f32.gmra.mxu0 %v67
    %v2327 = vpop.f32.mrf.mxu0
    %v2328 = vadd.f32 %v2308, %v2327
    %2329 = vdwg.mxu0
    %2330 = vmatpush.msra.mxu0 %v1091
    %2331 = vmatpush.msra.mxu0 %v1082
    %2332 = vmatpush.msra.mxu0 %v1073
    %2333 = vmatpush.msra.mxu0 %v1064
    %2334 = vmatpush.msra.mxu0 %v1055
    %2335 = vmatpush.msra.mxu0 %v1046
    %2336 = vmatpush.msra.mxu0 %v1037
    %2337 = vmatpush.msra.mxu0 %v1028
    %2338 = vmatpush.msra.mxu0 %v1019
    %2339 = vmatpush.msra.mxu0 %v1010
    %2340 = vmatpush.msra.mxu0 %v1001
    %2341 = vmatpush.msra.mxu0 %v992
    %2342 = vmatpush.msra.mxu0 %v983
    %2343 = vmatpush.msra.mxu0 %v974
    %2344 = vmatpush.msra.mxu0 %v965
    %2345 = vmatpush.msra.mxu0 %v956
    %2346 = vmatmul.f32.gmra.mxu0 %v68
    %v2347 = vpop.f32.mrf.mxu0
    %v2348 = vadd.f32 %v2328, %v2347
    %2349 = vdwg.mxu0
    %2350 = vmatpush.msra.mxu0 %v1235
    %2351 = vmatpush.msra.mxu0 %v1226
    %2352 = vmatpush.msra.mxu0 %v1217
    %2353 = vmatpush.msra.mxu0 %v1208
    %2354 = vmatpush.msra.mxu0 %v1199
    %2355 = vmatpush.msra.mxu0 %v1190
    %2356 = vmatpush.msra.mxu0 %v1181
    %2357 = vmatpush.msra.mxu0 %v1172
    %2358 = vmatpush.msra.mxu0 %v1163
    %2359 = vmatpush.msra.mxu0 %v1154
    %2360 = vmatpush.msra.mxu0 %v1145
    %2361 = vmatpush.msra.mxu0 %v1136
    %2362 = vmatpush.msra.mxu0 %v1127
    %2363 = vmatpush.msra.mxu0 %v1118
    %2364 = vmatpush.msra.mxu0 %v1109
    %2365 = vmatpush.msra.mxu0 %v1100
    %2366 = vmatmul.f32.gmra.mxu0 %v69
    %v2367 = vpop.f32.mrf.mxu0
    %v2368 = vadd.f32 %v2348, %v2367
    %2369 = vdwg.mxu0
    %2370 = vmatpush.msra.mxu0 %v1379
    %2371 = vmatpush.msra.mxu0 %v1370
    %2372 = vmatpush.msra.mxu0 %v1361
    %2373 = vmatpush.msra.mxu0 %v1352
    %2374 = vmatpush.msra.mxu0 %v1343
    %2375 = vmatpush.msra.mxu0 %v1334
    %2376 = vmatpush.msra.mxu0 %v1325
    %2377 = vmatpush.msra.mxu0 %v1316
    %2378 = vmatpush.msra.mxu0 %v1307
    %2379 = vmatpush.msra.mxu0 %v1298
    %2380 = vmatpush.msra.mxu0 %v1289
    %2381 = vmatpush.msra.mxu0 %v1280
    %2382 = vmatpush.msra.mxu0 %v1271
    %2383 = vmatpush.msra.mxu0 %v1262
    %2384 = vmatpush.msra.mxu0 %v1253
    %2385 = vmatpush.msra.mxu0 %v1244
    %2386 = vmatmul.f32.gmra.mxu0 %v70
    %v2387 = vpop.f32.mrf.mxu0
    %v2388 = vadd.f32 %v2368, %v2387
    %2389 = vdwg.mxu0
    %2390 = vmatpush.msra.mxu0 %v1523
    %2391 = vmatpush.msra.mxu0 %v1514
    %2392 = vmatpush.msra.mxu0 %v1505
    %2393 = vmatpush.msra.mxu0 %v1496
    %2394 = vmatpush.msra.mxu0 %v1487
    %2395 = vmatpush.msra.mxu0 %v1478
    %2396 = vmatpush.msra.mxu0 %v1469
    %2397 = vmatpush.msra.mxu0 %v1460
    %2398 = vmatpush.msra.mxu0 %v1451
    %2399 = vmatpush.msra.mxu0 %v1442
    %2400 = vmatpush.msra.mxu0 %v1433
    %2401 = vmatpush.msra.mxu0 %v1424
    %2402 = vmatpush.msra.mxu0 %v1415
    %2403 = vmatpush.msra.mxu0 %v1406
    %2404 = vmatpush.msra.mxu0 %v1397
    %2405 = vmatpush.msra.mxu0 %v1388
    %2406 = vmatmul.f32.gmra.mxu0 %v71
    %v2407 = vpop.f32.mrf.mxu0
    %v2408 = vadd.f32 %v2388, %v2407
    %2409 = vdwg.mxu0
    %2410 = vmatpush.msra.mxu0 0.0
    %2411 = vmatpush.msra.mxu0 0.0
    %2412 = vmatpush.msra.mxu0 0.0
    %2413 = vmatpush.msra.mxu0 0.0
    %2414 = vmatpush.msra.mxu0 0.0
    %2415 = vmatpush.msra.mxu0 0.0
    %2416 = vmatpush.msra.mxu0 0.0
    %2417 = vmatpush.msra.mxu0 0.0
    %2418 = vmatpush.msra.mxu0 0.0
    %2419 = vmatpush.msra.mxu0 0.0
    %2420 = vmatpush.msra.mxu0 0.0
    %2421 = vmatpush.msra.mxu0 0.0
    %2422 = vmatpush.msra.mxu0 0.0
    %2423 = vmatpush.msra.mxu0 0.0
    %2424 = vmatpush.msra.mxu0 %v1541
    %2425 = vmatpush.msra.mxu0 %v1532
    %2426 = vmatmul.f32.gmra.mxu0 %v1548
    %v2427 = vpop.f32.mrf.mxu0
    %v2428 = vadd.f32 %v2408, %v2427
    %2429 = vdwg.mxu0
    %2430 = vmatpush.msra.mxu0 %v228
    %2431 = vmatpush.msra.mxu0 %v219
    %2432 = vmatpush.msra.mxu0 %v210
    %2433 = vmatpush.msra.mxu0 %v201
    %2434 = vmatpush.msra.mxu0 %v192
    %2435 = vmatpush.msra.mxu0 %v183
    %2436 = vmatpush.msra.mxu0 %v174
    %2437 = vmatpush.msra.mxu0 %v165
    %2438 = vmatpush.msra.mxu0 %v156
    %2439 = vmatpush.msra.mxu0 %v147
    %2440 = vmatpush.msra.mxu0 %v138
    %2441 = vmatpush.msra.mxu0 %v129
    %2442 = vmatpush.msra.mxu0 %v120
    %2443 = vmatpush.msra.mxu0 %v111
    %2444 = vmatpush.msra.mxu0 %v102
    %2445 = vmatpush.msra.mxu0 %v93
    %2446 = vmatmul.f32.gmra.mxu0 %v62
    %v2447 = vpop.f32.mrf.mxu0
    %v2448 = vadd.f32 0.0, %v2447
    %2449 = vdwg.mxu0
    %2450 = vmatpush.msra.mxu0 %v372
    %2451 = vmatpush.msra.mxu0 %v363
    %2452 = vmatpush.msra.mxu0 %v354
    %2453 = vmatpush.msra.mxu0 %v345
    %2454 = vmatpush.msra.mxu0 %v336
    %2455 = vmatpush.msra.mxu0 %v327
    %2456 = vmatpush.msra.mxu0 %v318
    %2457 = vmatpush.msra.mxu0 %v309
    %2458 = vmatpush.msra.mxu0 %v300
    %2459 = vmatpush.msra.mxu0 %v291
    %2460 = vmatpush.msra.mxu0 %v282
    %2461 = vmatpush.msra.mxu0 %v273
    %2462 = vmatpush.msra.mxu0 %v264
    %2463 = vmatpush.msra.mxu0 %v255
    %2464 = vmatpush.msra.mxu0 %v246
    %2465 = vmatpush.msra.mxu0 %v237
    %2466 = vmatmul.f32.gmra.mxu0 %v63
    %v2467 = vpop.f32.mrf.mxu0
    %v2468 = vadd.f32 %v2448, %v2467
    %2469 = vdwg.mxu0
    %2470 = vmatpush.msra.mxu0 %v516
    %2471 = vmatpush.msra.mxu0 %v507
    %2472 = vmatpush.msra.mxu0 %v498
    %2473 = vmatpush.msra.mxu0 %v489
    %2474 = vmatpush.msra.mxu0 %v480
    %2475 = vmatpush.msra.mxu0 %v471
    %2476 = vmatpush.msra.mxu0 %v462
    %2477 = vmatpush.msra.mxu0 %v453
    %2478 = vmatpush.msra.mxu0 %v444
    %2479 = vmatpush.msra.mxu0 %v435
    %2480 = vmatpush.msra.mxu0 %v426
    %2481 = vmatpush.msra.mxu0 %v417
    %2482 = vmatpush.msra.mxu0 %v408
    %2483 = vmatpush.msra.mxu0 %v399
    %2484 = vmatpush.msra.mxu0 %v390
    %2485 = vmatpush.msra.mxu0 %v381
    %2486 = vmatmul.f32.gmra.mxu0 %v64
    %v2487 = vpop.f32.mrf.mxu0
    %v2488 = vadd.f32 %v2468, %v2487
    %2489 = vdwg.mxu0
    %2490 = vmatpush.msra.mxu0 %v660
    %2491 = vmatpush.msra.mxu0 %v651
    %2492 = vmatpush.msra.mxu0 %v642
    %2493 = vmatpush.msra.mxu0 %v633
    %2494 = vmatpush.msra.mxu0 %v624
    %2495 = vmatpush.msra.mxu0 %v615
    %2496 = vmatpush.msra.mxu0 %v606
    %2497 = vmatpush.msra.mxu0 %v597
    %2498 = vmatpush.msra.mxu0 %v588
    %2499 = vmatpush.msra.mxu0 %v579
    %2500 = vmatpush.msra.mxu0 %v570
    %2501 = vmatpush.msra.mxu0 %v561
    %2502 = vmatpush.msra.mxu0 %v552
    %2503 = vmatpush.msra.mxu0 %v543
    %2504 = vmatpush.msra.mxu0 %v534
    %2505 = vmatpush.msra.mxu0 %v525
    %2506 = vmatmul.f32.gmra.mxu0 %v65
    %v2507 = vpop.f32.mrf.mxu0
    %v2508 = vadd.f32 %v2488, %v2507
    %2509 = vdwg.mxu0
    %2510 = vmatpush.msra.mxu0 %v804
    %2511 = vmatpush.msra.mxu0 %v795
    %2512 = vmatpush.msra.mxu0 %v786
    %2513 = vmatpush.msra.mxu0 %v777
    %2514 = vmatpush.msra.mxu0 %v768
    %2515 = vmatpush.msra.mxu0 %v759
    %2516 = vmatpush.msra.mxu0 %v750
    %2517 = vmatpush.msra.mxu0 %v741
    %2518 = vmatpush.msra.mxu0 %v732
    %2519 = vmatpush.msra.mxu0 %v723
    %2520 = vmatpush.msra.mxu0 %v714
    %2521 = vmatpush.msra.mxu0 %v705
    %2522 = vmatpush.msra.mxu0 %v696
    %2523 = vmatpush.msra.mxu0 %v687
    %2524 = vmatpush.msra.mxu0 %v678
    %2525 = vmatpush.msra.mxu0 %v669
    %2526 = vmatmul.f32.gmra.mxu0 %v66
    %v2527 = vpop.f32.mrf.mxu0
    %v2528 = vadd.f32 %v2508, %v2527
    %2529 = vdwg.mxu0
    %2530 = vmatpush.msra.mxu0 %v948
    %2531 = vmatpush.msra.mxu0 %v939
    %2532 = vmatpush.msra.mxu0 %v930
    %2533 = vmatpush.msra.mxu0 %v921
    %2534 = vmatpush.msra.mxu0 %v912
    %2535 = vmatpush.msra.mxu0 %v903
    %2536 = vmatpush.msra.mxu0 %v894
    %2537 = vmatpush.msra.mxu0 %v885
    %2538 = vmatpush.msra.mxu0 %v876
    %2539 = vmatpush.msra.mxu0 %v867
    %2540 = vmatpush.msra.mxu0 %v858
    %2541 = vmatpush.msra.mxu0 %v849
    %2542 = vmatpush.msra.mxu0 %v840
    %2543 = vmatpush.msra.mxu0 %v831
    %2544 = vmatpush.msra.mxu0 %v822
    %2545 = vmatpush.msra.mxu0 %v813
    %2546 = vmatmul.f32.gmra.mxu0 %v67
    %v2547 = vpop.f32.mrf.mxu0
    %v2548 = vadd.f32 %v2528, %v2547
    %2549 = vdwg.mxu0
    %2550 = vmatpush.msra.mxu0 %v1092
    %2551 = vmatpush.msra.mxu0 %v1083
    %2552 = vmatpush.msra.mxu0 %v1074
    %2553 = vmatpush.msra.mxu0 %v1065
    %2554 = vmatpush.msra.mxu0 %v1056
    %2555 = vmatpush.msra.mxu0 %v1047
    %2556 = vmatpush.msra.mxu0 %v1038
    %2557 = vmatpush.msra.mxu0 %v1029
    %2558 = vmatpush.msra.mxu0 %v1020
    %2559 = vmatpush.msra.mxu0 %v1011
    %2560 = vmatpush.msra.mxu0 %v1002
    %2561 = vmatpush.msra.mxu0 %v993
    %2562 = vmatpush.msra.mxu0 %v984
    %2563 = vmatpush.msra.mxu0 %v975
    %2564 = vmatpush.msra.mxu0 %v966
    %2565 = vmatpush.msra.mxu0 %v957
    %2566 = vmatmul.f32.gmra.mxu0 %v68
    %v2567 = vpop.f32.mrf.mxu0
    %v2568 = vadd.f32 %v2548, %v2567
    %2569 = vdwg.mxu0
    %2570 = vmatpush.msra.mxu0 %v1236
    %2571 = vmatpush.msra.mxu0 %v1227
    %2572 = vmatpush.msra.mxu0 %v1218
    %2573 = vmatpush.msra.mxu0 %v1209
    %2574 = vmatpush.msra.mxu0 %v1200
    %2575 = vmatpush.msra.mxu0 %v1191
    %2576 = vmatpush.msra.mxu0 %v1182
    %2577 = vmatpush.msra.mxu0 %v1173
    %2578 = vmatpush.msra.mxu0 %v1164
    %2579 = vmatpush.msra.mxu0 %v1155
    %2580 = vmatpush.msra.mxu0 %v1146
    %2581 = vmatpush.msra.mxu0 %v1137
    %2582 = vmatpush.msra.mxu0 %v1128
    %2583 = vmatpush.msra.mxu0 %v1119
    %2584 = vmatpush.msra.mxu0 %v1110
    %2585 = vmatpush.msra.mxu0 %v1101
    %2586 = vmatmul.f32.gmra.mxu0 %v69
    %v2587 = vpop.f32.mrf.mxu0
    %v2588 = vadd.f32 %v2568, %v2587
    %2589 = vdwg.mxu0
    %2590 = vmatpush.msra.mxu0 %v1380
    %2591 = vmatpush.msra.mxu0 %v1371
    %2592 = vmatpush.msra.mxu0 %v1362
    %2593 = vmatpush.msra.mxu0 %v1353
    %2594 = vmatpush.msra.mxu0 %v1344
    %2595 = vmatpush.msra.mxu0 %v1335
    %2596 = vmatpush.msra.mxu0 %v1326
    %2597 = vmatpush.msra.mxu0 %v1317
    %2598 = vmatpush.msra.mxu0 %v1308
    %2599 = vmatpush.msra.mxu0 %v1299
    %2600 = vmatpush.msra.mxu0 %v1290
    %2601 = vmatpush.msra.mxu0 %v1281
    %2602 = vmatpush.msra.mxu0 %v1272
    %2603 = vmatpush.msra.mxu0 %v1263
    %2604 = vmatpush.msra.mxu0 %v1254
    %2605 = vmatpush.msra.mxu0 %v1245
    %2606 = vmatmul.f32.gmra.mxu0 %v70
    %v2607 = vpop.f32.mrf.mxu0
    %v2608 = vadd.f32 %v2588, %v2607
    %2609 = vdwg.mxu0
    %2610 = vmatpush.msra.mxu0 %v1524
    %2611 = vmatpush.msra.mxu0 %v1515
    %2612 = vmatpush.msra.mxu0 %v1506
    %2613 = vmatpush.msra.mxu0 %v1497
    %2614 = vmatpush.msra.mxu0 %v1488
    %2615 = vmatpush.msra.mxu0 %v1479
    %2616 = vmatpush.msra.mxu0 %v1470
    %2617 = vmatpush.msra.mxu0 %v1461
    %2618 = vmatpush.msra.mxu0 %v1452
    %2619 = vmatpush.msra.mxu0 %v1443
    %2620 = vmatpush.msra.mxu0 %v1434
    %2621 = vmatpush.msra.mxu0 %v1425
    %2622 = vmatpush.msra.mxu0 %v1416
    %2623 = vmatpush.msra.mxu0 %v1407
    %2624 = vmatpush.msra.mxu0 %v1398
    %2625 = vmatpush.msra.mxu0 %v1389
    %2626 = vmatmul.f32.gmra.mxu0 %v71
    %v2627 = vpop.f32.mrf.mxu0
    %v2628 = vadd.f32 %v2608, %v2627
    %2629 = vdwg.mxu0
    %2630 = vmatpush.msra.mxu0 0.0
    %2631 = vmatpush.msra.mxu0 0.0
    %2632 = vmatpush.msra.mxu0 0.0
    %2633 = vmatpush.msra.mxu0 0.0
    %2634 = vmatpush.msra.mxu0 0.0
    %2635 = vmatpush.msra.mxu0 0.0
    %2636 = vmatpush.msra.mxu0 0.0
    %2637 = vmatpush.msra.mxu0 0.0
    %2638 = vmatpush.msra.mxu0 0.0
    %2639 = vmatpush.msra.mxu0 0.0
    %2640 = vmatpush.msra.mxu0 0.0
    %2641 = vmatpush.msra.mxu0 0.0
    %2642 = vmatpush.msra.mxu0 0.0
    %2643 = vmatpush.msra.mxu0 0.0
    %2644 = vmatpush.msra.mxu0 %v1542
    %2645 = vmatpush.msra.mxu0 %v1533
    %2646 = vmatmul.f32.gmra.mxu0 %v1548
    %v2647 = vpop.f32.mrf.mxu0
    %v2648 = vadd.f32 %v2628, %v2647
    %2649 = vdwg.mxu0
    %2650 = vmatpush.msra.mxu0 %v229
    %2651 = vmatpush.msra.mxu0 %v220
    %2652 = vmatpush.msra.mxu0 %v211
    %2653 = vmatpush.msra.mxu0 %v202
    %2654 = vmatpush.msra.mxu0 %v193
    %2655 = vmatpush.msra.mxu0 %v184
    %2656 = vmatpush.msra.mxu0 %v175
    %2657 = vmatpush.msra.mxu0 %v166
    %2658 = vmatpush.msra.mxu0 %v157
    %2659 = vmatpush.msra.mxu0 %v148
    %2660 = vmatpush.msra.mxu0 %v139
    %2661 = vmatpush.msra.mxu0 %v130
    %2662 = vmatpush.msra.mxu0 %v121
    %2663 = vmatpush.msra.mxu0 %v112
    %2664 = vmatpush.msra.mxu0 %v103
    %2665 = vmatpush.msra.mxu0 %v94
    %2666 = vmatmul.f32.gmra.mxu0 %v62
    %v2667 = vpop.f32.mrf.mxu0
    %v2668 = vadd.f32 0.0, %v2667
    %2669 = vdwg.mxu0
    %2670 = vmatpush.msra.mxu0 %v373
    %2671 = vmatpush.msra.mxu0 %v364
    %2672 = vmatpush.msra.mxu0 %v355
    %2673 = vmatpush.msra.mxu0 %v346
    %2674 = vmatpush.msra.mxu0 %v337
    %2675 = vmatpush.msra.mxu0 %v328
    %2676 = vmatpush.msra.mxu0 %v319
    %2677 = vmatpush.msra.mxu0 %v310
    %2678 = vmatpush.msra.mxu0 %v301
    %2679 = vmatpush.msra.mxu0 %v292
    %2680 = vmatpush.msra.mxu0 %v283
    %2681 = vmatpush.msra.mxu0 %v274
    %2682 = vmatpush.msra.mxu0 %v265
    %2683 = vmatpush.msra.mxu0 %v256
    %2684 = vmatpush.msra.mxu0 %v247
    %2685 = vmatpush.msra.mxu0 %v238
    %2686 = vmatmul.f32.gmra.mxu0 %v63
    %v2687 = vpop.f32.mrf.mxu0
    %v2688 = vadd.f32 %v2668, %v2687
    %2689 = vdwg.mxu0
    %2690 = vmatpush.msra.mxu0 %v517
    %2691 = vmatpush.msra.mxu0 %v508
    %2692 = vmatpush.msra.mxu0 %v499
    %2693 = vmatpush.msra.mxu0 %v490
    %2694 = vmatpush.msra.mxu0 %v481
    %2695 = vmatpush.msra.mxu0 %v472
    %2696 = vmatpush.msra.mxu0 %v463
    %2697 = vmatpush.msra.mxu0 %v454
    %2698 = vmatpush.msra.mxu0 %v445
    %2699 = vmatpush.msra.mxu0 %v436
    %2700 = vmatpush.msra.mxu0 %v427
    %2701 = vmatpush.msra.mxu0 %v418
    %2702 = vmatpush.msra.mxu0 %v409
    %2703 = vmatpush.msra.mxu0 %v400
    %2704 = vmatpush.msra.mxu0 %v391
    %2705 = vmatpush.msra.mxu0 %v382
    %2706 = vmatmul.f32.gmra.mxu0 %v64
    %v2707 = vpop.f32.mrf.mxu0
    %v2708 = vadd.f32 %v2688, %v2707
    %2709 = vdwg.mxu0
    %2710 = vmatpush.msra.mxu0 %v661
    %2711 = vmatpush.msra.mxu0 %v652
    %2712 = vmatpush.msra.mxu0 %v643
    %2713 = vmatpush.msra.mxu0 %v634
    %2714 = vmatpush.msra.mxu0 %v625
    %2715 = vmatpush.msra.mxu0 %v616
    %2716 = vmatpush.msra.mxu0 %v607
    %2717 = vmatpush.msra.mxu0 %v598
    %2718 = vmatpush.msra.mxu0 %v589
    %2719 = vmatpush.msra.mxu0 %v580
    %2720 = vmatpush.msra.mxu0 %v571
    %2721 = vmatpush.msra.mxu0 %v562
    %2722 = vmatpush.msra.mxu0 %v553
    %2723 = vmatpush.msra.mxu0 %v544
    %2724 = vmatpush.msra.mxu0 %v535
    %2725 = vmatpush.msra.mxu0 %v526
    %2726 = vmatmul.f32.gmra.mxu0 %v65
    %v2727 = vpop.f32.mrf.mxu0
    %v2728 = vadd.f32 %v2708, %v2727
    %2729 = vdwg.mxu0
    %2730 = vmatpush.msra.mxu0 %v805
    %2731 = vmatpush.msra.mxu0 %v796
    %2732 = vmatpush.msra.mxu0 %v787
    %2733 = vmatpush.msra.mxu0 %v778
    %2734 = vmatpush.msra.mxu0 %v769
    %2735 = vmatpush.msra.mxu0 %v760
    %2736 = vmatpush.msra.mxu0 %v751
    %2737 = vmatpush.msra.mxu0 %v742
    %2738 = vmatpush.msra.mxu0 %v733
    %2739 = vmatpush.msra.mxu0 %v724
    %2740 = vmatpush.msra.mxu0 %v715
    %2741 = vmatpush.msra.mxu0 %v706
    %2742 = vmatpush.msra.mxu0 %v697
    %2743 = vmatpush.msra.mxu0 %v688
    %2744 = vmatpush.msra.mxu0 %v679
    %2745 = vmatpush.msra.mxu0 %v670
    %2746 = vmatmul.f32.gmra.mxu0 %v66
    %v2747 = vpop.f32.mrf.mxu0
    %v2748 = vadd.f32 %v2728, %v2747
    %2749 = vdwg.mxu0
    %2750 = vmatpush.msra.mxu0 %v949
    %2751 = vmatpush.msra.mxu0 %v940
    %2752 = vmatpush.msra.mxu0 %v931
    %2753 = vmatpush.msra.mxu0 %v922
    %2754 = vmatpush.msra.mxu0 %v913
    %2755 = vmatpush.msra.mxu0 %v904
    %2756 = vmatpush.msra.mxu0 %v895
    %2757 = vmatpush.msra.mxu0 %v886
    %2758 = vmatpush.msra.mxu0 %v877
    %2759 = vmatpush.msra.mxu0 %v868
    %2760 = vmatpush.msra.mxu0 %v859
    %2761 = vmatpush.msra.mxu0 %v850
    %2762 = vmatpush.msra.mxu0 %v841
    %2763 = vmatpush.msra.mxu0 %v832
    %2764 = vmatpush.msra.mxu0 %v823
    %2765 = vmatpush.msra.mxu0 %v814
    %2766 = vmatmul.f32.gmra.mxu0 %v67
    %v2767 = vpop.f32.mrf.mxu0
    %v2768 = vadd.f32 %v2748, %v2767
    %2769 = vdwg.mxu0
    %2770 = vmatpush.msra.mxu0 %v1093
    %2771 = vmatpush.msra.mxu0 %v1084
    %2772 = vmatpush.msra.mxu0 %v1075
    %2773 = vmatpush.msra.mxu0 %v1066
    %2774 = vmatpush.msra.mxu0 %v1057
    %2775 = vmatpush.msra.mxu0 %v1048
    %2776 = vmatpush.msra.mxu0 %v1039
    %2777 = vmatpush.msra.mxu0 %v1030
    %2778 = vmatpush.msra.mxu0 %v1021
    %2779 = vmatpush.msra.mxu0 %v1012
    %2780 = vmatpush.msra.mxu0 %v1003
    %2781 = vmatpush.msra.mxu0 %v994
    %2782 = vmatpush.msra.mxu0 %v985
    %2783 = vmatpush.msra.mxu0 %v976
    %2784 = vmatpush.msra.mxu0 %v967
    %2785 = vmatpush.msra.mxu0 %v958
    %2786 = vmatmul.f32.gmra.mxu0 %v68
    %v2787 = vpop.f32.mrf.mxu0
    %v2788 = vadd.f32 %v2768, %v2787
    %2789 = vdwg.mxu0
    %2790 = vmatpush.msra.mxu0 %v1237
    %2791 = vmatpush.msra.mxu0 %v1228
    %2792 = vmatpush.msra.mxu0 %v1219
    %2793 = vmatpush.msra.mxu0 %v1210
    %2794 = vmatpush.msra.mxu0 %v1201
    %2795 = vmatpush.msra.mxu0 %v1192
    %2796 = vmatpush.msra.mxu0 %v1183
    %2797 = vmatpush.msra.mxu0 %v1174
    %2798 = vmatpush.msra.mxu0 %v1165
    %2799 = vmatpush.msra.mxu0 %v1156
    %2800 = vmatpush.msra.mxu0 %v1147
    %2801 = vmatpush.msra.mxu0 %v1138
    %2802 = vmatpush.msra.mxu0 %v1129
    %2803 = vmatpush.msra.mxu0 %v1120
    %2804 = vmatpush.msra.mxu0 %v1111
    %2805 = vmatpush.msra.mxu0 %v1102
    %2806 = vmatmul.f32.gmra.mxu0 %v69
    %v2807 = vpop.f32.mrf.mxu0
    %v2808 = vadd.f32 %v2788, %v2807
    %2809 = vdwg.mxu0
    %2810 = vmatpush.msra.mxu0 %v1381
    %2811 = vmatpush.msra.mxu0 %v1372
    %2812 = vmatpush.msra.mxu0 %v1363
    %2813 = vmatpush.msra.mxu0 %v1354
    %2814 = vmatpush.msra.mxu0 %v1345
    %2815 = vmatpush.msra.mxu0 %v1336
    %2816 = vmatpush.msra.mxu0 %v1327
    %2817 = vmatpush.msra.mxu0 %v1318
    %2818 = vmatpush.msra.mxu0 %v1309
    %2819 = vmatpush.msra.mxu0 %v1300
    %2820 = vmatpush.msra.mxu0 %v1291
    %2821 = vmatpush.msra.mxu0 %v1282
    %2822 = vmatpush.msra.mxu0 %v1273
    %2823 = vmatpush.msra.mxu0 %v1264
    %2824 = vmatpush.msra.mxu0 %v1255
    %2825 = vmatpush.msra.mxu0 %v1246
    %2826 = vmatmul.f32.gmra.mxu0 %v70
    %v2827 = vpop.f32.mrf.mxu0
    %v2828 = vadd.f32 %v2808, %v2827
    %2829 = vdwg.mxu0
    %2830 = vmatpush.msra.mxu0 %v1525
    %2831 = vmatpush.msra.mxu0 %v1516
    %2832 = vmatpush.msra.mxu0 %v1507
    %2833 = vmatpush.msra.mxu0 %v1498
    %2834 = vmatpush.msra.mxu0 %v1489
    %2835 = vmatpush.msra.mxu0 %v1480
    %2836 = vmatpush.msra.mxu0 %v1471
    %2837 = vmatpush.msra.mxu0 %v1462
    %2838 = vmatpush.msra.mxu0 %v1453
    %2839 = vmatpush.msra.mxu0 %v1444
    %2840 = vmatpush.msra.mxu0 %v1435
    %2841 = vmatpush.msra.mxu0 %v1426
    %2842 = vmatpush.msra.mxu0 %v1417
    %2843 = vmatpush.msra.mxu0 %v1408
    %2844 = vmatpush.msra.mxu0 %v1399
    %2845 = vmatpush.msra.mxu0 %v1390
    %2846 = vmatmul.f32.gmra.mxu0 %v71
    %v2847 = vpop.f32.mrf.mxu0
    %v2848 = vadd.f32 %v2828, %v2847
    %2849 = vdwg.mxu0
    %2850 = vmatpush.msra.mxu0 0.0
    %2851 = vmatpush.msra.mxu0 0.0
    %2852 = vmatpush.msra.mxu0 0.0
    %2853 = vmatpush.msra.mxu0 0.0
    %2854 = vmatpush.msra.mxu0 0.0
    %2855 = vmatpush.msra.mxu0 0.0
    %2856 = vmatpush.msra.mxu0 0.0
    %2857 = vmatpush.msra.mxu0 0.0
    %2858 = vmatpush.msra.mxu0 0.0
    %2859 = vmatpush.msra.mxu0 0.0
    %2860 = vmatpush.msra.mxu0 0.0
    %2861 = vmatpush.msra.mxu0 0.0
    %2862 = vmatpush.msra.mxu0 0.0
    %2863 = vmatpush.msra.mxu0 0.0
    %2864 = vmatpush.msra.mxu0 %v1543
    %2865 = vmatpush.msra.mxu0 %v1534
    %2866 = vmatmul.f32.gmra.mxu0 %v1548
    %v2867 = vpop.f32.mrf.mxu0
    %v2868 = vadd.f32 %v2848, %v2867
    %2869 = vdwg.mxu0
    %2870 = vmatpush.msra.mxu0 %v230
    %2871 = vmatpush.msra.mxu0 %v221
    %2872 = vmatpush.msra.mxu0 %v212
    %2873 = vmatpush.msra.mxu0 %v203
    %2874 = vmatpush.msra.mxu0 %v194
    %2875 = vmatpush.msra.mxu0 %v185
    %2876 = vmatpush.msra.mxu0 %v176
    %2877 = vmatpush.msra.mxu0 %v167
    %2878 = vmatpush.msra.mxu0 %v158
    %2879 = vmatpush.msra.mxu0 %v149
    %2880 = vmatpush.msra.mxu0 %v140
    %2881 = vmatpush.msra.mxu0 %v131
    %2882 = vmatpush.msra.mxu0 %v122
    %2883 = vmatpush.msra.mxu0 %v113
    %2884 = vmatpush.msra.mxu0 %v104
    %2885 = vmatpush.msra.mxu0 %v95
    %2886 = vmatmul.f32.gmra.mxu0 %v62
    %v2887 = vpop.f32.mrf.mxu0
    %v2888 = vadd.f32 0.0, %v2887
    %2889 = vdwg.mxu0
    %2890 = vmatpush.msra.mxu0 %v374
    %2891 = vmatpush.msra.mxu0 %v365
    %2892 = vmatpush.msra.mxu0 %v356
    %2893 = vmatpush.msra.mxu0 %v347
    %2894 = vmatpush.msra.mxu0 %v338
    %2895 = vmatpush.msra.mxu0 %v329
    %2896 = vmatpush.msra.mxu0 %v320
    %2897 = vmatpush.msra.mxu0 %v311
    %2898 = vmatpush.msra.mxu0 %v302
    %2899 = vmatpush.msra.mxu0 %v293
    %2900 = vmatpush.msra.mxu0 %v284
    %2901 = vmatpush.msra.mxu0 %v275
    %2902 = vmatpush.msra.mxu0 %v266
    %2903 = vmatpush.msra.mxu0 %v257
    %2904 = vmatpush.msra.mxu0 %v248
    %2905 = vmatpush.msra.mxu0 %v239
    %2906 = vmatmul.f32.gmra.mxu0 %v63
    %v2907 = vpop.f32.mrf.mxu0
    %v2908 = vadd.f32 %v2888, %v2907
    %2909 = vdwg.mxu0
    %2910 = vmatpush.msra.mxu0 %v518
    %2911 = vmatpush.msra.mxu0 %v509
    %2912 = vmatpush.msra.mxu0 %v500
    %2913 = vmatpush.msra.mxu0 %v491
    %2914 = vmatpush.msra.mxu0 %v482
    %2915 = vmatpush.msra.mxu0 %v473
    %2916 = vmatpush.msra.mxu0 %v464
    %2917 = vmatpush.msra.mxu0 %v455
    %2918 = vmatpush.msra.mxu0 %v446
    %2919 = vmatpush.msra.mxu0 %v437
    %2920 = vmatpush.msra.mxu0 %v428
    %2921 = vmatpush.msra.mxu0 %v419
    %2922 = vmatpush.msra.mxu0 %v410
    %2923 = vmatpush.msra.mxu0 %v401
    %2924 = vmatpush.msra.mxu0 %v392
    %2925 = vmatpush.msra.mxu0 %v383
    %2926 = vmatmul.f32.gmra.mxu0 %v64
    %v2927 = vpop.f32.mrf.mxu0
    %v2928 = vadd.f32 %v2908, %v2927
    %2929 = vdwg.mxu0
    %2930 = vmatpush.msra.mxu0 %v662
    %2931 = vmatpush.msra.mxu0 %v653
    %2932 = vmatpush.msra.mxu0 %v644
    %2933 = vmatpush.msra.mxu0 %v635
    %2934 = vmatpush.msra.mxu0 %v626
    %2935 = vmatpush.msra.mxu0 %v617
    %2936 = vmatpush.msra.mxu0 %v608
    %2937 = vmatpush.msra.mxu0 %v599
    %2938 = vmatpush.msra.mxu0 %v590
    %2939 = vmatpush.msra.mxu0 %v581
    %2940 = vmatpush.msra.mxu0 %v572
    %2941 = vmatpush.msra.mxu0 %v563
    %2942 = vmatpush.msra.mxu0 %v554
    %2943 = vmatpush.msra.mxu0 %v545
    %2944 = vmatpush.msra.mxu0 %v536
    %2945 = vmatpush.msra.mxu0 %v527
    %2946 = vmatmul.f32.gmra.mxu0 %v65
    %v2947 = vpop.f32.mrf.mxu0
    %v2948 = vadd.f32 %v2928, %v2947
    %2949 = vdwg.mxu0
    %2950 = vmatpush.msra.mxu0 %v806
    %2951 = vmatpush.msra.mxu0 %v797
    %2952 = vmatpush.msra.mxu0 %v788
    %2953 = vmatpush.msra.mxu0 %v779
    %2954 = vmatpush.msra.mxu0 %v770
    %2955 = vmatpush.msra.mxu0 %v761
    %2956 = vmatpush.msra.mxu0 %v752
    %2957 = vmatpush.msra.mxu0 %v743
    %2958 = vmatpush.msra.mxu0 %v734
    %2959 = vmatpush.msra.mxu0 %v725
    %2960 = vmatpush.msra.mxu0 %v716
    %2961 = vmatpush.msra.mxu0 %v707
    %2962 = vmatpush.msra.mxu0 %v698
    %2963 = vmatpush.msra.mxu0 %v689
    %2964 = vmatpush.msra.mxu0 %v680
    %2965 = vmatpush.msra.mxu0 %v671
    %2966 = vmatmul.f32.gmra.mxu0 %v66
    %v2967 = vpop.f32.mrf.mxu0
    %v2968 = vadd.f32 %v2948, %v2967
    %2969 = vdwg.mxu0
    %2970 = vmatpush.msra.mxu0 %v950
    %2971 = vmatpush.msra.mxu0 %v941
    %2972 = vmatpush.msra.mxu0 %v932
    %2973 = vmatpush.msra.mxu0 %v923
    %2974 = vmatpush.msra.mxu0 %v914
    %2975 = vmatpush.msra.mxu0 %v905
    %2976 = vmatpush.msra.mxu0 %v896
    %2977 = vmatpush.msra.mxu0 %v887
    %2978 = vmatpush.msra.mxu0 %v878
    %2979 = vmatpush.msra.mxu0 %v869
    %2980 = vmatpush.msra.mxu0 %v860
    %2981 = vmatpush.msra.mxu0 %v851
    %2982 = vmatpush.msra.mxu0 %v842
    %2983 = vmatpush.msra.mxu0 %v833
    %2984 = vmatpush.msra.mxu0 %v824
    %2985 = vmatpush.msra.mxu0 %v815
    %2986 = vmatmul.f32.gmra.mxu0 %v67
    %v2987 = vpop.f32.mrf.mxu0
    %v2988 = vadd.f32 %v2968, %v2987
    %2989 = vdwg.mxu0
    %2990 = vmatpush.msra.mxu0 %v1094
    %2991 = vmatpush.msra.mxu0 %v1085
    %2992 = vmatpush.msra.mxu0 %v1076
    %2993 = vmatpush.msra.mxu0 %v1067
    %2994 = vmatpush.msra.mxu0 %v1058
    %2995 = vmatpush.msra.mxu0 %v1049
    %2996 = vmatpush.msra.mxu0 %v1040
    %2997 = vmatpush.msra.mxu0 %v1031
    %2998 = vmatpush.msra.mxu0 %v1022
    %2999 = vmatpush.msra.mxu0 %v1013
    %3000 = vmatpush.msra.mxu0 %v1004
    %3001 = vmatpush.msra.mxu0 %v995
    %3002 = vmatpush.msra.mxu0 %v986
    %3003 = vmatpush.msra.mxu0 %v977
    %3004 = vmatpush.msra.mxu0 %v968
    %3005 = vmatpush.msra.mxu0 %v959
    %3006 = vmatmul.f32.gmra.mxu0 %v68
    %v3007 = vpop.f32.mrf.mxu0
    %v3008 = vadd.f32 %v2988, %v3007
    %3009 = vdwg.mxu0
    %3010 = vmatpush.msra.mxu0 %v1238
    %3011 = vmatpush.msra.mxu0 %v1229
    %3012 = vmatpush.msra.mxu0 %v1220
    %3013 = vmatpush.msra.mxu0 %v1211
    %3014 = vmatpush.msra.mxu0 %v1202
    %3015 = vmatpush.msra.mxu0 %v1193
    %3016 = vmatpush.msra.mxu0 %v1184
    %3017 = vmatpush.msra.mxu0 %v1175
    %3018 = vmatpush.msra.mxu0 %v1166
    %3019 = vmatpush.msra.mxu0 %v1157
    %3020 = vmatpush.msra.mxu0 %v1148
    %3021 = vmatpush.msra.mxu0 %v1139
    %3022 = vmatpush.msra.mxu0 %v1130
    %3023 = vmatpush.msra.mxu0 %v1121
    %3024 = vmatpush.msra.mxu0 %v1112
    %3025 = vmatpush.msra.mxu0 %v1103
    %3026 = vmatmul.f32.gmra.mxu0 %v69
    %v3027 = vpop.f32.mrf.mxu0
    %v3028 = vadd.f32 %v3008, %v3027
    %3029 = vdwg.mxu0
    %3030 = vmatpush.msra.mxu0 %v1382
    %3031 = vmatpush.msra.mxu0 %v1373
    %3032 = vmatpush.msra.mxu0 %v1364
    %3033 = vmatpush.msra.mxu0 %v1355
    %3034 = vmatpush.msra.mxu0 %v1346
    %3035 = vmatpush.msra.mxu0 %v1337
    %3036 = vmatpush.msra.mxu0 %v1328
    %3037 = vmatpush.msra.mxu0 %v1319
    %3038 = vmatpush.msra.mxu0 %v1310
    %3039 = vmatpush.msra.mxu0 %v1301
    %3040 = vmatpush.msra.mxu0 %v1292
    %3041 = vmatpush.msra.mxu0 %v1283
    %3042 = vmatpush.msra.mxu0 %v1274
    %3043 = vmatpush.msra.mxu0 %v1265
    %3044 = vmatpush.msra.mxu0 %v1256
    %3045 = vmatpush.msra.mxu0 %v1247
    %3046 = vmatmul.f32.gmra.mxu0 %v70
    %v3047 = vpop.f32.mrf.mxu0
    %v3048 = vadd.f32 %v3028, %v3047
    %3049 = vdwg.mxu0
    %3050 = vmatpush.msra.mxu0 %v1526
    %3051 = vmatpush.msra.mxu0 %v1517
    %3052 = vmatpush.msra.mxu0 %v1508
    %3053 = vmatpush.msra.mxu0 %v1499
    %3054 = vmatpush.msra.mxu0 %v1490
    %3055 = vmatpush.msra.mxu0 %v1481
    %3056 = vmatpush.msra.mxu0 %v1472
    %3057 = vmatpush.msra.mxu0 %v1463
    %3058 = vmatpush.msra.mxu0 %v1454
    %3059 = vmatpush.msra.mxu0 %v1445
    %3060 = vmatpush.msra.mxu0 %v1436
    %3061 = vmatpush.msra.mxu0 %v1427
    %3062 = vmatpush.msra.mxu0 %v1418
    %3063 = vmatpush.msra.mxu0 %v1409
    %3064 = vmatpush.msra.mxu0 %v1400
    %3065 = vmatpush.msra.mxu0 %v1391
    %3066 = vmatmul.f32.gmra.mxu0 %v71
    %v3067 = vpop.f32.mrf.mxu0
    %v3068 = vadd.f32 %v3048, %v3067
    %3069 = vdwg.mxu0
    %3070 = vmatpush.msra.mxu0 0.0
    %3071 = vmatpush.msra.mxu0 0.0
    %3072 = vmatpush.msra.mxu0 0.0
    %3073 = vmatpush.msra.mxu0 0.0
    %3074 = vmatpush.msra.mxu0 0.0
    %3075 = vmatpush.msra.mxu0 0.0
    %3076 = vmatpush.msra.mxu0 0.0
    %3077 = vmatpush.msra.mxu0 0.0
    %3078 = vmatpush.msra.mxu0 0.0
    %3079 = vmatpush.msra.mxu0 0.0
    %3080 = vmatpush.msra.mxu0 0.0
    %3081 = vmatpush.msra.mxu0 0.0
    %3082 = vmatpush.msra.mxu0 0.0
    %3083 = vmatpush.msra.mxu0 0.0
    %3084 = vmatpush.msra.mxu0 %v1544
    %3085 = vmatpush.msra.mxu0 %v1535
    %3086 = vmatmul.f32.gmra.mxu0 %v1548
    %v3087 = vpop.f32.mrf.mxu0
    %v3088 = vadd.f32 %v3068, %v3087
    %3089 = vdwg.mxu0
    %3090 = vmatpush.msra.mxu0 %v231
    %3091 = vmatpush.msra.mxu0 %v222
    %3092 = vmatpush.msra.mxu0 %v213
    %3093 = vmatpush.msra.mxu0 %v204
    %3094 = vmatpush.msra.mxu0 %v195
    %3095 = vmatpush.msra.mxu0 %v186
    %3096 = vmatpush.msra.mxu0 %v177
    %3097 = vmatpush.msra.mxu0 %v168
    %3098 = vmatpush.msra.mxu0 %v159
    %3099 = vmatpush.msra.mxu0 %v150
    %3100 = vmatpush.msra.mxu0 %v141
    %3101 = vmatpush.msra.mxu0 %v132
    %3102 = vmatpush.msra.mxu0 %v123
    %3103 = vmatpush.msra.mxu0 %v114
    %3104 = vmatpush.msra.mxu0 %v105
    %3105 = vmatpush.msra.mxu0 %v96
    %3106 = vmatmul.f32.gmra.mxu0 %v62
    %v3107 = vpop.f32.mrf.mxu0
    %v3108 = vadd.f32 0.0, %v3107
    %3109 = vdwg.mxu0
    %3110 = vmatpush.msra.mxu0 %v375
    %3111 = vmatpush.msra.mxu0 %v366
    %3112 = vmatpush.msra.mxu0 %v357
    %3113 = vmatpush.msra.mxu0 %v348
    %3114 = vmatpush.msra.mxu0 %v339
    %3115 = vmatpush.msra.mxu0 %v330
    %3116 = vmatpush.msra.mxu0 %v321
    %3117 = vmatpush.msra.mxu0 %v312
    %3118 = vmatpush.msra.mxu0 %v303
    %3119 = vmatpush.msra.mxu0 %v294
    %3120 = vmatpush.msra.mxu0 %v285
    %3121 = vmatpush.msra.mxu0 %v276
    %3122 = vmatpush.msra.mxu0 %v267
    %3123 = vmatpush.msra.mxu0 %v258
    %3124 = vmatpush.msra.mxu0 %v249
    %3125 = vmatpush.msra.mxu0 %v240
    %3126 = vmatmul.f32.gmra.mxu0 %v63
    %v3127 = vpop.f32.mrf.mxu0
    %v3128 = vadd.f32 %v3108, %v3127
    %3129 = vdwg.mxu0
    %3130 = vmatpush.msra.mxu0 %v519
    %3131 = vmatpush.msra.mxu0 %v510
    %3132 = vmatpush.msra.mxu0 %v501
    %3133 = vmatpush.msra.mxu0 %v492
    %3134 = vmatpush.msra.mxu0 %v483
    %3135 = vmatpush.msra.mxu0 %v474
    %3136 = vmatpush.msra.mxu0 %v465
    %3137 = vmatpush.msra.mxu0 %v456
    %3138 = vmatpush.msra.mxu0 %v447
    %3139 = vmatpush.msra.mxu0 %v438
    %3140 = vmatpush.msra.mxu0 %v429
    %3141 = vmatpush.msra.mxu0 %v420
    %3142 = vmatpush.msra.mxu0 %v411
    %3143 = vmatpush.msra.mxu0 %v402
    %3144 = vmatpush.msra.mxu0 %v393
    %3145 = vmatpush.msra.mxu0 %v384
    %3146 = vmatmul.f32.gmra.mxu0 %v64
    %v3147 = vpop.f32.mrf.mxu0
    %v3148 = vadd.f32 %v3128, %v3147
    %3149 = vdwg.mxu0
    %3150 = vmatpush.msra.mxu0 %v663
    %3151 = vmatpush.msra.mxu0 %v654
    %3152 = vmatpush.msra.mxu0 %v645
    %3153 = vmatpush.msra.mxu0 %v636
    %3154 = vmatpush.msra.mxu0 %v627
    %3155 = vmatpush.msra.mxu0 %v618
    %3156 = vmatpush.msra.mxu0 %v609
    %3157 = vmatpush.msra.mxu0 %v600
    %3158 = vmatpush.msra.mxu0 %v591
    %3159 = vmatpush.msra.mxu0 %v582
    %3160 = vmatpush.msra.mxu0 %v573
    %3161 = vmatpush.msra.mxu0 %v564
    %3162 = vmatpush.msra.mxu0 %v555
    %3163 = vmatpush.msra.mxu0 %v546
    %3164 = vmatpush.msra.mxu0 %v537
    %3165 = vmatpush.msra.mxu0 %v528
    %3166 = vmatmul.f32.gmra.mxu0 %v65
    %v3167 = vpop.f32.mrf.mxu0
    %v3168 = vadd.f32 %v3148, %v3167
    %3169 = vdwg.mxu0
    %3170 = vmatpush.msra.mxu0 %v807
    %3171 = vmatpush.msra.mxu0 %v798
    %3172 = vmatpush.msra.mxu0 %v789
    %3173 = vmatpush.msra.mxu0 %v780
    %3174 = vmatpush.msra.mxu0 %v771
    %3175 = vmatpush.msra.mxu0 %v762
    %3176 = vmatpush.msra.mxu0 %v753
    %3177 = vmatpush.msra.mxu0 %v744
    %3178 = vmatpush.msra.mxu0 %v735
    %3179 = vmatpush.msra.mxu0 %v726
    %3180 = vmatpush.msra.mxu0 %v717
    %3181 = vmatpush.msra.mxu0 %v708
    %3182 = vmatpush.msra.mxu0 %v699
    %3183 = vmatpush.msra.mxu0 %v690
    %3184 = vmatpush.msra.mxu0 %v681
    %3185 = vmatpush.msra.mxu0 %v672
    %3186 = vmatmul.f32.gmra.mxu0 %v66
    %v3187 = vpop.f32.mrf.mxu0
    %v3188 = vadd.f32 %v3168, %v3187
    %3189 = vdwg.mxu0
    %3190 = vmatpush.msra.mxu0 %v951
    %3191 = vmatpush.msra.mxu0 %v942
    %3192 = vmatpush.msra.mxu0 %v933
    %3193 = vmatpush.msra.mxu0 %v924
    %3194 = vmatpush.msra.mxu0 %v915
    %3195 = vmatpush.msra.mxu0 %v906
    %3196 = vmatpush.msra.mxu0 %v897
    %3197 = vmatpush.msra.mxu0 %v888
    %3198 = vmatpush.msra.mxu0 %v879
    %3199 = vmatpush.msra.mxu0 %v870
    %3200 = vmatpush.msra.mxu0 %v861
    %3201 = vmatpush.msra.mxu0 %v852
    %3202 = vmatpush.msra.mxu0 %v843
    %3203 = vmatpush.msra.mxu0 %v834
    %3204 = vmatpush.msra.mxu0 %v825
    %3205 = vmatpush.msra.mxu0 %v816
    %3206 = vmatmul.f32.gmra.mxu0 %v67
    %v3207 = vpop.f32.mrf.mxu0
    %v3208 = vadd.f32 %v3188, %v3207
    %3209 = vdwg.mxu0
    %3210 = vmatpush.msra.mxu0 %v1095
    %3211 = vmatpush.msra.mxu0 %v1086
    %3212 = vmatpush.msra.mxu0 %v1077
    %3213 = vmatpush.msra.mxu0 %v1068
    %3214 = vmatpush.msra.mxu0 %v1059
    %3215 = vmatpush.msra.mxu0 %v1050
    %3216 = vmatpush.msra.mxu0 %v1041
    %3217 = vmatpush.msra.mxu0 %v1032
    %3218 = vmatpush.msra.mxu0 %v1023
    %3219 = vmatpush.msra.mxu0 %v1014
    %3220 = vmatpush.msra.mxu0 %v1005
    %3221 = vmatpush.msra.mxu0 %v996
    %3222 = vmatpush.msra.mxu0 %v987
    %3223 = vmatpush.msra.mxu0 %v978
    %3224 = vmatpush.msra.mxu0 %v969
    %3225 = vmatpush.msra.mxu0 %v960
    %3226 = vmatmul.f32.gmra.mxu0 %v68
    %v3227 = vpop.f32.mrf.mxu0
    %v3228 = vadd.f32 %v3208, %v3227
    %3229 = vdwg.mxu0
    %3230 = vmatpush.msra.mxu0 %v1239
    %3231 = vmatpush.msra.mxu0 %v1230
    %3232 = vmatpush.msra.mxu0 %v1221
    %3233 = vmatpush.msra.mxu0 %v1212
    %3234 = vmatpush.msra.mxu0 %v1203
    %3235 = vmatpush.msra.mxu0 %v1194
    %3236 = vmatpush.msra.mxu0 %v1185
    %3237 = vmatpush.msra.mxu0 %v1176
    %3238 = vmatpush.msra.mxu0 %v1167
    %3239 = vmatpush.msra.mxu0 %v1158
    %3240 = vmatpush.msra.mxu0 %v1149
    %3241 = vmatpush.msra.mxu0 %v1140
    %3242 = vmatpush.msra.mxu0 %v1131
    %3243 = vmatpush.msra.mxu0 %v1122
    %3244 = vmatpush.msra.mxu0 %v1113
    %3245 = vmatpush.msra.mxu0 %v1104
    %3246 = vmatmul.f32.gmra.mxu0 %v69
    %v3247 = vpop.f32.mrf.mxu0
    %v3248 = vadd.f32 %v3228, %v3247
    %3249 = vdwg.mxu0
    %3250 = vmatpush.msra.mxu0 %v1383
    %3251 = vmatpush.msra.mxu0 %v1374
    %3252 = vmatpush.msra.mxu0 %v1365
    %3253 = vmatpush.msra.mxu0 %v1356
    %3254 = vmatpush.msra.mxu0 %v1347
    %3255 = vmatpush.msra.mxu0 %v1338
    %3256 = vmatpush.msra.mxu0 %v1329
    %3257 = vmatpush.msra.mxu0 %v1320
    %3258 = vmatpush.msra.mxu0 %v1311
    %3259 = vmatpush.msra.mxu0 %v1302
    %3260 = vmatpush.msra.mxu0 %v1293
    %3261 = vmatpush.msra.mxu0 %v1284
    %3262 = vmatpush.msra.mxu0 %v1275
    %3263 = vmatpush.msra.mxu0 %v1266
    %3264 = vmatpush.msra.mxu0 %v1257
    %3265 = vmatpush.msra.mxu0 %v1248
    %3266 = vmatmul.f32.gmra.mxu0 %v70
    %v3267 = vpop.f32.mrf.mxu0
    %v3268 = vadd.f32 %v3248, %v3267
    %3269 = vdwg.mxu0
    %3270 = vmatpush.msra.mxu0 %v1527
    %3271 = vmatpush.msra.mxu0 %v1518
    %3272 = vmatpush.msra.mxu0 %v1509
    %3273 = vmatpush.msra.mxu0 %v1500
    %3274 = vmatpush.msra.mxu0 %v1491
    %3275 = vmatpush.msra.mxu0 %v1482
    %3276 = vmatpush.msra.mxu0 %v1473
    %3277 = vmatpush.msra.mxu0 %v1464
    %3278 = vmatpush.msra.mxu0 %v1455
    %3279 = vmatpush.msra.mxu0 %v1446
    %3280 = vmatpush.msra.mxu0 %v1437
    %3281 = vmatpush.msra.mxu0 %v1428
    %3282 = vmatpush.msra.mxu0 %v1419
    %3283 = vmatpush.msra.mxu0 %v1410
    %3284 = vmatpush.msra.mxu0 %v1401
    %3285 = vmatpush.msra.mxu0 %v1392
    %3286 = vmatmul.f32.gmra.mxu0 %v71
    %v3287 = vpop.f32.mrf.mxu0
    %v3288 = vadd.f32 %v3268, %v3287
    %3289 = vdwg.mxu0
    %3290 = vmatpush.msra.mxu0 0.0
    %3291 = vmatpush.msra.mxu0 0.0
    %3292 = vmatpush.msra.mxu0 0.0
    %3293 = vmatpush.msra.mxu0 0.0
    %3294 = vmatpush.msra.mxu0 0.0
    %3295 = vmatpush.msra.mxu0 0.0
    %3296 = vmatpush.msra.mxu0 0.0
    %3297 = vmatpush.msra.mxu0 0.0
    %3298 = vmatpush.msra.mxu0 0.0
    %3299 = vmatpush.msra.mxu0 0.0
    %3300 = vmatpush.msra.mxu0 0.0
    %3301 = vmatpush.msra.mxu0 0.0
    %3302 = vmatpush.msra.mxu0 0.0
    %3303 = vmatpush.msra.mxu0 0.0
    %3304 = vmatpush.msra.mxu0 %v1545
    %3305 = vmatpush.msra.mxu0 %v1536
    %3306 = vmatmul.f32.gmra.mxu0 %v1548
    %v3307 = vpop.f32.mrf.mxu0
    %v3308 = vadd.f32 %v3288, %v3307
    %3309 = vdwg.mxu0
    %3310 = vmatpush.msra.mxu0 %v232
    %3311 = vmatpush.msra.mxu0 %v223
    %3312 = vmatpush.msra.mxu0 %v214
    %3313 = vmatpush.msra.mxu0 %v205
    %3314 = vmatpush.msra.mxu0 %v196
    %3315 = vmatpush.msra.mxu0 %v187
    %3316 = vmatpush.msra.mxu0 %v178
    %3317 = vmatpush.msra.mxu0 %v169
    %3318 = vmatpush.msra.mxu0 %v160
    %3319 = vmatpush.msra.mxu0 %v151
    %3320 = vmatpush.msra.mxu0 %v142
    %3321 = vmatpush.msra.mxu0 %v133
    %3322 = vmatpush.msra.mxu0 %v124
    %3323 = vmatpush.msra.mxu0 %v115
    %3324 = vmatpush.msra.mxu0 %v106
    %3325 = vmatpush.msra.mxu0 %v97
    %3326 = vmatmul.f32.gmra.mxu0 %v62
    %v3327 = vpop.f32.mrf.mxu0
    %v3328 = vadd.f32 0.0, %v3327
    %3329 = vdwg.mxu0
    %3330 = vmatpush.msra.mxu0 %v376
    %3331 = vmatpush.msra.mxu0 %v367
    %3332 = vmatpush.msra.mxu0 %v358
    %3333 = vmatpush.msra.mxu0 %v349
    %3334 = vmatpush.msra.mxu0 %v340
    %3335 = vmatpush.msra.mxu0 %v331
    %3336 = vmatpush.msra.mxu0 %v322
    %3337 = vmatpush.msra.mxu0 %v313
    %3338 = vmatpush.msra.mxu0 %v304
    %3339 = vmatpush.msra.mxu0 %v295
    %3340 = vmatpush.msra.mxu0 %v286
    %3341 = vmatpush.msra.mxu0 %v277
    %3342 = vmatpush.msra.mxu0 %v268
    %3343 = vmatpush.msra.mxu0 %v259
    %3344 = vmatpush.msra.mxu0 %v250
    %3345 = vmatpush.msra.mxu0 %v241
    %3346 = vmatmul.f32.gmra.mxu0 %v63
    %v3347 = vpop.f32.mrf.mxu0
    %v3348 = vadd.f32 %v3328, %v3347
    %3349 = vdwg.mxu0
    %3350 = vmatpush.msra.mxu0 %v520
    %3351 = vmatpush.msra.mxu0 %v511
    %3352 = vmatpush.msra.mxu0 %v502
    %3353 = vmatpush.msra.mxu0 %v493
    %3354 = vmatpush.msra.mxu0 %v484
    %3355 = vmatpush.msra.mxu0 %v475
    %3356 = vmatpush.msra.mxu0 %v466
    %3357 = vmatpush.msra.mxu0 %v457
    %3358 = vmatpush.msra.mxu0 %v448
    %3359 = vmatpush.msra.mxu0 %v439
    %3360 = vmatpush.msra.mxu0 %v430
    %3361 = vmatpush.msra.mxu0 %v421
    %3362 = vmatpush.msra.mxu0 %v412
    %3363 = vmatpush.msra.mxu0 %v403
    %3364 = vmatpush.msra.mxu0 %v394
    %3365 = vmatpush.msra.mxu0 %v385
    %3366 = vmatmul.f32.gmra.mxu0 %v64
    %v3367 = vpop.f32.mrf.mxu0
    %v3368 = vadd.f32 %v3348, %v3367
    %3369 = vdwg.mxu0
    %3370 = vmatpush.msra.mxu0 %v664
    %3371 = vmatpush.msra.mxu0 %v655
    %3372 = vmatpush.msra.mxu0 %v646
    %3373 = vmatpush.msra.mxu0 %v637
    %3374 = vmatpush.msra.mxu0 %v628
    %3375 = vmatpush.msra.mxu0 %v619
    %3376 = vmatpush.msra.mxu0 %v610
    %3377 = vmatpush.msra.mxu0 %v601
    %3378 = vmatpush.msra.mxu0 %v592
    %3379 = vmatpush.msra.mxu0 %v583
    %3380 = vmatpush.msra.mxu0 %v574
    %3381 = vmatpush.msra.mxu0 %v565
    %3382 = vmatpush.msra.mxu0 %v556
    %3383 = vmatpush.msra.mxu0 %v547
    %3384 = vmatpush.msra.mxu0 %v538
    %3385 = vmatpush.msra.mxu0 %v529
    %3386 = vmatmul.f32.gmra.mxu0 %v65
    %v3387 = vpop.f32.mrf.mxu0
    %v3388 = vadd.f32 %v3368, %v3387
    %3389 = vdwg.mxu0
    %3390 = vmatpush.msra.mxu0 %v808
    %3391 = vmatpush.msra.mxu0 %v799
    %3392 = vmatpush.msra.mxu0 %v790
    %3393 = vmatpush.msra.mxu0 %v781
    %3394 = vmatpush.msra.mxu0 %v772
    %3395 = vmatpush.msra.mxu0 %v763
    %3396 = vmatpush.msra.mxu0 %v754
    %3397 = vmatpush.msra.mxu0 %v745
    %3398 = vmatpush.msra.mxu0 %v736
    %3399 = vmatpush.msra.mxu0 %v727
    %3400 = vmatpush.msra.mxu0 %v718
    %3401 = vmatpush.msra.mxu0 %v709
    %3402 = vmatpush.msra.mxu0 %v700
    %3403 = vmatpush.msra.mxu0 %v691
    %3404 = vmatpush.msra.mxu0 %v682
    %3405 = vmatpush.msra.mxu0 %v673
    %3406 = vmatmul.f32.gmra.mxu0 %v66
    %v3407 = vpop.f32.mrf.mxu0
    %v3408 = vadd.f32 %v3388, %v3407
    %3409 = vdwg.mxu0
    %3410 = vmatpush.msra.mxu0 %v952
    %3411 = vmatpush.msra.mxu0 %v943
    %3412 = vmatpush.msra.mxu0 %v934
    %3413 = vmatpush.msra.mxu0 %v925
    %3414 = vmatpush.msra.mxu0 %v916
    %3415 = vmatpush.msra.mxu0 %v907
    %3416 = vmatpush.msra.mxu0 %v898
    %3417 = vmatpush.msra.mxu0 %v889
    %3418 = vmatpush.msra.mxu0 %v880
    %3419 = vmatpush.msra.mxu0 %v871
    %3420 = vmatpush.msra.mxu0 %v862
    %3421 = vmatpush.msra.mxu0 %v853
    %3422 = vmatpush.msra.mxu0 %v844
    %3423 = vmatpush.msra.mxu0 %v835
    %3424 = vmatpush.msra.mxu0 %v826
    %3425 = vmatpush.msra.mxu0 %v817
    %3426 = vmatmul.f32.gmra.mxu0 %v67
    %v3427 = vpop.f32.mrf.mxu0
    %v3428 = vadd.f32 %v3408, %v3427
    %3429 = vdwg.mxu0
    %3430 = vmatpush.msra.mxu0 %v1096
    %3431 = vmatpush.msra.mxu0 %v1087
    %3432 = vmatpush.msra.mxu0 %v1078
    %3433 = vmatpush.msra.mxu0 %v1069
    %3434 = vmatpush.msra.mxu0 %v1060
    %3435 = vmatpush.msra.mxu0 %v1051
    %3436 = vmatpush.msra.mxu0 %v1042
    %3437 = vmatpush.msra.mxu0 %v1033
    %3438 = vmatpush.msra.mxu0 %v1024
    %3439 = vmatpush.msra.mxu0 %v1015
    %3440 = vmatpush.msra.mxu0 %v1006
    %3441 = vmatpush.msra.mxu0 %v997
    %3442 = vmatpush.msra.mxu0 %v988
    %3443 = vmatpush.msra.mxu0 %v979
    %3444 = vmatpush.msra.mxu0 %v970
    %3445 = vmatpush.msra.mxu0 %v961
    %3446 = vmatmul.f32.gmra.mxu0 %v68
    %v3447 = vpop.f32.mrf.mxu0
    %v3448 = vadd.f32 %v3428, %v3447
    %3449 = vdwg.mxu0
    %3450 = vmatpush.msra.mxu0 %v1240
    %3451 = vmatpush.msra.mxu0 %v1231
    %3452 = vmatpush.msra.mxu0 %v1222
    %3453 = vmatpush.msra.mxu0 %v1213
    %3454 = vmatpush.msra.mxu0 %v1204
    %3455 = vmatpush.msra.mxu0 %v1195
    %3456 = vmatpush.msra.mxu0 %v1186
    %3457 = vmatpush.msra.mxu0 %v1177
    %3458 = vmatpush.msra.mxu0 %v1168
    %3459 = vmatpush.msra.mxu0 %v1159
    %3460 = vmatpush.msra.mxu0 %v1150
    %3461 = vmatpush.msra.mxu0 %v1141
    %3462 = vmatpush.msra.mxu0 %v1132
    %3463 = vmatpush.msra.mxu0 %v1123
    %3464 = vmatpush.msra.mxu0 %v1114
    %3465 = vmatpush.msra.mxu0 %v1105
    %3466 = vmatmul.f32.gmra.mxu0 %v69
    %v3467 = vpop.f32.mrf.mxu0
    %v3468 = vadd.f32 %v3448, %v3467
    %3469 = vdwg.mxu0
    %3470 = vmatpush.msra.mxu0 %v1384
    %3471 = vmatpush.msra.mxu0 %v1375
    %3472 = vmatpush.msra.mxu0 %v1366
    %3473 = vmatpush.msra.mxu0 %v1357
    %3474 = vmatpush.msra.mxu0 %v1348
    %3475 = vmatpush.msra.mxu0 %v1339
    %3476 = vmatpush.msra.mxu0 %v1330
    %3477 = vmatpush.msra.mxu0 %v1321
    %3478 = vmatpush.msra.mxu0 %v1312
    %3479 = vmatpush.msra.mxu0 %v1303
    %3480 = vmatpush.msra.mxu0 %v1294
    %3481 = vmatpush.msra.mxu0 %v1285
    %3482 = vmatpush.msra.mxu0 %v1276
    %3483 = vmatpush.msra.mxu0 %v1267
    %3484 = vmatpush.msra.mxu0 %v1258
    %3485 = vmatpush.msra.mxu0 %v1249
    %3486 = vmatmul.f32.gmra.mxu0 %v70
    %v3487 = vpop.f32.mrf.mxu0
    %v3488 = vadd.f32 %v3468, %v3487
    %3489 = vdwg.mxu0
    %3490 = vmatpush.msra.mxu0 %v1528
    %3491 = vmatpush.msra.mxu0 %v1519
    %3492 = vmatpush.msra.mxu0 %v1510
    %3493 = vmatpush.msra.mxu0 %v1501
    %3494 = vmatpush.msra.mxu0 %v1492
    %3495 = vmatpush.msra.mxu0 %v1483
    %3496 = vmatpush.msra.mxu0 %v1474
    %3497 = vmatpush.msra.mxu0 %v1465
    %3498 = vmatpush.msra.mxu0 %v1456
    %3499 = vmatpush.msra.mxu0 %v1447
    %3500 = vmatpush.msra.mxu0 %v1438
    %3501 = vmatpush.msra.mxu0 %v1429
    %3502 = vmatpush.msra.mxu0 %v1420
    %3503 = vmatpush.msra.mxu0 %v1411
    %3504 = vmatpush.msra.mxu0 %v1402
    %3505 = vmatpush.msra.mxu0 %v1393
    %3506 = vmatmul.f32.gmra.mxu0 %v71
    %v3507 = vpop.f32.mrf.mxu0
    %v3508 = vadd.f32 %v3488, %v3507
    %3509 = vdwg.mxu0
    %3510 = vmatpush.msra.mxu0 0.0
    %3511 = vmatpush.msra.mxu0 0.0
    %3512 = vmatpush.msra.mxu0 0.0
    %3513 = vmatpush.msra.mxu0 0.0
    %3514 = vmatpush.msra.mxu0 0.0
    %3515 = vmatpush.msra.mxu0 0.0
    %3516 = vmatpush.msra.mxu0 0.0
    %3517 = vmatpush.msra.mxu0 0.0
    %3518 = vmatpush.msra.mxu0 0.0
    %3519 = vmatpush.msra.mxu0 0.0
    %3520 = vmatpush.msra.mxu0 0.0
    %3521 = vmatpush.msra.mxu0 0.0
    %3522 = vmatpush.msra.mxu0 0.0
    %3523 = vmatpush.msra.mxu0 0.0
    %3524 = vmatpush.msra.mxu0 %v1546
    %3525 = vmatpush.msra.mxu0 %v1537
    %3526 = vmatmul.f32.gmra.mxu0 %v1548
    %v3527 = vpop.f32.mrf.mxu0
    %v3528 = vadd.f32 %v3508, %v3527
    %3529 = vdwg.mxu0
    %v3530 = vand.u32 2147483647, %v1768
    %v3531 = vand.u32 2147483647, %v1988
    %v3532 = vand.u32 2147483647, %v2208
    %v3533 = vand.u32 2147483647, %v2428
    %v3534 = vand.u32 2147483647, %v2648
    %v3535 = vand.u32 2147483647, %v2868
    %v3536 = vand.u32 2147483647, %v3088
    %v3537 = vand.u32 2147483647, %v3308
    %v3538 = vand.u32 2147483647, %v3528
    %v3539 = vmax.f32 %v3530, %v3534
    %v3540 = vmax.f32 %v3531, %v3535
    %v3541 = vmax.f32 %v3532, %v3536
    %v3542 = vmax.f32 %v3533, %v3537
    %v3543 = vmax.f32 %v3539, %v3538
    %v3544 = vmax.f32 %v3543, %v3540
    %v3545 = vmax.f32 %v3541, %v3542
    %v3546 = vmax.f32 %v3544, %v3545
    %3547 = vmax.xlane.f32.xlu0 %v3546
    %v3548 = vpop.xlane.xlu0 %3547
    %v3549 = vstv %s73
    %v3550 = vmul.f32 %v88, %v3549
    %v3551 = vrcp.pop %v3548
    %v3552 = vmul.f32 %v3548, %v3551
    %v3553 = vsub.f32 1.0, %v3552
    %v3554 = vmul.f32 %v3551, %v3553
    %v3555 = vadd.f32 %v3551, %v3554
    %vm3556 = vweird.f32 %v3548
    %vm3557 = vweird.f32 %v3551
    %vm3558 = vmor %vm3556, %vm3557
    %v3559 = vsel %vm3558, %v3551, %v3555
    %v3560 = vand.u32 2147483647, %v3548
    %vm3561 = vcmp.eq.f32.partialorder %v3560, 8.507059e+37
    %v3562 = vand.u32 %v3548, 2147483648
    %v3563 = vor.u32 1.1754944e-38, %v3562
    %v3564 = vsel %vm3561, %v3563, %v3559
    %v3565 = vmul.f32 %v3550, %v3564
    %v3566 = vmul.f32 %v3530, %v3565
    %v3567 = vmul.f32 %v3531, %v3565
    %v3568 = vmul.f32 %v3532, %v3565
    %v3569 = vmul.f32 %v3533, %v3565
    %v3570 = vmul.f32 %v3534, %v3565
    %v3571 = vmul.f32 %v3535, %v3565
    %v3572 = vmul.f32 %v3536, %v3565
    %v3573 = vmul.f32 %v3537, %v3565
    %v3574 = vmul.f32 %v3538, %v3565
    %v3575 = vld [vmem:[#allocation8] sm:$0xff]
    %v3576 = vld [vmem:[#allocation8 + $0x8] sm:$0x1]
    %v3579 = vperm.slane %v3575, 0
    %v3580 = vperm.slane %v3575, 1
    %v3581 = vperm.slane %v3575, 2
    %v3582 = vperm.slane %v3575, 3
    %v3583 = vperm.slane %v3575, 4
    %v3584 = vperm.slane %v3575, 5
    %v3585 = vperm.slane %v3575, 6
    %v3586 = vperm.slane %v3575, 7
    %v3587 = vperm.slane %v3576, 0
    %v3597 = vadd.f32 %v3566, %v3579
    %v3598 = vadd.f32 %v3567, %v3580
    %v3599 = vadd.f32 %v3568, %v3581
    %v3600 = vadd.f32 %v3569, %v3582
    %v3601 = vadd.f32 %v3570, %v3583
    %v3602 = vadd.f32 %v3571, %v3584
    %v3603 = vadd.f32 %v3572, %v3585
    %v3604 = vadd.f32 %v3573, %v3586
    %v3605 = vadd.f32 %v3574, %v3587
    %3606 = vst [vmem:[#allocation9] sm:$0xff] %v3597
    %3607 = vst [vmem:[#allocation9 + $0x8] sm:$0xff] %v3598
    %3608 = vst [vmem:[#allocation9 + $0x10] sm:$0xff] %v3599
    %3609 = vst [vmem:[#allocation9 + $0x18] sm:$0xff] %v3600
    %3610 = vst [vmem:[#allocation9 + $0x20] sm:$0xff] %v3601
    %3611 = vst [vmem:[#allocation9 + $0x28] sm:$0xff] %v3602
    %3612 = vst [vmem:[#allocation9 + $0x30] sm:$0xff] %v3603
    %3613 = vst [vmem:[#allocation9 + $0x38] sm:$0xff] %v3604
    %3614 = vst [vmem:[#allocation9 + $0x40] sm:$0xff] %v3605
    // Predicated region
    $region30: #{tpu_custom_call.1} parent=1 // pred_check
      _
    $region31: #{tpu_custom_call.1} parent=1 // pred_check_branch
      %3616 = sbr.rel (0) target = $region33
    $region32: #{tpu_custom_call.1} parent=1 // pred_region
      %3618 = vsyncadd [#allocation5], 0
      %s3620 = sshll.u32 [#allocation9], 4
      %s3621 = int_to_ptr.vmem [resolvable:$true] %s3620
      %s3622 = sshll.u32 %s4, 4
      %s3623 = int_to_ptr.hbm [resolvable:$true] %s3622
      %3625 = dma.vmem_to_hbm [thread:$0]  %s3621, 1152, %s3623, [#allocation5]
    $region33: #{tpu_custom_call.1} parent=1 // pred_fallthru
      _
    // Predicated region
    $region34: #{tpu_custom_call.1} parent=1 // pred_check
      _
    $region35: #{tpu_custom_call.1} parent=1 // pred_check_branch
      %3627 = sbr.rel (0) target = $region37
    $region36: #{tpu_custom_call.1} parent=1 // pred_region
      %3629 = dma.done [#allocation5], 1152
    $region37: #{tpu_custom_call.1} parent=1 // pred_fallthru
      _
    %3630 = vsyncpa [#allocation4], 1
    %3631 = vsyncpa [#allocation7], 1
    %3632 = vsyncpa [#allocation5], 1

</llo_original>
